<compile_context>
chip_gen: v7x
topology: tpu7x:2x2x1
jax: 0.10.0
libtpu: 0.0.40
codegen_flags: <defaults>
</compile_context>

<pallas_src>
import functools

import jax
import jax.numpy as jnp
import numpy as np
from jax.experimental import pallas as pl
from jax.experimental.pallas import tpu as pltpu

NUM_LAYERS = 2  # fused kernel is specialized to the module default (2 layers)


# ---------------------------------------------------------------------------
# Fused forward kernel: both LSTM layers + linear head, single grid step.
# PyTorch gate order: i, f, g, o (chunks of H along the 4H axis).
# ---------------------------------------------------------------------------
def _fused_forward_kernel(x_ref, h0_ref, c0_ref, p_ref, q_ref,
                          wih1_ref, whh1_ref, b1_ref,
                          wih2_ref, whh2_ref, b2_ref,
                          wlin_ref, blin_ref,
                          out_ref, hn_ref, cn_ref,
                          xw_scr, y_scr,
                          *, batch, seq_len):
    B, T = batch, seq_len
    H = whh1_ref.shape[0]
    f32 = jnp.float32

    def lstm_cell(gates, c_prev):
        # gates: (B, 4H); lane-aligned static slices (H is a multiple of 128).
        i_g = jax.nn.sigmoid(gates[:, 0 * H:1 * H])
        f_g = jax.nn.sigmoid(gates[:, 1 * H:2 * H])
        g_g = jnp.tanh(gates[:, 2 * H:3 * H])
        o_g = jax.nn.sigmoid(gates[:, 3 * H:4 * H])
        c_new = f_g * c_prev + i_g * g_g
        h_new = o_g * jnp.tanh(c_new)
        return h_new, c_new

    # Reorder the flattened batch-major input (row b*T + t) to time-major
    # (row t*B + b) with an exact 0/1 permutation matmul on the MXU -- this
    # replaces the wrapper-side jnp.transpose of the old version.
    x_tm = jnp.dot(p_ref[...], x_ref[...], preferred_element_type=f32)   # (T*B, V)

    # ---- layer 1: time-parallel input projection hoisted off the serial path
    xw_scr[...] = (jnp.dot(x_tm, wih1_ref[...], preferred_element_type=f32)
                   + b1_ref[...])                                        # (T*B, 4H)

    h1 = h0_ref[0]
    c1 = c0_ref[0]
    whh1 = whh1_ref[...]
    for t in range(T):   # static unroll: LLO overlaps step t gates with t+1 matmul
        gates = (xw_scr[t * B:(t + 1) * B, :]
                 + jnp.dot(h1, whh1, preferred_element_type=f32))
        h1, c1 = lstm_cell(gates, c1)
        y_scr[t * B:(t + 1) * B, :] = h1          # layer-1 outputs, time-major

    # ---- layer 2: its input projection over the full layer-1 sequence, hoisted
    xw_scr[...] = (jnp.dot(y_scr[...], wih2_ref[...], preferred_element_type=f32)
                   + b2_ref[...])                                        # (T*B, 4H)

    h2 = h0_ref[1]
    c2 = c0_ref[1]
    whh2 = whh2_ref[...]
    for t in range(T):
        gates = (xw_scr[t * B:(t + 1) * B, :]
                 + jnp.dot(h2, whh2, preferred_element_type=f32))
        h2, c2 = lstm_cell(gates, c2)
        y_scr[t * B:(t + 1) * B, :] = h2          # overwrite with layer-2 outputs

    # ---- dropout(keep_prob=1) == identity; permute back to batch-major and
    #      run the hoisted linear head over all (b, t) at once.
    y_bm = jnp.dot(q_ref[...], y_scr[...], preferred_element_type=f32)   # (B*T, H)
    out_ref[...] = (jnp.dot(y_bm, wlin_ref[...], preferred_element_type=f32)
                    + blin_ref[...]).astype(out_ref.dtype)               # (B*T, V)

    # ---- final hidden state, written exactly once (not per timestep).
    hn_ref[0] = h1.astype(hn_ref.dtype)
    hn_ref[1] = h2.astype(hn_ref.dtype)
    cn_ref[0] = c1.astype(cn_ref.dtype)
    cn_ref[1] = c2.astype(cn_ref.dtype)


def _perm_matrices(B, T, dtype=jnp.float32):
    """Exact 0/1 permutation matrices for batch-major <-> time-major rows."""
    i = jnp.arange(B * T)
    # row (t*B + b) of P selects source row (b*T + t): batch-major -> time-major
    p = jax.nn.one_hot((i % B) * T + (i // B), B * T, dtype=dtype)
    # row (b*T + t) of Q selects source row (t*B + b): time-major -> batch-major
    q = jax.nn.one_hot((i % T) * B + (i // T), B * T, dtype=dtype)
    return p, q


def fused_forward(params, x, h0, c0):
    """x: (B, T, V) batch-first.  h0/c0: (2, B, H).  Returns (out, h_n, c_n)."""
    B, T, V = x.shape
    p1, p2 = params["lstm"]
    lin = params["linear"]
    H = p1["w_hh_t"].shape[0]
    BT = B * T

    perm_tm, perm_bm = _perm_matrices(B, T)      # constants, folded under jit
    x2d = x.reshape(BT, V)                       # row-major reshape: free

    kernel = functools.partial(_fused_forward_kernel, batch=B, seq_len=T)

    out2d, h_n, c_n = pl.pallas_call(
        kernel,
        out_shape=(
            jax.ShapeDtypeStruct((BT, V), jnp.float32),
            jax.ShapeDtypeStruct((NUM_LAYERS, B, H), jnp.float32),
            jax.ShapeDtypeStruct((NUM_LAYERS, B, H), jnp.float32),
        ),
        grid_spec=pltpu.PrefetchScalarGridSpec(
            num_scalar_prefetch=0,
            grid=(1,),
            in_specs=[
                pl.BlockSpec((BT, V), lambda i: (0, 0)),              # x (flat)
                pl.BlockSpec((NUM_LAYERS, B, H), lambda i: (0, 0, 0)),  # h0
                pl.BlockSpec((NUM_LAYERS, B, H), lambda i: (0, 0, 0)),  # c0
                pl.BlockSpec((BT, BT), lambda i: (0, 0)),             # P (bm->tm)
                pl.BlockSpec((BT, BT), lambda i: (0, 0)),             # Q (tm->bm)
                pl.BlockSpec((V, 4 * H), lambda i: (0, 0)),           # W_ih1^T
                pl.BlockSpec((H, 4 * H), lambda i: (0, 0)),           # W_hh1^T
                pl.BlockSpec((1, 4 * H), lambda i: (0, 0)),           # b1
                pl.BlockSpec((H, 4 * H), lambda i: (0, 0)),           # W_ih2^T
                pl.BlockSpec((H, 4 * H), lambda i: (0, 0)),           # W_hh2^T
                pl.BlockSpec((1, 4 * H), lambda i: (0, 0)),           # b2
                pl.BlockSpec((H, V), lambda i: (0, 0)),               # W_lin^T
                pl.BlockSpec((1, V), lambda i: (0, 0)),               # b_lin
            ],
            out_specs=(
                pl.BlockSpec((BT, V), lambda i: (0, 0)),              # logits
                pl.BlockSpec((NUM_LAYERS, B, H), lambda i: (0, 0, 0)),  # h_n
                pl.BlockSpec((NUM_LAYERS, B, H), lambda i: (0, 0, 0)),  # c_n
            ),
            scratch_shapes=[
                pltpu.VMEM((BT, 4 * H), jnp.float32),   # hoisted gate projections
                pltpu.VMEM((BT, H), jnp.float32),       # per-layer outputs
            ],
        ),
        compiler_params=pltpu.CompilerParams(
            dimension_semantics=("arbitrary",)),
    )(x2d, h0, c0, perm_tm, perm_bm,
      p1["w_ih_t"], p1["w_hh_t"], p1["bias"],
      p2["w_ih_t"], p2["w_hh_t"], p2["bias"],
      lin["w_t"], lin["b"])

    return out2d.reshape(B, T, V), h_n, c_n


# ---------------------------------------------------------------------------
# Parameter construction (mirrors nn.LSTM / nn.Linear shapes and default init).
# ---------------------------------------------------------------------------
def init_params(key, vocab_size, hidden, num_layers):
    params = {"lstm": [], "linear": {}}
    bound = 1.0 / jnp.sqrt(jnp.float32(hidden))
    for layer in range(num_layers):
        d_in = vocab_size if layer == 0 else hidden
        key, k1, k2, k3, k4 = jax.random.split(key, 5)
        w_ih = jax.random.uniform(k1, (4 * hidden, d_in), jnp.float32, -bound, bound)
        w_hh = jax.random.uniform(k2, (4 * hidden, hidden), jnp.float32, -bound, bound)
        b_ih = jax.random.uniform(k3, (4 * hidden,), jnp.float32, -bound, bound)
        b_hh = jax.random.uniform(k4, (4 * hidden,), jnp.float32, -bound, bound)
        params["lstm"].append({
            "w_ih_t": w_ih.T,                    # (d_in, 4H)
            "w_hh_t": w_hh.T,                    # (H, 4H)
            "bias": (b_ih + b_hh)[None, :],      # (1, 4H)
        })
    key, k5, k6 = jax.random.split(key, 3)
    w = jax.random.uniform(k5, (vocab_size, hidden), jnp.float32, -bound, bound)
    b = jax.random.uniform(k6, (vocab_size,), jnp.float32, -bound, bound)
    params["linear"] = {"w_t": w.T, "b": b[None, :]}   # (H, V), (1, V)
    return params


# ---------------------------------------------------------------------------
# Forward pass equivalent to TextGenerationModel.forward.
#   x: (B, T, V) float32 (batch_first).  h: optional (h0, c0), each (2, B, H).
# Returns (out, (h_n, c_n)): out (B, T, V), h_n/c_n (2, B, H).
# ---------------------------------------------------------------------------
@jax.jit
def text_generation_forward(params, x, h=None):
    assert len(params["lstm"]) == NUM_LAYERS
    B, T, V = x.shape
    H = params["lstm"][0]["w_hh_t"].shape[0]
    if h is None:
        h0 = jnp.zeros((NUM_LAYERS, B, H), jnp.float32)
        c0 = jnp.zeros((NUM_LAYERS, B, H), jnp.float32)
    else:
        h0, c0 = h
    out, h_n, c_n = fused_forward(params, x, h0, c0)
    return out, (h_n, c_n)


# ---------------------------------------------------------------------------
# Pure-JAX reference (no Pallas) for correctness checking.
# ---------------------------------------------------------------------------
def _reference_forward(params, x, h0, c0):
    B, T, V = x.shape
    H = params["lstm"][0]["w_hh_t"].shape[0]
    hi = jax.lax.Precision.HIGHEST
    h = [h0[l] for l in range(NUM_LAYERS)]
    c = [c0[l] for l in range(NUM_LAYERS)]
    layer_in = x
    for l, p in enumerate(params["lstm"]):
        outs = []
        for t in range(T):
            gates = (jnp.dot(layer_in[:, t, :], p["w_ih_t"], precision=hi)
                     + jnp.dot(h[l], p["w_hh_t"], precision=hi) + p["bias"])
            i_g = jax.nn.sigmoid(gates[:, 0 * H:1 * H])
            f_g = jax.nn.sigmoid(gates[:, 1 * H:2 * H])
            g_g = jnp.tanh(gates[:, 2 * H:3 * H])
            o_g = jax.nn.sigmoid(gates[:, 3 * H:4 * H])
            c[l] = f_g * c[l] + i_g * g_g
            h[l] = o_g * jnp.tanh(c[l])
            outs.append(h[l])
        layer_in = jnp.stack(outs, axis=1)
    out = jnp.dot(layer_in, params["linear"]["w_t"], precision=hi) + params["linear"]["b"]
    return out, jnp.stack(h), jnp.stack(c)


if __name__ == "__main__":
    batch_size = 8
    seq_length = 8
    vocab_size = 128
    lstm_num_hidden = 128
    lstm_num_layers = 2

    key = jax.random.PRNGKey(0)
    kp, kx = jax.random.split(key)
    params = init_params(kp, vocab_size, lstm_num_hidden, lstm_num_layers)
    x = jax.random.normal(kx, (batch_size, seq_length, vocab_size), jnp.float32)

    out, (h_n, c_n) = text_generation_forward(params, x)
    jax.block_until_ready((out, h_n, c_n))

    assert out.shape == (batch_size, seq_length, vocab_size)
    assert h_n.shape == (lstm_num_layers, batch_size, lstm_num_hidden)
    assert c_n.shape == (lstm_num_layers, batch_size, lstm_num_hidden)

    # Correctness check against a pure-JAX reference.
    h0 = jnp.zeros((NUM_LAYERS, batch_size, lstm_num_hidden), jnp.float32)
    c0 = jnp.zeros((NUM_LAYERS, batch_size, lstm_num_hidden), jnp.float32)
    ref_out, ref_hn, ref_cn = _reference_forward(params, x, h0, c0)
    np.testing.assert_allclose(np.asarray(out), np.asarray(ref_out), rtol=2e-2, atol=2e-2)
    np.testing.assert_allclose(np.asarray(h_n), np.asarray(ref_hn), rtol=2e-2, atol=2e-2)
    np.testing.assert_allclose(np.asarray(c_n), np.asarray(ref_cn), rtol=2e-2, atol=2e-2)

    print("KERNEL_OK")
</pallas_src>

<mosaic_0001>
module attributes {stable_mosaic.version = 11 : i64} {
  func.func @_fused_forward_kernel(%arg0: i32, %arg1: memref<64x128xf32, #tpu.memory_space<vmem>>, %arg2: memref<2x8x128xf32, #tpu.memory_space<vmem>>, %arg3: memref<2x8x128xf32, #tpu.memory_space<vmem>>, %arg4: memref<64x64xf32, #tpu.memory_space<vmem>>, %arg5: memref<64x64xf32, #tpu.memory_space<vmem>>, %arg6: memref<128x512xf32, #tpu.memory_space<vmem>>, %arg7: memref<128x512xf32, #tpu.memory_space<vmem>>, %arg8: memref<1x512xf32, #tpu.memory_space<vmem>>, %arg9: memref<128x512xf32, #tpu.memory_space<vmem>>, %arg10: memref<128x512xf32, #tpu.memory_space<vmem>>, %arg11: memref<1x512xf32, #tpu.memory_space<vmem>>, %arg12: memref<128x128xf32, #tpu.memory_space<vmem>>, %arg13: memref<1x128xf32, #tpu.memory_space<vmem>>, %arg14: memref<64x128xf32, #tpu.memory_space<vmem>>, %arg15: memref<2x8x128xf32, #tpu.memory_space<vmem>>, %arg16: memref<2x8x128xf32, #tpu.memory_space<vmem>>, %arg17: memref<64x512xf32, #tpu.memory_space<vmem>>, %arg18: memref<64x128xf32, #tpu.memory_space<vmem>>) attributes {dimension_semantics = [#tpu.dimension_semantics<arbitrary>], iteration_bounds = array<i64: 1>, scalar_prefetch = 0 : i64, scratch_operands = 2 : i64, tpu.core_type = #tpu.core_type<tc>, window_params = [{pipeline_mode = #tpu.pipeline_mode<synchronous>, transform_indices = @transform_0, window_bounds = array<i64: 64, 128>}, {pipeline_mode = #tpu.pipeline_mode<synchronous>, transform_indices = @transform_1, window_bounds = array<i64: 2, 8, 128>}, {pipeline_mode = #tpu.pipeline_mode<synchronous>, transform_indices = @transform_2, window_bounds = array<i64: 2, 8, 128>}, {pipeline_mode = #tpu.pipeline_mode<synchronous>, transform_indices = @transform_3, window_bounds = array<i64: 64, 64>}, {pipeline_mode = #tpu.pipeline_mode<synchronous>, transform_indices = @transform_4, window_bounds = array<i64: 64, 64>}, {pipeline_mode = #tpu.pipeline_mode<synchronous>, transform_indices = @transform_5, window_bounds = array<i64: 128, 512>}, {pipeline_mode = #tpu.pipeline_mode<synchronous>, transform_indices = @transform_6, window_bounds = array<i64: 128, 512>}, {pipeline_mode = #tpu.pipeline_mode<synchronous>, transform_indices = @transform_7, window_bounds = array<i64: 1, 512>}, {pipeline_mode = #tpu.pipeline_mode<synchronous>, transform_indices = @transform_8, window_bounds = array<i64: 128, 512>}, {pipeline_mode = #tpu.pipeline_mode<synchronous>, transform_indices = @transform_9, window_bounds = array<i64: 128, 512>}, {pipeline_mode = #tpu.pipeline_mode<synchronous>, transform_indices = @transform_10, window_bounds = array<i64: 1, 512>}, {pipeline_mode = #tpu.pipeline_mode<synchronous>, transform_indices = @transform_11, window_bounds = array<i64: 128, 128>}, {pipeline_mode = #tpu.pipeline_mode<synchronous>, transform_indices = @transform_12, window_bounds = array<i64: 1, 128>}, {pipeline_mode = #tpu.pipeline_mode<synchronous>, transform_indices = @transform_13, window_bounds = array<i64: 64, 128>}, {pipeline_mode = #tpu.pipeline_mode<synchronous>, transform_indices = @transform_14, window_bounds = array<i64: 2, 8, 128>}, {pipeline_mode = #tpu.pipeline_mode<synchronous>, transform_indices = @transform_15, window_bounds = array<i64: 2, 8, 128>}]} {
    %c0 = arith.constant 0 : index
    %c0_0 = arith.constant 0 : index
    %0 = vector.load %arg4[%c0, %c0_0] : memref<64x64xf32, #tpu.memory_space<vmem>>, vector<64x64xf32>
    %c0_1 = arith.constant 0 : index
    %c0_2 = arith.constant 0 : index
    %1 = vector.load %arg1[%c0_1, %c0_2] : memref<64x128xf32, #tpu.memory_space<vmem>>, vector<64x128xf32>
    %cst = arith.constant dense<0.000000e+00> : vector<64x128xf32>
    %2 = tpu.matmul %0, %1, %cst {dimension_numbers = #tpu.dot_dimension_numbers<[1], [0], [0], [1], [0, 0, 1, 1], [], []>} : vector<64x64xf32>, vector<64x128xf32>, vector<64x128xf32> -> vector<64x128xf32>
    %c0_3 = arith.constant 0 : index
    %c0_4 = arith.constant 0 : index
    %3 = vector.load %arg6[%c0_3, %c0_4] : memref<128x512xf32, #tpu.memory_space<vmem>>, vector<128x512xf32>
    %cst_5 = arith.constant dense<0.000000e+00> : vector<64x512xf32>
    %4 = tpu.matmul %2, %3, %cst_5 {dimension_numbers = #tpu.dot_dimension_numbers<[1], [0], [0], [1], [0, 0, 1, 1], [], []>} : vector<64x128xf32>, vector<128x512xf32>, vector<64x512xf32> -> vector<64x512xf32>
    %c0_6 = arith.constant 0 : index
    %c0_7 = arith.constant 0 : index
    %5 = vector.load %arg8[%c0_6, %c0_7] : memref<1x512xf32, #tpu.memory_space<vmem>>, vector<1x512xf32>
    %6 = vector.broadcast %5 : vector<1x512xf32> to vector<64x512xf32>
    %7 = arith.addf %4, %6 : vector<64x512xf32>
    %c0_8 = arith.constant 0 : index
    %c0_9 = arith.constant 0 : index
    %8 = vector.load %arg17[%c0_8, %c0_9] : memref<64x512xf32, #tpu.memory_space<vmem>>, vector<64x512xf32>
    tpu.vector_store %arg17[%c0_8, %c0_9], %7 {strides = array<i32>} : memref<64x512xf32, #tpu.memory_space<vmem>>, vector<64x512xf32>,
    %c0_10 = arith.constant 0 : index
    %c0_11 = arith.constant 0 : index
    %c0_12 = arith.constant 0 : index
    %9 = vector.load %arg2[%c0_10, %c0_11, %c0_12] : memref<2x8x128xf32, #tpu.memory_space<vmem>>, vector<1x8x128xf32>
    %10 = vector.shape_cast %9 : vector<1x8x128xf32> to vector<8x128xf32>
    %c0_13 = arith.constant 0 : index
    %c0_14 = arith.constant 0 : index
    %c0_15 = arith.constant 0 : index
    %11 = vector.load %arg3[%c0_13, %c0_14, %c0_15] : memref<2x8x128xf32, #tpu.memory_space<vmem>>, vector<1x8x128xf32>
    %12 = vector.shape_cast %11 : vector<1x8x128xf32> to vector<8x128xf32>
    %c0_16 = arith.constant 0 : index
    %c0_17 = arith.constant 0 : index
    %13 = vector.load %arg7[%c0_16, %c0_17] : memref<128x512xf32, #tpu.memory_space<vmem>>, vector<128x512xf32>
    %c0_18 = arith.constant 0 : index
    %c0_19 = arith.constant 0 : index
    %14 = vector.load %arg17[%c0_18, %c0_19] : memref<64x512xf32, #tpu.memory_space<vmem>>, vector<8x512xf32>
    %cst_20 = arith.constant dense<0.000000e+00> : vector<8x512xf32>
    %15 = tpu.matmul %10, %13, %cst_20 {dimension_numbers = #tpu.dot_dimension_numbers<[1], [0], [0], [1], [0, 0, 1, 1], [], []>} : vector<8x128xf32>, vector<128x512xf32>, vector<8x512xf32> -> vector<8x512xf32>
    %16 = arith.addf %14, %15 : vector<8x512xf32>
    %17 = vector.extract_strided_slice %16 {offsets = [0, 0], sizes = [8, 128], strides = [1, 1]} : vector<8x512xf32> to vector<8x128xf32>
    %18 = arith.negf %17 : vector<8x128xf32>
    %19 = math.exp %18 : vector<8x128xf32>
    %cst_21 = arith.constant 1.000000e+00 : f32
    %20 = vector.broadcast %cst_21 : f32 to vector<8x128xf32>
    %21 = arith.addf %20, %19 : vector<8x128xf32>
    %22 = arith.divf %20, %21 : vector<8x128xf32>
    %23 = vector.extract_strided_slice %16 {offsets = [0, 128], sizes = [8, 128], strides = [1, 1]} : vector<8x512xf32> to vector<8x128xf32>
    %24 = arith.negf %23 : vector<8x128xf32>
    %25 = math.exp %24 : vector<8x128xf32>
    %cst_22 = arith.constant 1.000000e+00 : f32
    %26 = vector.broadcast %cst_22 : f32 to vector<8x128xf32>
    %27 = arith.addf %26, %25 : vector<8x128xf32>
    %28 = arith.divf %26, %27 : vector<8x128xf32>
    %29 = vector.extract_strided_slice %16 {offsets = [0, 256], sizes = [8, 128], strides = [1, 1]} : vector<8x512xf32> to vector<8x128xf32>
    %30 = math.tanh %29 : vector<8x128xf32>
    %31 = vector.extract_strided_slice %16 {offsets = [0, 384], sizes = [8, 128], strides = [1, 1]} : vector<8x512xf32> to vector<8x128xf32>
    %32 = arith.negf %31 : vector<8x128xf32>
    %33 = math.exp %32 : vector<8x128xf32>
    %cst_23 = arith.constant 1.000000e+00 : f32
    %34 = vector.broadcast %cst_23 : f32 to vector<8x128xf32>
    %35 = arith.addf %34, %33 : vector<8x128xf32>
    %36 = arith.divf %34, %35 : vector<8x128xf32>
    %37 = arith.mulf %28, %12 : vector<8x128xf32>
    %38 = arith.mulf %22, %30 : vector<8x128xf32>
    %39 = arith.addf %37, %38 : vector<8x128xf32>
    %40 = math.tanh %39 : vector<8x128xf32>
    %41 = arith.mulf %36, %40 : vector<8x128xf32>
    %c0_24 = arith.constant 0 : index
    %c0_25 = arith.constant 0 : index
    %42 = vector.load %arg18[%c0_24, %c0_25] : memref<64x128xf32, #tpu.memory_space<vmem>>, vector<8x128xf32>
    tpu.vector_store %arg18[%c0_24, %c0_25], %41 {strides = array<i32>} : memref<64x128xf32, #tpu.memory_space<vmem>>, vector<8x128xf32>,
    %c8 = arith.constant 8 : index
    %c0_26 = arith.constant 0 : index
    %43 = vector.load %arg17[%c8, %c0_26] : memref<64x512xf32, #tpu.memory_space<vmem>>, vector<8x512xf32>
    %cst_27 = arith.constant dense<0.000000e+00> : vector<8x512xf32>
    %44 = tpu.matmul %41, %13, %cst_27 {dimension_numbers = #tpu.dot_dimension_numbers<[1], [0], [0], [1], [0, 0, 1, 1], [], []>} : vector<8x128xf32>, vector<128x512xf32>, vector<8x512xf32> -> vector<8x512xf32>
    %45 = arith.addf %43, %44 : vector<8x512xf32>
    %46 = vector.extract_strided_slice %45 {offsets = [0, 0], sizes = [8, 128], strides = [1, 1]} : vector<8x512xf32> to vector<8x128xf32>
    %47 = arith.negf %46 : vector<8x128xf32>
    %48 = math.exp %47 : vector<8x128xf32>
    %cst_28 = arith.constant 1.000000e+00 : f32
    %49 = vector.broadcast %cst_28 : f32 to vector<8x128xf32>
    %50 = arith.addf %49, %48 : vector<8x128xf32>
    %51 = arith.divf %49, %50 : vector<8x128xf32>
    %52 = vector.extract_strided_slice %45 {offsets = [0, 128], sizes = [8, 128], strides = [1, 1]} : vector<8x512xf32> to vector<8x128xf32>
    %53 = arith.negf %52 : vector<8x128xf32>
    %54 = math.exp %53 : vector<8x128xf32>
    %cst_29 = arith.constant 1.000000e+00 : f32
    %55 = vector.broadcast %cst_29 : f32 to vector<8x128xf32>
    %56 = arith.addf %55, %54 : vector<8x128xf32>
    %57 = arith.divf %55, %56 : vector<8x128xf32>
    %58 = vector.extract_strided_slice %45 {offsets = [0, 256], sizes = [8, 128], strides = [1, 1]} : vector<8x512xf32> to vector<8x128xf32>
    %59 = math.tanh %58 : vector<8x128xf32>
    %60 = vector.extract_strided_slice %45 {offsets = [0, 384], sizes = [8, 128], strides = [1, 1]} : vector<8x512xf32> to vector<8x128xf32>
    %61 = arith.negf %60 : vector<8x128xf32>
    %62 = math.exp %61 : vector<8x128xf32>
    %cst_30 = arith.constant 1.000000e+00 : f32
    %63 = vector.broadcast %cst_30 : f32 to vector<8x128xf32>
    %64 = arith.addf %63, %62 : vector<8x128xf32>
    %65 = arith.divf %63, %64 : vector<8x128xf32>
    %66 = arith.mulf %57, %39 : vector<8x128xf32>
    %67 = arith.mulf %51, %59 : vector<8x128xf32>
    %68 = arith.addf %66, %67 : vector<8x128xf32>
    %69 = math.tanh %68 : vector<8x128xf32>
    %70 = arith.mulf %65, %69 : vector<8x128xf32>
    %c8_31 = arith.constant 8 : index
    %c0_32 = arith.constant 0 : index
    %71 = vector.load %arg18[%c8_31, %c0_32] : memref<64x128xf32, #tpu.memory_space<vmem>>, vector<8x128xf32>
    tpu.vector_store %arg18[%c8_31, %c0_32], %70 {strides = array<i32>} : memref<64x128xf32, #tpu.memory_space<vmem>>, vector<8x128xf32>,
    %c16 = arith.constant 16 : index
    %c0_33 = arith.constant 0 : index
    %72 = vector.load %arg17[%c16, %c0_33] : memref<64x512xf32, #tpu.memory_space<vmem>>, vector<8x512xf32>
    %cst_34 = arith.constant dense<0.000000e+00> : vector<8x512xf32>
    %73 = tpu.matmul %70, %13, %cst_34 {dimension_numbers = #tpu.dot_dimension_numbers<[1], [0], [0], [1], [0, 0, 1, 1], [], []>} : vector<8x128xf32>, vector<128x512xf32>, vector<8x512xf32> -> vector<8x512xf32>
    %74 = arith.addf %72, %73 : vector<8x512xf32>
    %75 = vector.extract_strided_slice %74 {offsets = [0, 0], sizes = [8, 128], strides = [1, 1]} : vector<8x512xf32> to vector<8x128xf32>
    %76 = arith.negf %75 : vector<8x128xf32>
    %77 = math.exp %76 : vector<8x128xf32>
    %cst_35 = arith.constant 1.000000e+00 : f32
    %78 = vector.broadcast %cst_35 : f32 to vector<8x128xf32>
    %79 = arith.addf %78, %77 : vector<8x128xf32>
    %80 = arith.divf %78, %79 : vector<8x128xf32>
    %81 = vector.extract_strided_slice %74 {offsets = [0, 128], sizes = [8, 128], strides = [1, 1]} : vector<8x512xf32> to vector<8x128xf32>
    %82 = arith.negf %81 : vector<8x128xf32>
    %83 = math.exp %82 : vector<8x128xf32>
    %cst_36 = arith.constant 1.000000e+00 : f32
    %84 = vector.broadcast %cst_36 : f32 to vector<8x128xf32>
    %85 = arith.addf %84, %83 : vector<8x128xf32>
    %86 = arith.divf %84, %85 : vector<8x128xf32>
    %87 = vector.extract_strided_slice %74 {offsets = [0, 256], sizes = [8, 128], strides = [1, 1]} : vector<8x512xf32> to vector<8x128xf32>
    %88 = math.tanh %87 : vector<8x128xf32>
    %89 = vector.extract_strided_slice %74 {offsets = [0, 384], sizes = [8, 128], strides = [1, 1]} : vector<8x512xf32> to vector<8x128xf32>
    %90 = arith.negf %89 : vector<8x128xf32>
    %91 = math.exp %90 : vector<8x128xf32>
    %cst_37 = arith.constant 1.000000e+00 : f32
    %92 = vector.broadcast %cst_37 : f32 to vector<8x128xf32>
    %93 = arith.addf %92, %91 : vector<8x128xf32>
    %94 = arith.divf %92, %93 : vector<8x128xf32>
    %95 = arith.mulf %86, %68 : vector<8x128xf32>
    %96 = arith.mulf %80, %88 : vector<8x128xf32>
    %97 = arith.addf %95, %96 : vector<8x128xf32>
    %98 = math.tanh %97 : vector<8x128xf32>
    %99 = arith.mulf %94, %98 : vector<8x128xf32>
    %c16_38 = arith.constant 16 : index
    %c0_39 = arith.constant 0 : index
    %100 = vector.load %arg18[%c16_38, %c0_39] : memref<64x128xf32, #tpu.memory_space<vmem>>, vector<8x128xf32>
    tpu.vector_store %arg18[%c16_38, %c0_39], %99 {strides = array<i32>} : memref<64x128xf32, #tpu.memory_space<vmem>>, vector<8x128xf32>,
    %c24 = arith.constant 24 : index
    %c0_40 = arith.constant 0 : index
    %101 = vector.load %arg17[%c24, %c0_40] : memref<64x512xf32, #tpu.memory_space<vmem>>, vector<8x512xf32>
    %cst_41 = arith.constant dense<0.000000e+00> : vector<8x512xf32>
    %102 = tpu.matmul %99, %13, %cst_41 {dimension_numbers = #tpu.dot_dimension_numbers<[1], [0], [0], [1], [0, 0, 1, 1], [], []>} : vector<8x128xf32>, vector<128x512xf32>, vector<8x512xf32> -> vector<8x512xf32>
    %103 = arith.addf %101, %102 : vector<8x512xf32>
    %104 = vector.extract_strided_slice %103 {offsets = [0, 0], sizes = [8, 128], strides = [1, 1]} : vector<8x512xf32> to vector<8x128xf32>
    %105 = arith.negf %104 : vector<8x128xf32>
    %106 = math.exp %105 : vector<8x128xf32>
    %cst_42 = arith.constant 1.000000e+00 : f32
    %107 = vector.broadcast %cst_42 : f32 to vector<8x128xf32>
    %108 = arith.addf %107, %106 : vector<8x128xf32>
    %109 = arith.divf %107, %108 : vector<8x128xf32>
    %110 = vector.extract_strided_slice %103 {offsets = [0, 128], sizes = [8, 128], strides = [1, 1]} : vector<8x512xf32> to vector<8x128xf32>
    %111 = arith.negf %110 : vector<8x128xf32>
    %112 = math.exp %111 : vector<8x128xf32>
    %cst_43 = arith.constant 1.000000e+00 : f32
    %113 = vector.broadcast %cst_43 : f32 to vector<8x128xf32>
    %114 = arith.addf %113, %112 : vector<8x128xf32>
    %115 = arith.divf %113, %114 : vector<8x128xf32>
    %116 = vector.extract_strided_slice %103 {offsets = [0, 256], sizes = [8, 128], strides = [1, 1]} : vector<8x512xf32> to vector<8x128xf32>
    %117 = math.tanh %116 : vector<8x128xf32>
    %118 = vector.extract_strided_slice %103 {offsets = [0, 384], sizes = [8, 128], strides = [1, 1]} : vector<8x512xf32> to vector<8x128xf32>
    %119 = arith.negf %118 : vector<8x128xf32>
    %120 = math.exp %119 : vector<8x128xf32>
    %cst_44 = arith.constant 1.000000e+00 : f32
    %121 = vector.broadcast %cst_44 : f32 to vector<8x128xf32>
    %122 = arith.addf %121, %120 : vector<8x128xf32>
    %123 = arith.divf %121, %122 : vector<8x128xf32>
    %124 = arith.mulf %115, %97 : vector<8x128xf32>
    %125 = arith.mulf %109, %117 : vector<8x128xf32>
    %126 = arith.addf %124, %125 : vector<8x128xf32>
    %127 = math.tanh %126 : vector<8x128xf32>
    %128 = arith.mulf %123, %127 : vector<8x128xf32>
    %c24_45 = arith.constant 24 : index
    %c0_46 = arith.constant 0 : index
    %129 = vector.load %arg18[%c24_45, %c0_46] : memref<64x128xf32, #tpu.memory_space<vmem>>, vector<8x128xf32>
    tpu.vector_store %arg18[%c24_45, %c0_46], %128 {strides = array<i32>} : memref<64x128xf32, #tpu.memory_space<vmem>>, vector<8x128xf32>,
    %c32 = arith.constant 32 : index
    %c0_47 = arith.constant 0 : index
    %130 = vector.load %arg17[%c32, %c0_47] : memref<64x512xf32, #tpu.memory_space<vmem>>, vector<8x512xf32>
    %cst_48 = arith.constant dense<0.000000e+00> : vector<8x512xf32>
    %131 = tpu.matmul %128, %13, %cst_48 {dimension_numbers = #tpu.dot_dimension_numbers<[1], [0], [0], [1], [0, 0, 1, 1], [], []>} : vector<8x128xf32>, vector<128x512xf32>, vector<8x512xf32> -> vector<8x512xf32>
    %132 = arith.addf %130, %131 : vector<8x512xf32>
    %133 = vector.extract_strided_slice %132 {offsets = [0, 0], sizes = [8, 128], strides = [1, 1]} : vector<8x512xf32> to vector<8x128xf32>
    %134 = arith.negf %133 : vector<8x128xf32>
    %135 = math.exp %134 : vector<8x128xf32>
    %cst_49 = arith.constant 1.000000e+00 : f32
    %136 = vector.broadcast %cst_49 : f32 to vector<8x128xf32>
    %137 = arith.addf %136, %135 : vector<8x128xf32>
    %138 = arith.divf %136, %137 : vector<8x128xf32>
    %139 = vector.extract_strided_slice %132 {offsets = [0, 128], sizes = [8, 128], strides = [1, 1]} : vector<8x512xf32> to vector<8x128xf32>
    %140 = arith.negf %139 : vector<8x128xf32>
    %141 = math.exp %140 : vector<8x128xf32>
    %cst_50 = arith.constant 1.000000e+00 : f32
    %142 = vector.broadcast %cst_50 : f32 to vector<8x128xf32>
    %143 = arith.addf %142, %141 : vector<8x128xf32>
    %144 = arith.divf %142, %143 : vector<8x128xf32>
    %145 = vector.extract_strided_slice %132 {offsets = [0, 256], sizes = [8, 128], strides = [1, 1]} : vector<8x512xf32> to vector<8x128xf32>
    %146 = math.tanh %145 : vector<8x128xf32>
    %147 = vector.extract_strided_slice %132 {offsets = [0, 384], sizes = [8, 128], strides = [1, 1]} : vector<8x512xf32> to vector<8x128xf32>
    %148 = arith.negf %147 : vector<8x128xf32>
    %149 = math.exp %148 : vector<8x128xf32>
    %cst_51 = arith.constant 1.000000e+00 : f32
    %150 = vector.broadcast %cst_51 : f32 to vector<8x128xf32>
    %151 = arith.addf %150, %149 : vector<8x128xf32>
    %152 = arith.divf %150, %151 : vector<8x128xf32>
    %153 = arith.mulf %144, %126 : vector<8x128xf32>
    %154 = arith.mulf %138, %146 : vector<8x128xf32>
    %155 = arith.addf %153, %154 : vector<8x128xf32>
    %156 = math.tanh %155 : vector<8x128xf32>
    %157 = arith.mulf %152, %156 : vector<8x128xf32>
    %c32_52 = arith.constant 32 : index
    %c0_53 = arith.constant 0 : index
    %158 = vector.load %arg18[%c32_52, %c0_53] : memref<64x128xf32, #tpu.memory_space<vmem>>, vector<8x128xf32>
    tpu.vector_store %arg18[%c32_52, %c0_53], %157 {strides = array<i32>} : memref<64x128xf32, #tpu.memory_space<vmem>>, vector<8x128xf32>,
    %c40 = arith.constant 40 : index
    %c0_54 = arith.constant 0 : index
    %159 = vector.load %arg17[%c40, %c0_54] : memref<64x512xf32, #tpu.memory_space<vmem>>, vector<8x512xf32>
    %cst_55 = arith.constant dense<0.000000e+00> : vector<8x512xf32>
    %160 = tpu.matmul %157, %13, %cst_55 {dimension_numbers = #tpu.dot_dimension_numbers<[1], [0], [0], [1], [0, 0, 1, 1], [], []>} : vector<8x128xf32>, vector<128x512xf32>, vector<8x512xf32> -> vector<8x512xf32>
    %161 = arith.addf %159, %160 : vector<8x512xf32>
    %162 = vector.extract_strided_slice %161 {offsets = [0, 0], sizes = [8, 128], strides = [1, 1]} : vector<8x512xf32> to vector<8x128xf32>
    %163 = arith.negf %162 : vector<8x128xf32>
    %164 = math.exp %163 : vector<8x128xf32>
    %cst_56 = arith.constant 1.000000e+00 : f32
    %165 = vector.broadcast %cst_56 : f32 to vector<8x128xf32>
    %166 = arith.addf %165, %164 : vector<8x128xf32>
    %167 = arith.divf %165, %166 : vector<8x128xf32>
    %168 = vector.extract_strided_slice %161 {offsets = [0, 128], sizes = [8, 128], strides = [1, 1]} : vector<8x512xf32> to vector<8x128xf32>
    %169 = arith.negf %168 : vector<8x128xf32>
    %170 = math.exp %169 : vector<8x128xf32>
    %cst_57 = arith.constant 1.000000e+00 : f32
    %171 = vector.broadcast %cst_57 : f32 to vector<8x128xf32>
    %172 = arith.addf %171, %170 : vector<8x128xf32>
    %173 = arith.divf %171, %172 : vector<8x128xf32>
    %174 = vector.extract_strided_slice %161 {offsets = [0, 256], sizes = [8, 128], strides = [1, 1]} : vector<8x512xf32> to vector<8x128xf32>
    %175 = math.tanh %174 : vector<8x128xf32>
    %176 = vector.extract_strided_slice %161 {offsets = [0, 384], sizes = [8, 128], strides = [1, 1]} : vector<8x512xf32> to vector<8x128xf32>
    %177 = arith.negf %176 : vector<8x128xf32>
    %178 = math.exp %177 : vector<8x128xf32>
    %cst_58 = arith.constant 1.000000e+00 : f32
    %179 = vector.broadcast %cst_58 : f32 to vector<8x128xf32>
    %180 = arith.addf %179, %178 : vector<8x128xf32>
    %181 = arith.divf %179, %180 : vector<8x128xf32>
    %182 = arith.mulf %173, %155 : vector<8x128xf32>
    %183 = arith.mulf %167, %175 : vector<8x128xf32>
    %184 = arith.addf %182, %183 : vector<8x128xf32>
    %185 = math.tanh %184 : vector<8x128xf32>
    %186 = arith.mulf %181, %185 : vector<8x128xf32>
    %c40_59 = arith.constant 40 : index
    %c0_60 = arith.constant 0 : index
    %187 = vector.load %arg18[%c40_59, %c0_60] : memref<64x128xf32, #tpu.memory_space<vmem>>, vector<8x128xf32>
    tpu.vector_store %arg18[%c40_59, %c0_60], %186 {strides = array<i32>} : memref<64x128xf32, #tpu.memory_space<vmem>>, vector<8x128xf32>,
    %c48 = arith.constant 48 : index
    %c0_61 = arith.constant 0 : index
    %188 = vector.load %arg17[%c48, %c0_61] : memref<64x512xf32, #tpu.memory_space<vmem>>, vector<8x512xf32>
    %cst_62 = arith.constant dense<0.000000e+00> : vector<8x512xf32>
    %189 = tpu.matmul %186, %13, %cst_62 {dimension_numbers = #tpu.dot_dimension_numbers<[1], [0], [0], [1], [0, 0, 1, 1], [], []>} : vector<8x128xf32>, vector<128x512xf32>, vector<8x512xf32> -> vector<8x512xf32>
    %190 = arith.addf %188, %189 : vector<8x512xf32>
    %191 = vector.extract_strided_slice %190 {offsets = [0, 0], sizes = [8, 128], strides = [1, 1]} : vector<8x512xf32> to vector<8x128xf32>
    %192 = arith.negf %191 : vector<8x128xf32>
    %193 = math.exp %192 : vector<8x128xf32>
    %cst_63 = arith.constant 1.000000e+00 : f32
    %194 = vector.broadcast %cst_63 : f32 to vector<8x128xf32>
    %195 = arith.addf %194, %193 : vector<8x128xf32>
    %196 = arith.divf %194, %195 : vector<8x128xf32>
    %197 = vector.extract_strided_slice %190 {offsets = [0, 128], sizes = [8, 128], strides = [1, 1]} : vector<8x512xf32> to vector<8x128xf32>
    %198 = arith.negf %197 : vector<8x128xf32>
    %199 = math.exp %198 : vector<8x128xf32>
    %cst_64 = arith.constant 1.000000e+00 : f32
    %200 = vector.broadcast %cst_64 : f32 to vector<8x128xf32>
    %201 = arith.addf %200, %199 : vector<8x128xf32>
    %202 = arith.divf %200, %201 : vector<8x128xf32>
    %203 = vector.extract_strided_slice %190 {offsets = [0, 256], sizes = [8, 128], strides = [1, 1]} : vector<8x512xf32> to vector<8x128xf32>
    %204 = math.tanh %203 : vector<8x128xf32>
    %205 = vector.extract_strided_slice %190 {offsets = [0, 384], sizes = [8, 128], strides = [1, 1]} : vector<8x512xf32> to vector<8x128xf32>
    %206 = arith.negf %205 : vector<8x128xf32>
    %207 = math.exp %206 : vector<8x128xf32>
    %cst_65 = arith.constant 1.000000e+00 : f32
    %208 = vector.broadcast %cst_65 : f32 to vector<8x128xf32>
    %209 = arith.addf %208, %207 : vector<8x128xf32>
    %210 = arith.divf %208, %209 : vector<8x128xf32>
    %211 = arith.mulf %202, %184 : vector<8x128xf32>
    %212 = arith.mulf %196, %204 : vector<8x128xf32>
    %213 = arith.addf %211, %212 : vector<8x128xf32>
    %214 = math.tanh %213 : vector<8x128xf32>
    %215 = arith.mulf %210, %214 : vector<8x128xf32>
    %c48_66 = arith.constant 48 : index
    %c0_67 = arith.constant 0 : index
    %216 = vector.load %arg18[%c48_66, %c0_67] : memref<64x128xf32, #tpu.memory_space<vmem>>, vector<8x128xf32>
    tpu.vector_store %arg18[%c48_66, %c0_67], %215 {strides = array<i32>} : memref<64x128xf32, #tpu.memory_space<vmem>>, vector<8x128xf32>,
    %c56 = arith.constant 56 : index
    %c0_68 = arith.constant 0 : index
    %217 = vector.load %arg17[%c56, %c0_68] : memref<64x512xf32, #tpu.memory_space<vmem>>, vector<8x512xf32>
    %cst_69 = arith.constant dense<0.000000e+00> : vector<8x512xf32>
    %218 = tpu.matmul %215, %13, %cst_69 {dimension_numbers = #tpu.dot_dimension_numbers<[1], [0], [0], [1], [0, 0, 1, 1], [], []>} : vector<8x128xf32>, vector<128x512xf32>, vector<8x512xf32> -> vector<8x512xf32>
    %219 = arith.addf %217, %218 : vector<8x512xf32>
    %220 = vector.extract_strided_slice %219 {offsets = [0, 0], sizes = [8, 128], strides = [1, 1]} : vector<8x512xf32> to vector<8x128xf32>
    %221 = arith.negf %220 : vector<8x128xf32>
    %222 = math.exp %221 : vector<8x128xf32>
    %cst_70 = arith.constant 1.000000e+00 : f32
    %223 = vector.broadcast %cst_70 : f32 to vector<8x128xf32>
    %224 = arith.addf %223, %222 : vector<8x128xf32>
    %225 = arith.divf %223, %224 : vector<8x128xf32>
    %226 = vector.extract_strided_slice %219 {offsets = [0, 128], sizes = [8, 128], strides = [1, 1]} : vector<8x512xf32> to vector<8x128xf32>
    %227 = arith.negf %226 : vector<8x128xf32>
    %228 = math.exp %227 : vector<8x128xf32>
    %cst_71 = arith.constant 1.000000e+00 : f32
    %229 = vector.broadcast %cst_71 : f32 to vector<8x128xf32>
    %230 = arith.addf %229, %228 : vector<8x128xf32>
    %231 = arith.divf %229, %230 : vector<8x128xf32>
    %232 = vector.extract_strided_slice %219 {offsets = [0, 256], sizes = [8, 128], strides = [1, 1]} : vector<8x512xf32> to vector<8x128xf32>
    %233 = math.tanh %232 : vector<8x128xf32>
    %234 = vector.extract_strided_slice %219 {offsets = [0, 384], sizes = [8, 128], strides = [1, 1]} : vector<8x512xf32> to vector<8x128xf32>
    %235 = arith.negf %234 : vector<8x128xf32>
    %236 = math.exp %235 : vector<8x128xf32>
    %cst_72 = arith.constant 1.000000e+00 : f32
    %237 = vector.broadcast %cst_72 : f32 to vector<8x128xf32>
    %238 = arith.addf %237, %236 : vector<8x128xf32>
    %239 = arith.divf %237, %238 : vector<8x128xf32>
    %240 = arith.mulf %231, %213 : vector<8x128xf32>
    %241 = arith.mulf %225, %233 : vector<8x128xf32>
    %242 = arith.addf %240, %241 : vector<8x128xf32>
    %243 = math.tanh %242 : vector<8x128xf32>
    %244 = arith.mulf %239, %243 : vector<8x128xf32>
    %c56_73 = arith.constant 56 : index
    %c0_74 = arith.constant 0 : index
    %245 = vector.load %arg18[%c56_73, %c0_74] : memref<64x128xf32, #tpu.memory_space<vmem>>, vector<8x128xf32>
    tpu.vector_store %arg18[%c56_73, %c0_74], %244 {strides = array<i32>} : memref<64x128xf32, #tpu.memory_space<vmem>>, vector<8x128xf32>,
    %c0_75 = arith.constant 0 : index
    %c0_76 = arith.constant 0 : index
    %246 = vector.load %arg18[%c0_75, %c0_76] : memref<64x128xf32, #tpu.memory_space<vmem>>, vector<64x128xf32>
    %c0_77 = arith.constant 0 : index
    %c0_78 = arith.constant 0 : index
    %247 = vector.load %arg9[%c0_77, %c0_78] : memref<128x512xf32, #tpu.memory_space<vmem>>, vector<128x512xf32>
    %cst_79 = arith.constant dense<0.000000e+00> : vector<64x512xf32>
    %248 = tpu.matmul %246, %247, %cst_79 {dimension_numbers = #tpu.dot_dimension_numbers<[1], [0], [0], [1], [0, 0, 1, 1], [], []>} : vector<64x128xf32>, vector<128x512xf32>, vector<64x512xf32> -> vector<64x512xf32>
    %c0_80 = arith.constant 0 : index
    %c0_81 = arith.constant 0 : index
    %249 = vector.load %arg11[%c0_80, %c0_81] : memref<1x512xf32, #tpu.memory_space<vmem>>, vector<1x512xf32>
    %250 = vector.broadcast %249 : vector<1x512xf32> to vector<64x512xf32>
    %251 = arith.addf %248, %250 : vector<64x512xf32>
    %c0_82 = arith.constant 0 : index
    %c0_83 = arith.constant 0 : index
    %252 = vector.load %arg17[%c0_82, %c0_83] : memref<64x512xf32, #tpu.memory_space<vmem>>, vector<64x512xf32>
    tpu.vector_store %arg17[%c0_82, %c0_83], %251 {strides = array<i32>} : memref<64x512xf32, #tpu.memory_space<vmem>>, vector<64x512xf32>,
    %c1 = arith.constant 1 : index
    %c0_84 = arith.constant 0 : index
    %c0_85 = arith.constant 0 : index
    %253 = vector.load %arg2[%c1, %c0_84, %c0_85] : memref<2x8x128xf32, #tpu.memory_space<vmem>>, vector<1x8x128xf32>
    %254 = vector.shape_cast %253 : vector<1x8x128xf32> to vector<8x128xf32>
    %c1_86 = arith.constant 1 : index
    %c0_87 = arith.constant 0 : index
    %c0_88 = arith.constant 0 : index
    %255 = vector.load %arg3[%c1_86, %c0_87, %c0_88] : memref<2x8x128xf32, #tpu.memory_space<vmem>>, vector<1x8x128xf32>
    %256 = vector.shape_cast %255 : vector<1x8x128xf32> to vector<8x128xf32>
    %c0_89 = arith.constant 0 : index
    %c0_90 = arith.constant 0 : index
    %257 = vector.load %arg10[%c0_89, %c0_90] : memref<128x512xf32, #tpu.memory_space<vmem>>, vector<128x512xf32>
    %c0_91 = arith.constant 0 : index
    %c0_92 = arith.constant 0 : index
    %258 = vector.load %arg17[%c0_91, %c0_92] : memref<64x512xf32, #tpu.memory_space<vmem>>, vector<8x512xf32>
    %cst_93 = arith.constant dense<0.000000e+00> : vector<8x512xf32>
    %259 = tpu.matmul %254, %257, %cst_93 {dimension_numbers = #tpu.dot_dimension_numbers<[1], [0], [0], [1], [0, 0, 1, 1], [], []>} : vector<8x128xf32>, vector<128x512xf32>, vector<8x512xf32> -> vector<8x512xf32>
    %260 = arith.addf %258, %259 : vector<8x512xf32>
    %261 = vector.extract_strided_slice %260 {offsets = [0, 0], sizes = [8, 128], strides = [1, 1]} : vector<8x512xf32> to vector<8x128xf32>
    %262 = arith.negf %261 : vector<8x128xf32>
    %263 = math.exp %262 : vector<8x128xf32>
    %cst_94 = arith.constant 1.000000e+00 : f32
    %264 = vector.broadcast %cst_94 : f32 to vector<8x128xf32>
    %265 = arith.addf %264, %263 : vector<8x128xf32>
    %266 = arith.divf %264, %265 : vector<8x128xf32>
    %267 = vector.extract_strided_slice %260 {offsets = [0, 128], sizes = [8, 128], strides = [1, 1]} : vector<8x512xf32> to vector<8x128xf32>
    %268 = arith.negf %267 : vector<8x128xf32>
    %269 = math.exp %268 : vector<8x128xf32>
    %cst_95 = arith.constant 1.000000e+00 : f32
    %270 = vector.broadcast %cst_95 : f32 to vector<8x128xf32>
    %271 = arith.addf %270, %269 : vector<8x128xf32>
    %272 = arith.divf %270, %271 : vector<8x128xf32>
    %273 = vector.extract_strided_slice %260 {offsets = [0, 256], sizes = [8, 128], strides = [1, 1]} : vector<8x512xf32> to vector<8x128xf32>
    %274 = math.tanh %273 : vector<8x128xf32>
    %275 = vector.extract_strided_slice %260 {offsets = [0, 384], sizes = [8, 128], strides = [1, 1]} : vector<8x512xf32> to vector<8x128xf32>
    %276 = arith.negf %275 : vector<8x128xf32>
    %277 = math.exp %276 : vector<8x128xf32>
    %cst_96 = arith.constant 1.000000e+00 : f32
    %278 = vector.broadcast %cst_96 : f32 to vector<8x128xf32>
    %279 = arith.addf %278, %277 : vector<8x128xf32>
    %280 = arith.divf %278, %279 : vector<8x128xf32>
    %281 = arith.mulf %272, %256 : vector<8x128xf32>
    %282 = arith.mulf %266, %274 : vector<8x128xf32>
    %283 = arith.addf %281, %282 : vector<8x128xf32>
    %284 = math.tanh %283 : vector<8x128xf32>
    %285 = arith.mulf %280, %284 : vector<8x128xf32>
    %c0_97 = arith.constant 0 : index
    %c0_98 = arith.constant 0 : index
    %286 = vector.load %arg18[%c0_97, %c0_98] : memref<64x128xf32, #tpu.memory_space<vmem>>, vector<8x128xf32>
    tpu.vector_store %arg18[%c0_97, %c0_98], %285 {strides = array<i32>} : memref<64x128xf32, #tpu.memory_space<vmem>>, vector<8x128xf32>,
    %c8_99 = arith.constant 8 : index
    %c0_100 = arith.constant 0 : index
    %287 = vector.load %arg17[%c8_99, %c0_100] : memref<64x512xf32, #tpu.memory_space<vmem>>, vector<8x512xf32>
    %cst_101 = arith.constant dense<0.000000e+00> : vector<8x512xf32>
    %288 = tpu.matmul %285, %257, %cst_101 {dimension_numbers = #tpu.dot_dimension_numbers<[1], [0], [0], [1], [0, 0, 1, 1], [], []>} : vector<8x128xf32>, vector<128x512xf32>, vector<8x512xf32> -> vector<8x512xf32>
    %289 = arith.addf %287, %288 : vector<8x512xf32>
    %290 = vector.extract_strided_slice %289 {offsets = [0, 0], sizes = [8, 128], strides = [1, 1]} : vector<8x512xf32> to vector<8x128xf32>
    %291 = arith.negf %290 : vector<8x128xf32>
    %292 = math.exp %291 : vector<8x128xf32>
    %cst_102 = arith.constant 1.000000e+00 : f32
    %293 = vector.broadcast %cst_102 : f32 to vector<8x128xf32>
    %294 = arith.addf %293, %292 : vector<8x128xf32>
    %295 = arith.divf %293, %294 : vector<8x128xf32>
    %296 = vector.extract_strided_slice %289 {offsets = [0, 128], sizes = [8, 128], strides = [1, 1]} : vector<8x512xf32> to vector<8x128xf32>
    %297 = arith.negf %296 : vector<8x128xf32>
    %298 = math.exp %297 : vector<8x128xf32>
    %cst_103 = arith.constant 1.000000e+00 : f32
    %299 = vector.broadcast %cst_103 : f32 to vector<8x128xf32>
    %300 = arith.addf %299, %298 : vector<8x128xf32>
    %301 = arith.divf %299, %300 : vector<8x128xf32>
    %302 = vector.extract_strided_slice %289 {offsets = [0, 256], sizes = [8, 128], strides = [1, 1]} : vector<8x512xf32> to vector<8x128xf32>
    %303 = math.tanh %302 : vector<8x128xf32>
    %304 = vector.extract_strided_slice %289 {offsets = [0, 384], sizes = [8, 128], strides = [1, 1]} : vector<8x512xf32> to vector<8x128xf32>
    %305 = arith.negf %304 : vector<8x128xf32>
    %306 = math.exp %305 : vector<8x128xf32>
    %cst_104 = arith.constant 1.000000e+00 : f32
    %307 = vector.broadcast %cst_104 : f32 to vector<8x128xf32>
    %308 = arith.addf %307, %306 : vector<8x128xf32>
    %309 = arith.divf %307, %308 : vector<8x128xf32>
    %310 = arith.mulf %301, %283 : vector<8x128xf32>
    %311 = arith.mulf %295, %303 : vector<8x128xf32>
    %312 = arith.addf %310, %311 : vector<8x128xf32>
    %313 = math.tanh %312 : vector<8x128xf32>
    %314 = arith.mulf %309, %313 : vector<8x128xf32>
    %c8_105 = arith.constant 8 : index
    %c0_106 = arith.constant 0 : index
    %315 = vector.load %arg18[%c8_105, %c0_106] : memref<64x128xf32, #tpu.memory_space<vmem>>, vector<8x128xf32>
    tpu.vector_store %arg18[%c8_105, %c0_106], %314 {strides = array<i32>} : memref<64x128xf32, #tpu.memory_space<vmem>>, vector<8x128xf32>,
    %c16_107 = arith.constant 16 : index
    %c0_108 = arith.constant 0 : index
    %316 = vector.load %arg17[%c16_107, %c0_108] : memref<64x512xf32, #tpu.memory_space<vmem>>, vector<8x512xf32>
    %cst_109 = arith.constant dense<0.000000e+00> : vector<8x512xf32>
    %317 = tpu.matmul %314, %257, %cst_109 {dimension_numbers = #tpu.dot_dimension_numbers<[1], [0], [0], [1], [0, 0, 1, 1], [], []>} : vector<8x128xf32>, vector<128x512xf32>, vector<8x512xf32> -> vector<8x512xf32>
    %318 = arith.addf %316, %317 : vector<8x512xf32>
    %319 = vector.extract_strided_slice %318 {offsets = [0, 0], sizes = [8, 128], strides = [1, 1]} : vector<8x512xf32> to vector<8x128xf32>
    %320 = arith.negf %319 : vector<8x128xf32>
    %321 = math.exp %320 : vector<8x128xf32>
    %cst_110 = arith.constant 1.000000e+00 : f32
    %322 = vector.broadcast %cst_110 : f32 to vector<8x128xf32>
    %323 = arith.addf %322, %321 : vector<8x128xf32>
    %324 = arith.divf %322, %323 : vector<8x128xf32>
    %325 = vector.extract_strided_slice %318 {offsets = [0, 128], sizes = [8, 128], strides = [1, 1]} : vector<8x512xf32> to vector<8x128xf32>
    %326 = arith.negf %325 : vector<8x128xf32>
    %327 = math.exp %326 : vector<8x128xf32>
    %cst_111 = arith.constant 1.000000e+00 : f32
    %328 = vector.broadcast %cst_111 : f32 to vector<8x128xf32>
    %329 = arith.addf %328, %327 : vector<8x128xf32>
    %330 = arith.divf %328, %329 : vector<8x128xf32>
    %331 = vector.extract_strided_slice %318 {offsets = [0, 256], sizes = [8, 128], strides = [1, 1]} : vector<8x512xf32> to vector<8x128xf32>
    %332 = math.tanh %331 : vector<8x128xf32>
    %333 = vector.extract_strided_slice %318 {offsets = [0, 384], sizes = [8, 128], strides = [1, 1]} : vector<8x512xf32> to vector<8x128xf32>
    %334 = arith.negf %333 : vector<8x128xf32>
    %335 = math.exp %334 : vector<8x128xf32>
    %cst_112 = arith.constant 1.000000e+00 : f32
    %336 = vector.broadcast %cst_112 : f32 to vector<8x128xf32>
    %337 = arith.addf %336, %335 : vector<8x128xf32>
    %338 = arith.divf %336, %337 : vector<8x128xf32>
    %339 = arith.mulf %330, %312 : vector<8x128xf32>
    %340 = arith.mulf %324, %332 : vector<8x128xf32>
    %341 = arith.addf %339, %340 : vector<8x128xf32>
    %342 = math.tanh %341 : vector<8x128xf32>
    %343 = arith.mulf %338, %342 : vector<8x128xf32>
    %c16_113 = arith.constant 16 : index
    %c0_114 = arith.constant 0 : index
    %344 = vector.load %arg18[%c16_113, %c0_114] : memref<64x128xf32, #tpu.memory_space<vmem>>, vector<8x128xf32>
    tpu.vector_store %arg18[%c16_113, %c0_114], %343 {strides = array<i32>} : memref<64x128xf32, #tpu.memory_space<vmem>>, vector<8x128xf32>,
    %c24_115 = arith.constant 24 : index
    %c0_116 = arith.constant 0 : index
    %345 = vector.load %arg17[%c24_115, %c0_116] : memref<64x512xf32, #tpu.memory_space<vmem>>, vector<8x512xf32>
    %cst_117 = arith.constant dense<0.000000e+00> : vector<8x512xf32>
    %346 = tpu.matmul %343, %257, %cst_117 {dimension_numbers = #tpu.dot_dimension_numbers<[1], [0], [0], [1], [0, 0, 1, 1], [], []>} : vector<8x128xf32>, vector<128x512xf32>, vector<8x512xf32> -> vector<8x512xf32>
    %347 = arith.addf %345, %346 : vector<8x512xf32>
    %348 = vector.extract_strided_slice %347 {offsets = [0, 0], sizes = [8, 128], strides = [1, 1]} : vector<8x512xf32> to vector<8x128xf32>
    %349 = arith.negf %348 : vector<8x128xf32>
    %350 = math.exp %349 : vector<8x128xf32>
    %cst_118 = arith.constant 1.000000e+00 : f32
    %351 = vector.broadcast %cst_118 : f32 to vector<8x128xf32>
    %352 = arith.addf %351, %350 : vector<8x128xf32>
    %353 = arith.divf %351, %352 : vector<8x128xf32>
    %354 = vector.extract_strided_slice %347 {offsets = [0, 128], sizes = [8, 128], strides = [1, 1]} : vector<8x512xf32> to vector<8x128xf32>
    %355 = arith.negf %354 : vector<8x128xf32>
    %356 = math.exp %355 : vector<8x128xf32>
    %cst_119 = arith.constant 1.000000e+00 : f32
    %357 = vector.broadcast %cst_119 : f32 to vector<8x128xf32>
    %358 = arith.addf %357, %356 : vector<8x128xf32>
    %359 = arith.divf %357, %358 : vector<8x128xf32>
    %360 = vector.extract_strided_slice %347 {offsets = [0, 256], sizes = [8, 128], strides = [1, 1]} : vector<8x512xf32> to vector<8x128xf32>
    %361 = math.tanh %360 : vector<8x128xf32>
    %362 = vector.extract_strided_slice %347 {offsets = [0, 384], sizes = [8, 128], strides = [1, 1]} : vector<8x512xf32> to vector<8x128xf32>
    %363 = arith.negf %362 : vector<8x128xf32>
    %364 = math.exp %363 : vector<8x128xf32>
    %cst_120 = arith.constant 1.000000e+00 : f32
    %365 = vector.broadcast %cst_120 : f32 to vector<8x128xf32>
    %366 = arith.addf %365, %364 : vector<8x128xf32>
    %367 = arith.divf %365, %366 : vector<8x128xf32>
    %368 = arith.mulf %359, %341 : vector<8x128xf32>
    %369 = arith.mulf %353, %361 : vector<8x128xf32>
    %370 = arith.addf %368, %369 : vector<8x128xf32>
    %371 = math.tanh %370 : vector<8x128xf32>
    %372 = arith.mulf %367, %371 : vector<8x128xf32>
    %c24_121 = arith.constant 24 : index
    %c0_122 = arith.constant 0 : index
    %373 = vector.load %arg18[%c24_121, %c0_122] : memref<64x128xf32, #tpu.memory_space<vmem>>, vector<8x128xf32>
    tpu.vector_store %arg18[%c24_121, %c0_122], %372 {strides = array<i32>} : memref<64x128xf32, #tpu.memory_space<vmem>>, vector<8x128xf32>,
    %c32_123 = arith.constant 32 : index
    %c0_124 = arith.constant 0 : index
    %374 = vector.load %arg17[%c32_123, %c0_124] : memref<64x512xf32, #tpu.memory_space<vmem>>, vector<8x512xf32>
    %cst_125 = arith.constant dense<0.000000e+00> : vector<8x512xf32>
    %375 = tpu.matmul %372, %257, %cst_125 {dimension_numbers = #tpu.dot_dimension_numbers<[1], [0], [0], [1], [0, 0, 1, 1], [], []>} : vector<8x128xf32>, vector<128x512xf32>, vector<8x512xf32> -> vector<8x512xf32>
    %376 = arith.addf %374, %375 : vector<8x512xf32>
    %377 = vector.extract_strided_slice %376 {offsets = [0, 0], sizes = [8, 128], strides = [1, 1]} : vector<8x512xf32> to vector<8x128xf32>
    %378 = arith.negf %377 : vector<8x128xf32>
    %379 = math.exp %378 : vector<8x128xf32>
    %cst_126 = arith.constant 1.000000e+00 : f32
    %380 = vector.broadcast %cst_126 : f32 to vector<8x128xf32>
    %381 = arith.addf %380, %379 : vector<8x128xf32>
    %382 = arith.divf %380, %381 : vector<8x128xf32>
    %383 = vector.extract_strided_slice %376 {offsets = [0, 128], sizes = [8, 128], strides = [1, 1]} : vector<8x512xf32> to vector<8x128xf32>
    %384 = arith.negf %383 : vector<8x128xf32>
    %385 = math.exp %384 : vector<8x128xf32>
    %cst_127 = arith.constant 1.000000e+00 : f32
    %386 = vector.broadcast %cst_127 : f32 to vector<8x128xf32>
    %387 = arith.addf %386, %385 : vector<8x128xf32>
    %388 = arith.divf %386, %387 : vector<8x128xf32>
    %389 = vector.extract_strided_slice %376 {offsets = [0, 256], sizes = [8, 128], strides = [1, 1]} : vector<8x512xf32> to vector<8x128xf32>
    %390 = math.tanh %389 : vector<8x128xf32>
    %391 = vector.extract_strided_slice %376 {offsets = [0, 384], sizes = [8, 128], strides = [1, 1]} : vector<8x512xf32> to vector<8x128xf32>
    %392 = arith.negf %391 : vector<8x128xf32>
    %393 = math.exp %392 : vector<8x128xf32>
    %cst_128 = arith.constant 1.000000e+00 : f32
    %394 = vector.broadcast %cst_128 : f32 to vector<8x128xf32>
    %395 = arith.addf %394, %393 : vector<8x128xf32>
    %396 = arith.divf %394, %395 : vector<8x128xf32>
    %397 = arith.mulf %388, %370 : vector<8x128xf32>
    %398 = arith.mulf %382, %390 : vector<8x128xf32>
    %399 = arith.addf %397, %398 : vector<8x128xf32>
    %400 = math.tanh %399 : vector<8x128xf32>
    %401 = arith.mulf %396, %400 : vector<8x128xf32>
    %c32_129 = arith.constant 32 : index
    %c0_130 = arith.constant 0 : index
    %402 = vector.load %arg18[%c32_129, %c0_130] : memref<64x128xf32, #tpu.memory_space<vmem>>, vector<8x128xf32>
    tpu.vector_store %arg18[%c32_129, %c0_130], %401 {strides = array<i32>} : memref<64x128xf32, #tpu.memory_space<vmem>>, vector<8x128xf32>,
    %c40_131 = arith.constant 40 : index
    %c0_132 = arith.constant 0 : index
    %403 = vector.load %arg17[%c40_131, %c0_132] : memref<64x512xf32, #tpu.memory_space<vmem>>, vector<8x512xf32>
    %cst_133 = arith.constant dense<0.000000e+00> : vector<8x512xf32>
    %404 = tpu.matmul %401, %257, %cst_133 {dimension_numbers = #tpu.dot_dimension_numbers<[1], [0], [0], [1], [0, 0, 1, 1], [], []>} : vector<8x128xf32>, vector<128x512xf32>, vector<8x512xf32> -> vector<8x512xf32>
    %405 = arith.addf %403, %404 : vector<8x512xf32>
    %406 = vector.extract_strided_slice %405 {offsets = [0, 0], sizes = [8, 128], strides = [1, 1]} : vector<8x512xf32> to vector<8x128xf32>
    %407 = arith.negf %406 : vector<8x128xf32>
    %408 = math.exp %407 : vector<8x128xf32>
    %cst_134 = arith.constant 1.000000e+00 : f32
    %409 = vector.broadcast %cst_134 : f32 to vector<8x128xf32>
    %410 = arith.addf %409, %408 : vector<8x128xf32>
    %411 = arith.divf %409, %410 : vector<8x128xf32>
    %412 = vector.extract_strided_slice %405 {offsets = [0, 128], sizes = [8, 128], strides = [1, 1]} : vector<8x512xf32> to vector<8x128xf32>
    %413 = arith.negf %412 : vector<8x128xf32>
    %414 = math.exp %413 : vector<8x128xf32>
    %cst_135 = arith.constant 1.000000e+00 : f32
    %415 = vector.broadcast %cst_135 : f32 to vector<8x128xf32>
    %416 = arith.addf %415, %414 : vector<8x128xf32>
    %417 = arith.divf %415, %416 : vector<8x128xf32>
    %418 = vector.extract_strided_slice %405 {offsets = [0, 256], sizes = [8, 128], strides = [1, 1]} : vector<8x512xf32> to vector<8x128xf32>
    %419 = math.tanh %418 : vector<8x128xf32>
    %420 = vector.extract_strided_slice %405 {offsets = [0, 384], sizes = [8, 128], strides = [1, 1]} : vector<8x512xf32> to vector<8x128xf32>
    %421 = arith.negf %420 : vector<8x128xf32>
    %422 = math.exp %421 : vector<8x128xf32>
    %cst_136 = arith.constant 1.000000e+00 : f32
    %423 = vector.broadcast %cst_136 : f32 to vector<8x128xf32>
    %424 = arith.addf %423, %422 : vector<8x128xf32>
    %425 = arith.divf %423, %424 : vector<8x128xf32>
    %426 = arith.mulf %417, %399 : vector<8x128xf32>
    %427 = arith.mulf %411, %419 : vector<8x128xf32>
    %428 = arith.addf %426, %427 : vector<8x128xf32>
    %429 = math.tanh %428 : vector<8x128xf32>
    %430 = arith.mulf %425, %429 : vector<8x128xf32>
    %c40_137 = arith.constant 40 : index
    %c0_138 = arith.constant 0 : index
    %431 = vector.load %arg18[%c40_137, %c0_138] : memref<64x128xf32, #tpu.memory_space<vmem>>, vector<8x128xf32>
    tpu.vector_store %arg18[%c40_137, %c0_138], %430 {strides = array<i32>} : memref<64x128xf32, #tpu.memory_space<vmem>>, vector<8x128xf32>,
    %c48_139 = arith.constant 48 : index
    %c0_140 = arith.constant 0 : index
    %432 = vector.load %arg17[%c48_139, %c0_140] : memref<64x512xf32, #tpu.memory_space<vmem>>, vector<8x512xf32>
    %cst_141 = arith.constant dense<0.000000e+00> : vector<8x512xf32>
    %433 = tpu.matmul %430, %257, %cst_141 {dimension_numbers = #tpu.dot_dimension_numbers<[1], [0], [0], [1], [0, 0, 1, 1], [], []>} : vector<8x128xf32>, vector<128x512xf32>, vector<8x512xf32> -> vector<8x512xf32>
    %434 = arith.addf %432, %433 : vector<8x512xf32>
    %435 = vector.extract_strided_slice %434 {offsets = [0, 0], sizes = [8, 128], strides = [1, 1]} : vector<8x512xf32> to vector<8x128xf32>
    %436 = arith.negf %435 : vector<8x128xf32>
    %437 = math.exp %436 : vector<8x128xf32>
    %cst_142 = arith.constant 1.000000e+00 : f32
    %438 = vector.broadcast %cst_142 : f32 to vector<8x128xf32>
    %439 = arith.addf %438, %437 : vector<8x128xf32>
    %440 = arith.divf %438, %439 : vector<8x128xf32>
    %441 = vector.extract_strided_slice %434 {offsets = [0, 128], sizes = [8, 128], strides = [1, 1]} : vector<8x512xf32> to vector<8x128xf32>
    %442 = arith.negf %441 : vector<8x128xf32>
    %443 = math.exp %442 : vector<8x128xf32>
    %cst_143 = arith.constant 1.000000e+00 : f32
    %444 = vector.broadcast %cst_143 : f32 to vector<8x128xf32>
    %445 = arith.addf %444, %443 : vector<8x128xf32>
    %446 = arith.divf %444, %445 : vector<8x128xf32>
    %447 = vector.extract_strided_slice %434 {offsets = [0, 256], sizes = [8, 128], strides = [1, 1]} : vector<8x512xf32> to vector<8x128xf32>
    %448 = math.tanh %447 : vector<8x128xf32>
    %449 = vector.extract_strided_slice %434 {offsets = [0, 384], sizes = [8, 128], strides = [1, 1]} : vector<8x512xf32> to vector<8x128xf32>
    %450 = arith.negf %449 : vector<8x128xf32>
    %451 = math.exp %450 : vector<8x128xf32>
    %cst_144 = arith.constant 1.000000e+00 : f32
    %452 = vector.broadcast %cst_144 : f32 to vector<8x128xf32>
    %453 = arith.addf %452, %451 : vector<8x128xf32>
    %454 = arith.divf %452, %453 : vector<8x128xf32>
    %455 = arith.mulf %446, %428 : vector<8x128xf32>
    %456 = arith.mulf %440, %448 : vector<8x128xf32>
    %457 = arith.addf %455, %456 : vector<8x128xf32>
    %458 = math.tanh %457 : vector<8x128xf32>
    %459 = arith.mulf %454, %458 : vector<8x128xf32>
    %c48_145 = arith.constant 48 : index
    %c0_146 = arith.constant 0 : index
    %460 = vector.load %arg18[%c48_145, %c0_146] : memref<64x128xf32, #tpu.memory_space<vmem>>, vector<8x128xf32>
    tpu.vector_store %arg18[%c48_145, %c0_146], %459 {strides = array<i32>} : memref<64x128xf32, #tpu.memory_space<vmem>>, vector<8x128xf32>,
    %c56_147 = arith.constant 56 : index
    %c0_148 = arith.constant 0 : index
    %461 = vector.load %arg17[%c56_147, %c0_148] : memref<64x512xf32, #tpu.memory_space<vmem>>, vector<8x512xf32>
    %cst_149 = arith.constant dense<0.000000e+00> : vector<8x512xf32>
    %462 = tpu.matmul %459, %257, %cst_149 {dimension_numbers = #tpu.dot_dimension_numbers<[1], [0], [0], [1], [0, 0, 1, 1], [], []>} : vector<8x128xf32>, vector<128x512xf32>, vector<8x512xf32> -> vector<8x512xf32>
    %463 = arith.addf %461, %462 : vector<8x512xf32>
    %464 = vector.extract_strided_slice %463 {offsets = [0, 0], sizes = [8, 128], strides = [1, 1]} : vector<8x512xf32> to vector<8x128xf32>
    %465 = arith.negf %464 : vector<8x128xf32>
    %466 = math.exp %465 : vector<8x128xf32>
    %cst_150 = arith.constant 1.000000e+00 : f32
    %467 = vector.broadcast %cst_150 : f32 to vector<8x128xf32>
    %468 = arith.addf %467, %466 : vector<8x128xf32>
    %469 = arith.divf %467, %468 : vector<8x128xf32>
    %470 = vector.extract_strided_slice %463 {offsets = [0, 128], sizes = [8, 128], strides = [1, 1]} : vector<8x512xf32> to vector<8x128xf32>
    %471 = arith.negf %470 : vector<8x128xf32>
    %472 = math.exp %471 : vector<8x128xf32>
    %cst_151 = arith.constant 1.000000e+00 : f32
    %473 = vector.broadcast %cst_151 : f32 to vector<8x128xf32>
    %474 = arith.addf %473, %472 : vector<8x128xf32>
    %475 = arith.divf %473, %474 : vector<8x128xf32>
    %476 = vector.extract_strided_slice %463 {offsets = [0, 256], sizes = [8, 128], strides = [1, 1]} : vector<8x512xf32> to vector<8x128xf32>
    %477 = math.tanh %476 : vector<8x128xf32>
    %478 = vector.extract_strided_slice %463 {offsets = [0, 384], sizes = [8, 128], strides = [1, 1]} : vector<8x512xf32> to vector<8x128xf32>
    %479 = arith.negf %478 : vector<8x128xf32>
    %480 = math.exp %479 : vector<8x128xf32>
    %cst_152 = arith.constant 1.000000e+00 : f32
    %481 = vector.broadcast %cst_152 : f32 to vector<8x128xf32>
    %482 = arith.addf %481, %480 : vector<8x128xf32>
    %483 = arith.divf %481, %482 : vector<8x128xf32>
    %484 = arith.mulf %475, %457 : vector<8x128xf32>
    %485 = arith.mulf %469, %477 : vector<8x128xf32>
    %486 = arith.addf %484, %485 : vector<8x128xf32>
    %487 = math.tanh %486 : vector<8x128xf32>
    %488 = arith.mulf %483, %487 : vector<8x128xf32>
    %c56_153 = arith.constant 56 : index
    %c0_154 = arith.constant 0 : index
    %489 = vector.load %arg18[%c56_153, %c0_154] : memref<64x128xf32, #tpu.memory_space<vmem>>, vector<8x128xf32>
    tpu.vector_store %arg18[%c56_153, %c0_154], %488 {strides = array<i32>} : memref<64x128xf32, #tpu.memory_space<vmem>>, vector<8x128xf32>,
    %c0_155 = arith.constant 0 : index
    %c0_156 = arith.constant 0 : index
    %490 = vector.load %arg5[%c0_155, %c0_156] : memref<64x64xf32, #tpu.memory_space<vmem>>, vector<64x64xf32>
    %c0_157 = arith.constant 0 : index
    %c0_158 = arith.constant 0 : index
    %491 = vector.load %arg18[%c0_157, %c0_158] : memref<64x128xf32, #tpu.memory_space<vmem>>, vector<64x128xf32>
    %cst_159 = arith.constant dense<0.000000e+00> : vector<64x128xf32>
    %492 = tpu.matmul %490, %491, %cst_159 {dimension_numbers = #tpu.dot_dimension_numbers<[1], [0], [0], [1], [0, 0, 1, 1], [], []>} : vector<64x64xf32>, vector<64x128xf32>, vector<64x128xf32> -> vector<64x128xf32>
    %c0_160 = arith.constant 0 : index
    %c0_161 = arith.constant 0 : index
    %493 = vector.load %arg12[%c0_160, %c0_161] : memref<128x128xf32, #tpu.memory_space<vmem>>, vector<128x128xf32>
    %cst_162 = arith.constant dense<0.000000e+00> : vector<64x128xf32>
    %494 = tpu.matmul %492, %493, %cst_162 {dimension_numbers = #tpu.dot_dimension_numbers<[1], [0], [0], [1], [0, 0, 1, 1], [], []>} : vector<64x128xf32>, vector<128x128xf32>, vector<64x128xf32> -> vector<64x128xf32>
    %c0_163 = arith.constant 0 : index
    %c0_164 = arith.constant 0 : index
    %495 = vector.load %arg13[%c0_163, %c0_164] : memref<1x128xf32, #tpu.memory_space<vmem>>, vector<1x128xf32>
    %496 = vector.broadcast %495 : vector<1x128xf32> to vector<64x128xf32>
    %497 = arith.addf %494, %496 : vector<64x128xf32>
    %c0_165 = arith.constant 0 : index
    %c0_166 = arith.constant 0 : index
    %498 = vector.load %arg14[%c0_165, %c0_166] : memref<64x128xf32, #tpu.memory_space<vmem>>, vector<64x128xf32>
    tpu.vector_store %arg14[%c0_165, %c0_166], %497 {strides = array<i32>} : memref<64x128xf32, #tpu.memory_space<vmem>>, vector<64x128xf32>,
    %c0_167 = arith.constant 0 : index
    %c0_168 = arith.constant 0 : index
    %c0_169 = arith.constant 0 : index
    %499 = vector.load %arg15[%c0_167, %c0_168, %c0_169] : memref<2x8x128xf32, #tpu.memory_space<vmem>>, vector<1x8x128xf32>
    %500 = vector.shape_cast %499 : vector<1x8x128xf32> to vector<8x128xf32>
    %501 = vector.shape_cast %244 : vector<8x128xf32> to vector<1x8x128xf32>
    tpu.vector_store %arg15[%c0_167, %c0_168, %c0_169], %501 {strides = array<i32>} : memref<2x8x128xf32, #tpu.memory_space<vmem>>, vector<1x8x128xf32>,
    %c1_170 = arith.constant 1 : index
    %c0_171 = arith.constant 0 : index
    %c0_172 = arith.constant 0 : index
    %502 = vector.load %arg15[%c1_170, %c0_171, %c0_172] : memref<2x8x128xf32, #tpu.memory_space<vmem>>, vector<1x8x128xf32>
    %503 = vector.shape_cast %502 : vector<1x8x128xf32> to vector<8x128xf32>
    %504 = vector.shape_cast %488 : vector<8x128xf32> to vector<1x8x128xf32>
    tpu.vector_store %arg15[%c1_170, %c0_171, %c0_172], %504 {strides = array<i32>} : memref<2x8x128xf32, #tpu.memory_space<vmem>>, vector<1x8x128xf32>,
    %c0_173 = arith.constant 0 : index
    %c0_174 = arith.constant 0 : index
    %c0_175 = arith.constant 0 : index
    %505 = vector.load %arg16[%c0_173, %c0_174, %c0_175] : memref<2x8x128xf32, #tpu.memory_space<vmem>>, vector<1x8x128xf32>
    %506 = vector.shape_cast %505 : vector<1x8x128xf32> to vector<8x128xf32>
    %507 = vector.shape_cast %242 : vector<8x128xf32> to vector<1x8x128xf32>
    tpu.vector_store %arg16[%c0_173, %c0_174, %c0_175], %507 {strides = array<i32>} : memref<2x8x128xf32, #tpu.memory_space<vmem>>, vector<1x8x128xf32>,
    %c1_176 = arith.constant 1 : index
    %c0_177 = arith.constant 0 : index
    %c0_178 = arith.constant 0 : index
    %508 = vector.load %arg16[%c1_176, %c0_177, %c0_178] : memref<2x8x128xf32, #tpu.memory_space<vmem>>, vector<1x8x128xf32>
    %509 = vector.shape_cast %508 : vector<1x8x128xf32> to vector<8x128xf32>
    %510 = vector.shape_cast %486 : vector<8x128xf32> to vector<1x8x128xf32>
    tpu.vector_store %arg16[%c1_176, %c0_177, %c0_178], %510 {strides = array<i32>} : memref<2x8x128xf32, #tpu.memory_space<vmem>>, vector<1x8x128xf32>,
    return
  }
  func.func @transform_0(%arg0: i32) -> (i32, i32) {
    %c0_i32 = arith.constant 0 : i32
    %c0_i32_0 = arith.constant 0 : i32
    %c0_i32_1 = arith.constant 0 : i32
    return %c0_i32, %c0_i32_0 : i32, i32
  }
  func.func @transform_1(%arg0: i32) -> (i32, i32, i32) {
    %c0_i32 = arith.constant 0 : i32
    %c0_i32_0 = arith.constant 0 : i32
    %c0_i32_1 = arith.constant 0 : i32
    %c0_i32_2 = arith.constant 0 : i32
    return %c0_i32, %c0_i32_0, %c0_i32_1 : i32, i32, i32
  }
  func.func @transform_2(%arg0: i32) -> (i32, i32, i32) {
    %c0_i32 = arith.constant 0 : i32
    %c0_i32_0 = arith.constant 0 : i32
    %c0_i32_1 = arith.constant 0 : i32
    %c0_i32_2 = arith.constant 0 : i32
    return %c0_i32, %c0_i32_0, %c0_i32_1 : i32, i32, i32
  }
  func.func @transform_3(%arg0: i32) -> (i32, i32) {
    %c0_i32 = arith.constant 0 : i32
    %c0_i32_0 = arith.constant 0 : i32
    %c0_i32_1 = arith.constant 0 : i32
    return %c0_i32, %c0_i32_0 : i32, i32
  }
  func.func @transform_4(%arg0: i32) -> (i32, i32) {
    %c0_i32 = arith.constant 0 : i32
    %c0_i32_0 = arith.constant 0 : i32
    %c0_i32_1 = arith.constant 0 : i32
    return %c0_i32, %c0_i32_0 : i32, i32
  }
  func.func @transform_5(%arg0: i32) -> (i32, i32) {
    %c0_i32 = arith.constant 0 : i32
    %c0_i32_0 = arith.constant 0 : i32
    %c0_i32_1 = arith.constant 0 : i32
    return %c0_i32, %c0_i32_0 : i32, i32
  }
  func.func @transform_6(%arg0: i32) -> (i32, i32) {
    %c0_i32 = arith.constant 0 : i32
    %c0_i32_0 = arith.constant 0 : i32
    %c0_i32_1 = arith.constant 0 : i32
    return %c0_i32, %c0_i32_0 : i32, i32
  }
  func.func @transform_7(%arg0: i32) -> (i32, i32) {
    %c0_i32 = arith.constant 0 : i32
    %c0_i32_0 = arith.constant 0 : i32
    %c0_i32_1 = arith.constant 0 : i32
    return %c0_i32, %c0_i32_0 : i32, i32
  }
  func.func @transform_8(%arg0: i32) -> (i32, i32) {
    %c0_i32 = arith.constant 0 : i32
    %c0_i32_0 = arith.constant 0 : i32
    %c0_i32_1 = arith.constant 0 : i32
    return %c0_i32, %c0_i32_0 : i32, i32
  }
  func.func @transform_9(%arg0: i32) -> (i32, i32) {
    %c0_i32 = arith.constant 0 : i32
    %c0_i32_0 = arith.constant 0 : i32
    %c0_i32_1 = arith.constant 0 : i32
    return %c0_i32, %c0_i32_0 : i32, i32
  }
  func.func @transform_10(%arg0: i32) -> (i32, i32) {
    %c0_i32 = arith.constant 0 : i32
    %c0_i32_0 = arith.constant 0 : i32
    %c0_i32_1 = arith.constant 0 : i32
    return %c0_i32, %c0_i32_0 : i32, i32
  }
  func.func @transform_11(%arg0: i32) -> (i32, i32) {
    %c0_i32 = arith.constant 0 : i32
    %c0_i32_0 = arith.constant 0 : i32
    %c0_i32_1 = arith.constant 0 : i32
    return %c0_i32, %c0_i32_0 : i32, i32
  }
  func.func @transform_12(%arg0: i32) -> (i32, i32) {
    %c0_i32 = arith.constant 0 : i32
    %c0_i32_0 = arith.constant 0 : i32
    %c0_i32_1 = arith.constant 0 : i32
    return %c0_i32, %c0_i32_0 : i32, i32
  }
  func.func @transform_13(%arg0: i32) -> (i32, i32) {
    %c0_i32 = arith.constant 0 : i32
    %c0_i32_0 = arith.constant 0 : i32
    %c0_i32_1 = arith.constant 0 : i32
    return %c0_i32, %c0_i32_0 : i32, i32
  }
  func.func @transform_14(%arg0: i32) -> (i32, i32, i32) {
    %c0_i32 = arith.constant 0 : i32
    %c0_i32_0 = arith.constant 0 : i32
    %c0_i32_1 = arith.constant 0 : i32
    %c0_i32_2 = arith.constant 0 : i32
    return %c0_i32, %c0_i32_0, %c0_i32_1 : i32, i32, i32
  }
  func.func @transform_15(%arg0: i32) -> (i32, i32, i32) {
    %c0_i32 = arith.constant 0 : i32
    %c0_i32_0 = arith.constant 0 : i32
    %c0_i32_1 = arith.constant 0 : i32
    %c0_i32_2 = arith.constant 0 : i32
    return %c0_i32, %c0_i32_0, %c0_i32_1 : i32, i32, i32
  }
}

</mosaic_0001>

<llo_original>
// kernel: text_generation_forward.1
$region0: #{text_generation_forward.1}
  #allocation0 [shape = 'u32[]', space=smem, size = 0x4, offset = 0x4, fixed_abs, tag = 'smem constant byte address 0x4 - core index']
  #allocation1 [shape = 'u32[144,128]{1,0:T(1,128)}', space=vmem, size = 0x12000, scoped, tag = 'internal scratch']
  #allocation2 [shape = 'f32[64,512]{1,0:T(8,128)}', space=vmem, size = 0x20000, scoped, tag = 'scratch operand']
  #allocation3 [shape = 'f32[64,128]{1,0:T(8,128)}', space=vmem, size = 0x8000, scoped, tag = 'scratch operand']
  %s0 = inlined_call_operand.vmem [shape: f32[64,128], index: 0, kind: input, shape index: {}]
  %s1 = inlined_call_operand.vmem [shape: f32[2,8,128], index: 1, kind: input, shape index: {}, may-alias: {1,2}]
  %s2 = inlined_call_operand.vmem [shape: f32[2,8,128], index: 2, kind: input, shape index: {}, may-alias: {1,2}]
  %s3 = inlined_call_operand.vmem [shape: f32[64,64], index: 3, kind: input, shape index: {}, may-alias: {3,4}]
  %s4 = inlined_call_operand.vmem [shape: f32[64,64], index: 4, kind: input, shape index: {}, may-alias: {3,4}]
  %s5 = inlined_call_operand.hbm [shape: f32[128,512], index: 5, kind: input, shape index: {}]
  %s6 = inlined_call_operand.hbm [shape: f32[128,512], index: 6, kind: input, shape index: {}]
  %s7 = inlined_call_operand.vmem [shape: f32[1,512], index: 7, kind: input, shape index: {}]
  %s8 = inlined_call_operand.hbm [shape: f32[128,512], index: 8, kind: input, shape index: {}]
  %s9 = inlined_call_operand.hbm [shape: f32[128,512], index: 9, kind: input, shape index: {}]
  %s10 = inlined_call_operand.vmem [shape: f32[1,512], index: 10, kind: input, shape index: {}]
  %s11 = inlined_call_operand.hbm [shape: f32[128,128], index: 11, kind: input, shape index: {}]
  %s12 = inlined_call_operand.vmem [shape: f32[1,128], index: 12, kind: input, shape index: {}]
  %s13 = inlined_call_operand.hbm [shape: f32[64,128], index: 13, kind: output, shape index: {0}]
  %s14 = inlined_call_operand.hbm [shape: f32[2,8,128], index: 14, kind: output, shape index: {1}]
  %s15 = inlined_call_operand.hbm [shape: f32[2,8,128], index: 15, kind: output, shape index: {2}]
  %16 = xla_tuple %s13, %s14, %s15
  %s17 = sld [smem:[#allocation0]]
  $region98: #{text_generation_forward.1} parent=0
    _
  %s19 = ssub.s32 1, %s17
  %s20 = scalar_select 0, %s19, %s17
  $region1: #{text_generation_forward.1} parent=0
    #allocation4 [shape = 'u8[262144]{0}', space=vmem, size = 0x40000, scoped, tag = 'input window, operand 5, single buffered']
    #allocation5 [shape = 's32[1]{0}', space=sflag, size = 0x4, scoped, tag = 'scoped memory for text_generation_forward.1']
    #allocation6 [shape = 's32[1]{0}', space=sflag, size = 0x4, scoped, tag = 'scoped memory for text_generation_forward.1']
    #allocation7 [shape = 'u8[262144]{0}', space=vmem, size = 0x40000, scoped, tag = 'input window, operand 6, single buffered']
    #allocation8 [shape = 's32[1]{0}', space=sflag, size = 0x4, scoped, tag = 'scoped memory for text_generation_forward.1']
    #allocation9 [shape = 'u8[262144]{0}', space=vmem, size = 0x40000, scoped, tag = 'input window, operand 8, single buffered']
    #allocation10 [shape = 'u8[262144]{0}', space=vmem, size = 0x40000, scoped, tag = 'input window, operand 9, single buffered']
    #allocation11 [shape = 's32[1]{0}', space=sflag, size = 0x4, scoped, tag = 'scoped memory for text_generation_forward.1']
    #allocation12 [shape = 'u8[65536]{0}', space=vmem, size = 0x10000, scoped, tag = 'input window, operand 11, single buffered']
    #allocation13 [shape = 'u8[32768]{0}', space=vmem, size = 0x8000, scoped, tag = 'output window, operand 0, single buffered']
    #allocation14 [shape = 'u8[8192]{0}', space=vmem, size = 0x2000, scoped, tag = 'output window, operand 1, single buffered']
    #allocation15 [shape = 's32[1]{0}', space=sflag, size = 0x4, scoped, tag = 'scoped memory for text_generation_forward.1']
    #allocation16 [shape = 'u8[8192]{0}', space=vmem, size = 0x2000, scoped, tag = 'output window, operand 2, single buffered']
    %21 = vsyncpa [#allocation5], 0
    %22 = vsyncpa [#allocation8], 0
    %23 = vsyncpa [#allocation11], 0
    %24 = vsyncpa [#allocation6], 0
    %25 = vsyncpa [#allocation15], 0
    // Predicated region
    $region2: #{text_generation_forward.1} parent=1 // pred_check
      _
    $region3: #{text_generation_forward.1} parent=1 // pred_check_branch
      %27 = sbr.rel (0) target = $region5
    $region4: #{text_generation_forward.1} parent=1 // pred_region
      _
    $region5: #{text_generation_forward.1} parent=1 // pred_fallthru
      _
    // Predicated region
    $region6: #{text_generation_forward.1} parent=1 // pred_check
      _
    $region7: #{text_generation_forward.1} parent=1 // pred_check_branch
      %29 = sbr.rel (0) target = $region9
    $region8: #{text_generation_forward.1} parent=1 // pred_region
      _
    $region9: #{text_generation_forward.1} parent=1 // pred_fallthru
      _
    // Predicated region
    $region10: #{text_generation_forward.1} parent=1 // pred_check
      _
    $region11: #{text_generation_forward.1} parent=1 // pred_check_branch
      %31 = sbr.rel (0) target = $region13
    $region12: #{text_generation_forward.1} parent=1 // pred_region
      _
    $region13: #{text_generation_forward.1} parent=1 // pred_fallthru
      _
    // Predicated region
    $region14: #{text_generation_forward.1} parent=1 // pred_check
      _
    $region15: #{text_generation_forward.1} parent=1 // pred_check_branch
      %33 = sbr.rel (0) target = $region17
    $region16: #{text_generation_forward.1} parent=1 // pred_region
      _
    $region17: #{text_generation_forward.1} parent=1 // pred_fallthru
      _
    // Predicated region
    $region18: #{text_generation_forward.1} parent=1 // pred_check
      _
    $region19: #{text_generation_forward.1} parent=1 // pred_check_branch
      %35 = sbr.rel (0) target = $region21
    $region20: #{text_generation_forward.1} parent=1 // pred_region
      _
    $region21: #{text_generation_forward.1} parent=1 // pred_fallthru
      _
    // Predicated region
    $region22: #{text_generation_forward.1} parent=1 // pred_check
      _
    $region23: #{text_generation_forward.1} parent=1 // pred_check_branch
      %37 = sbr.rel (0) target = $region25
    $region24: #{text_generation_forward.1} parent=1 // pred_region
      %s39 = ssub.s32 8192, 8192
      %40 = vsyncadd [#allocation5], %s39
      %s41 = sshll.u32 [#allocation4], 4
      %s42 = int_to_ptr.vmem [resolvable:$true] %s41
      %47 = dma.hbm_to_vmem [thread:$0]  %s5, 8192, %s42, [#allocation5], 512, 512, 32
    $region25: #{text_generation_forward.1} parent=1 // pred_fallthru
      _
    // Predicated region
    $region26: #{text_generation_forward.1} parent=1 // pred_check
      _
    $region27: #{text_generation_forward.1} parent=1 // pred_check_branch
      %49 = sbr.rel (0) target = $region29
    $region28: #{text_generation_forward.1} parent=1 // pred_region
      %s51 = ssub.s32 8192, 8192
      %52 = vsyncadd [#allocation8], %s51
      %s53 = sshll.u32 [#allocation7], 4
      %s54 = int_to_ptr.vmem [resolvable:$true] %s53
      %59 = dma.hbm_to_vmem [thread:$0]  %s6, 8192, %s54, [#allocation8], 512, 512, 32
    $region29: #{text_generation_forward.1} parent=1 // pred_fallthru
      _
    // Predicated region
    $region30: #{text_generation_forward.1} parent=1 // pred_check
      _
    $region31: #{text_generation_forward.1} parent=1 // pred_check_branch
      %61 = sbr.rel (0) target = $region33
    $region32: #{text_generation_forward.1} parent=1 // pred_region
      _
    $region33: #{text_generation_forward.1} parent=1 // pred_fallthru
      _
    // Predicated region
    $region34: #{text_generation_forward.1} parent=1 // pred_check
      _
    $region35: #{text_generation_forward.1} parent=1 // pred_check_branch
      %63 = sbr.rel (0) target = $region37
    $region36: #{text_generation_forward.1} parent=1 // pred_region
      %s65 = ssub.s32 8192, 8192
      %66 = vsyncadd [#allocation8], %s65
      %s67 = sshll.u32 [#allocation9], 4
      %s68 = int_to_ptr.vmem [resolvable:$true] %s67
      %73 = dma.hbm_to_vmem [thread:$0]  %s8, 8192, %s68, [#allocation8], 512, 512, 32
    $region37: #{text_generation_forward.1} parent=1 // pred_fallthru
      _
    // Predicated region
    $region38: #{text_generation_forward.1} parent=1 // pred_check
      _
    $region39: #{text_generation_forward.1} parent=1 // pred_check_branch
      %75 = sbr.rel (0) target = $region41
    $region40: #{text_generation_forward.1} parent=1 // pred_region
      %s77 = ssub.s32 8192, 8192
      %78 = vsyncadd [#allocation11], %s77
      %s79 = sshll.u32 [#allocation10], 4
      %s80 = int_to_ptr.vmem [resolvable:$true] %s79
      %85 = dma.hbm_to_vmem [thread:$0]  %s9, 8192, %s80, [#allocation11], 512, 512, 32
    $region41: #{text_generation_forward.1} parent=1 // pred_fallthru
      _
    // Predicated region
    $region42: #{text_generation_forward.1} parent=1 // pred_check
      _
    $region43: #{text_generation_forward.1} parent=1 // pred_check_branch
      %87 = sbr.rel (0) target = $region45
    $region44: #{text_generation_forward.1} parent=1 // pred_region
      _
    $region45: #{text_generation_forward.1} parent=1 // pred_fallthru
      _
    // Predicated region
    $region46: #{text_generation_forward.1} parent=1 // pred_check
      _
    $region47: #{text_generation_forward.1} parent=1 // pred_check_branch
      %89 = sbr.rel (0) target = $region49
    $region48: #{text_generation_forward.1} parent=1 // pred_region
      %s91 = ssub.s32 2048, 2048
      %92 = vsyncadd [#allocation11], %s91
      %s93 = sshll.u32 [#allocation12], 4
      %s94 = int_to_ptr.vmem [resolvable:$true] %s93
      %99 = dma.hbm_to_vmem [thread:$0]  %s11, 2048, %s94, [#allocation11], 128, 128, 8
    $region49: #{text_generation_forward.1} parent=1 // pred_fallthru
      _
    // Predicated region
    $region50: #{text_generation_forward.1} parent=1 // pred_check
      _
    $region51: #{text_generation_forward.1} parent=1 // pred_check_branch
      %101 = sbr.rel (0) target = $region53
    $region52: #{text_generation_forward.1} parent=1 // pred_region
      _
    $region53: #{text_generation_forward.1} parent=1 // pred_fallthru
      _
    // Predicated region
    $region54: #{text_generation_forward.1} parent=1 // pred_check
      _
    $region55: #{text_generation_forward.1} parent=1 // pred_check_branch
      %103 = sbr.rel (0) target = $region57
    $region56: #{text_generation_forward.1} parent=1 // pred_region
      %104 = dma.done [#allocation5], 8192
    $region57: #{text_generation_forward.1} parent=1 // pred_fallthru
      _
    // Predicated region
    $region58: #{text_generation_forward.1} parent=1 // pred_check
      _
    $region59: #{text_generation_forward.1} parent=1 // pred_check_branch
      %106 = sbr.rel (0) target = $region61
    $region60: #{text_generation_forward.1} parent=1 // pred_region
      %107 = dma.done [#allocation8], 8192
    $region61: #{text_generation_forward.1} parent=1 // pred_fallthru
      _
    // Predicated region
    $region62: #{text_generation_forward.1} parent=1 // pred_check
      _
    $region63: #{text_generation_forward.1} parent=1 // pred_check_branch
      %109 = sbr.rel (0) target = $region65
    $region64: #{text_generation_forward.1} parent=1 // pred_region
      %110 = dma.done [#allocation8], 8192
    $region65: #{text_generation_forward.1} parent=1 // pred_fallthru
      _
    // Predicated region
    $region66: #{text_generation_forward.1} parent=1 // pred_check
      _
    $region67: #{text_generation_forward.1} parent=1 // pred_check_branch
      %112 = sbr.rel (0) target = $region69
    $region68: #{text_generation_forward.1} parent=1 // pred_region
      %113 = dma.done [#allocation11], 8192
    $region69: #{text_generation_forward.1} parent=1 // pred_fallthru
      _
    // Predicated region
    $region70: #{text_generation_forward.1} parent=1 // pred_check
      _
    $region71: #{text_generation_forward.1} parent=1 // pred_check_branch
      %115 = sbr.rel (0) target = $region73
    $region72: #{text_generation_forward.1} parent=1 // pred_region
      %116 = dma.done [#allocation11], 2048
    $region73: #{text_generation_forward.1} parent=1 // pred_fallthru
      _
    %v117 = vld [vmem:[%s3] sm:$0xff]
    %v118 = vld [vmem:[%s3 + $0x8] sm:$0xff]
    %v119 = vld [vmem:[%s3 + $0x10] sm:$0xff]
    %v120 = vld [vmem:[%s3 + $0x18] sm:$0xff]
    %v121 = vld [vmem:[%s3 + $0x20] sm:$0xff]
    %v122 = vld [vmem:[%s3 + $0x28] sm:$0xff]
    %v123 = vld [vmem:[%s3 + $0x30] sm:$0xff]
    %v124 = vld [vmem:[%s3 + $0x38] sm:$0xff]
    %v125 = vld [vmem:[%s0] sm:$0xff]
    %v126 = vld [vmem:[%s0 + $0x8] sm:$0xff]
    %v127 = vld [vmem:[%s0 + $0x10] sm:$0xff]
    %v128 = vld [vmem:[%s0 + $0x18] sm:$0xff]
    %v129 = vld [vmem:[%s0 + $0x20] sm:$0xff]
    %v130 = vld [vmem:[%s0 + $0x28] sm:$0xff]
    %v131 = vld [vmem:[%s0 + $0x30] sm:$0xff]
    %v132 = vld [vmem:[%s0 + $0x38] sm:$0xff]
    %vm133 = vcmask 523264
    %v135 = vsel %vm133, %v117, 0
    %v138 = vsel %vm133, %v118, 0
    %v141 = vsel %vm133, %v119, 0
    %v144 = vsel %vm133, %v120, 0
    %v147 = vsel %vm133, %v121, 0
    %v150 = vsel %vm133, %v122, 0
    %v153 = vsel %vm133, %v123, 0
    %v156 = vsel %vm133, %v124, 0
    %158 = vmatprep.subr.mxu0 0.0
    %159 = vmatpush1.msra.mxu0 %v125
    %160 = vmatprep.subr.mxu0 0.0
    %161 = vmatpush1.msra.mxu0 %v126
    %162 = vmatprep.subr.mxu0 0.0
    %163 = vmatpush1.msra.mxu0 %v127
    %164 = vmatprep.subr.mxu0 0.0
    %165 = vmatpush1.msra.mxu0 %v128
    %166 = vmatprep.subr.mxu0 0.0
    %167 = vmatpush1.msra.mxu0 %v129
    %168 = vmatprep.subr.mxu0 0.0
    %169 = vmatpush1.msra.mxu0 %v130
    %170 = vmatprep.subr.mxu0 0.0
    %171 = vmatpush1.msra.mxu0 %v131
    %172 = vmatprep.subr.mxu0 0.0
    %173 = vmatpush1.msra.mxu0 %v132
    %174 = vmatprep.subr.mxu0 0.0
    %175 = vmatpush1.msra.mxu0 0.0
    %176 = vmatprep.subr.mxu0 0.0
    %177 = vmatpush1.msra.mxu0 0.0
    %178 = vmatprep.subr.mxu0 0.0
    %179 = vmatpush1.msra.mxu0 0.0
    %180 = vmatprep.subr.mxu0 0.0
    %181 = vmatpush1.msra.mxu0 0.0
    %182 = vmatprep.subr.mxu0 0.0
    %183 = vmatpush1.msra.mxu0 0.0
    %184 = vmatprep.subr.mxu0 0.0
    %185 = vmatpush1.msra.mxu0 0.0
    %186 = vmatprep.subr.mxu0 0.0
    %187 = vmatpush1.msra.mxu0 0.0
    %188 = vmatprep.subr.mxu0 0.0
    %189 = vmatpush1.msra.mxu0 0.0
    %190 = vmatprep.subr.mxu0 0.0
    %191 = vmatpush1.msra.mxu0 0.0
    %192 = vmatprep.subr.mxu0 0.0
    %193 = vmatpush1.msra.mxu0 0.0
    %194 = vmatprep.subr.mxu0 0.0
    %195 = vmatpush1.msra.mxu0 0.0
    %196 = vmatprep.subr.mxu0 0.0
    %197 = vmatpush1.msra.mxu0 0.0
    %198 = vmatprep.subr.mxu0 0.0
    %199 = vmatpush1.msra.mxu0 0.0
    %200 = vmatprep.subr.mxu0 0.0
    %201 = vmatpush1.msra.mxu0 0.0
    %202 = vmatprep.subr.mxu0 0.0
    %203 = vmatpush1.msra.mxu0 0.0
    %204 = vmatprep.subr.mxu0 0.0
    %205 = vmatpush1.msra.mxu0 0.0
    %206 = vmatprep.subr.mxu0 0.0
    %207 = vmatpush1.msra.mxu0 0.0
    %208 = vmatprep.subr.mxu0 0.0
    %209 = vmatpush1.msra.mxu0 0.0
    %210 = vmatprep.subr.mxu0 0.0
    %211 = vmatpush1.msra.mxu0 0.0
    %212 = vmatprep.subr.mxu0 0.0
    %213 = vmatpush1.msra.mxu0 0.0
    %214 = vmatprep.subr.mxu0 0.0
    %215 = vmatpush1.msra.mxu0 0.0
    %216 = vmatprep.subr.mxu0 0.0
    %217 = vmatpush1.msra.mxu0 0.0
    %218 = vmatprep.subr.mxu0 0.0
    %219 = vmatpush1.msra.mxu0 0.0
    %220 = vmatprep.subr.mxu0 0.0
    %221 = vmatpush1.msra.mxu0 0.0
    %222 = vmatprep.mubr.f32.mxu0 0.0
    %223 = vmatmul.mubr.f32.gmra.mrb[0].mxu0 %v135
    %v224 = vpop.f32.mrb[0].mxu0
    %v225 = vadd.f32 0.0, %v224
    %v226 = vpop.f32.mrb[0].mxu0
    %227 = vmatprep.mubr.f32.mxu0 0.0
    %228 = vmatmul.mubr.f32.gmra.mrb[0].mxu0 %v138
    %v229 = vpop.f32.mrb[0].mxu0
    %v230 = vadd.f32 0.0, %v229
    %v231 = vpop.f32.mrb[0].mxu0
    %232 = vmatprep.mubr.f32.mxu0 0.0
    %233 = vmatmul.mubr.f32.gmra.mrb[0].mxu0 %v141
    %v234 = vpop.f32.mrb[0].mxu0
    %v235 = vadd.f32 0.0, %v234
    %v236 = vpop.f32.mrb[0].mxu0
    %237 = vmatprep.mubr.f32.mxu0 0.0
    %238 = vmatmul.mubr.f32.gmra.mrb[0].mxu0 %v144
    %v239 = vpop.f32.mrb[0].mxu0
    %v240 = vadd.f32 0.0, %v239
    %v241 = vpop.f32.mrb[0].mxu0
    %242 = vmatprep.mubr.f32.mxu0 0.0
    %243 = vmatmul.mubr.f32.gmra.mrb[0].mxu0 %v147
    %v244 = vpop.f32.mrb[0].mxu0
    %v245 = vadd.f32 0.0, %v244
    %v246 = vpop.f32.mrb[0].mxu0
    %247 = vmatprep.mubr.f32.mxu0 0.0
    %248 = vmatmul.mubr.f32.gmra.mrb[0].mxu0 %v150
    %v249 = vpop.f32.mrb[0].mxu0
    %v250 = vadd.f32 0.0, %v249
    %v251 = vpop.f32.mrb[0].mxu0
    %252 = vmatprep.mubr.f32.mxu0 0.0
    %253 = vmatmul.mubr.f32.gmra.mrb[0].mxu0 %v153
    %v254 = vpop.f32.mrb[0].mxu0
    %v255 = vadd.f32 0.0, %v254
    %v256 = vpop.f32.mrb[0].mxu0
    %257 = vmatprep.mubr.f32.mxu0 0.0
    %258 = vmatmul.mubr.f32.gmra.mrb[0].mxu0 %v156
    %v259 = vpop.f32.mrb[0].mxu0
    %v260 = vadd.f32 0.0, %v259
    %v261 = vpop.f32.mrb[0].mxu0
    %262 = vdwg.mxu0
    %v263 = vld [vmem:[#allocation4] sm:$0xff]
    %v264 = vld [vmem:[#allocation4 + $0x8] sm:$0xff]
    %v265 = vld [vmem:[#allocation4 + $0x10] sm:$0xff]
    %v266 = vld [vmem:[#allocation4 + $0x18] sm:$0xff]
    %v267 = vld [vmem:[#allocation4 + $0x20] sm:$0xff]
    %v268 = vld [vmem:[#allocation4 + $0x28] sm:$0xff]
    %v269 = vld [vmem:[#allocation4 + $0x30] sm:$0xff]
    %v270 = vld [vmem:[#allocation4 + $0x38] sm:$0xff]
    %v271 = vld [vmem:[#allocation4 + $0x40] sm:$0xff]
    %v272 = vld [vmem:[#allocation4 + $0x48] sm:$0xff]
    %v273 = vld [vmem:[#allocation4 + $0x50] sm:$0xff]
    %v274 = vld [vmem:[#allocation4 + $0x58] sm:$0xff]
    %v275 = vld [vmem:[#allocation4 + $0x60] sm:$0xff]
    %v276 = vld [vmem:[#allocation4 + $0x68] sm:$0xff]
    %v277 = vld [vmem:[#allocation4 + $0x70] sm:$0xff]
    %v278 = vld [vmem:[#allocation4 + $0x78] sm:$0xff]
    %v279 = vld [vmem:[#allocation4 + $0x80] sm:$0xff]
    %v280 = vld [vmem:[#allocation4 + $0x88] sm:$0xff]
    %v281 = vld [vmem:[#allocation4 + $0x90] sm:$0xff]
    %v282 = vld [vmem:[#allocation4 + $0x98] sm:$0xff]
    %v283 = vld [vmem:[#allocation4 + $0xa0] sm:$0xff]
    %v284 = vld [vmem:[#allocation4 + $0xa8] sm:$0xff]
    %v285 = vld [vmem:[#allocation4 + $0xb0] sm:$0xff]
    %v286 = vld [vmem:[#allocation4 + $0xb8] sm:$0xff]
    %v287 = vld [vmem:[#allocation4 + $0xc0] sm:$0xff]
    %v288 = vld [vmem:[#allocation4 + $0xc8] sm:$0xff]
    %v289 = vld [vmem:[#allocation4 + $0xd0] sm:$0xff]
    %v290 = vld [vmem:[#allocation4 + $0xd8] sm:$0xff]
    %v291 = vld [vmem:[#allocation4 + $0xe0] sm:$0xff]
    %v292 = vld [vmem:[#allocation4 + $0xe8] sm:$0xff]
    %v293 = vld [vmem:[#allocation4 + $0xf0] sm:$0xff]
    %v294 = vld [vmem:[#allocation4 + $0xf8] sm:$0xff]
    %v295 = vld [vmem:[#allocation4 + $0x100] sm:$0xff]
    %v296 = vld [vmem:[#allocation4 + $0x108] sm:$0xff]
    %v297 = vld [vmem:[#allocation4 + $0x110] sm:$0xff]
    %v298 = vld [vmem:[#allocation4 + $0x118] sm:$0xff]
    %v299 = vld [vmem:[#allocation4 + $0x120] sm:$0xff]
    %v300 = vld [vmem:[#allocation4 + $0x128] sm:$0xff]
    %v301 = vld [vmem:[#allocation4 + $0x130] sm:$0xff]
    %v302 = vld [vmem:[#allocation4 + $0x138] sm:$0xff]
    %v303 = vld [vmem:[#allocation4 + $0x140] sm:$0xff]
    %v304 = vld [vmem:[#allocation4 + $0x148] sm:$0xff]
    %v305 = vld [vmem:[#allocation4 + $0x150] sm:$0xff]
    %v306 = vld [vmem:[#allocation4 + $0x158] sm:$0xff]
    %v307 = vld [vmem:[#allocation4 + $0x160] sm:$0xff]
    %v308 = vld [vmem:[#allocation4 + $0x168] sm:$0xff]
    %v309 = vld [vmem:[#allocation4 + $0x170] sm:$0xff]
    %v310 = vld [vmem:[#allocation4 + $0x178] sm:$0xff]
    %v311 = vld [vmem:[#allocation4 + $0x180] sm:$0xff]
    %v312 = vld [vmem:[#allocation4 + $0x188] sm:$0xff]
    %v313 = vld [vmem:[#allocation4 + $0x190] sm:$0xff]
    %v314 = vld [vmem:[#allocation4 + $0x198] sm:$0xff]
    %v315 = vld [vmem:[#allocation4 + $0x1a0] sm:$0xff]
    %v316 = vld [vmem:[#allocation4 + $0x1a8] sm:$0xff]
    %v317 = vld [vmem:[#allocation4 + $0x1b0] sm:$0xff]
    %v318 = vld [vmem:[#allocation4 + $0x1b8] sm:$0xff]
    %v319 = vld [vmem:[#allocation4 + $0x1c0] sm:$0xff]
    %v320 = vld [vmem:[#allocation4 + $0x1c8] sm:$0xff]
    %v321 = vld [vmem:[#allocation4 + $0x1d0] sm:$0xff]
    %v322 = vld [vmem:[#allocation4 + $0x1d8] sm:$0xff]
    %v323 = vld [vmem:[#allocation4 + $0x1e0] sm:$0xff]
    %v324 = vld [vmem:[#allocation4 + $0x1e8] sm:$0xff]
    %v325 = vld [vmem:[#allocation4 + $0x1f0] sm:$0xff]
    %v326 = vld [vmem:[#allocation4 + $0x1f8] sm:$0xff]
    %v327 = vld [vmem:[%s7] sm:$0xf]
    %v329 = vlaneseq
    %v330 = vshrl.u32 %v329, 7
    %v331 = vsub.s32 0, %v330
    %v332 = vrot.slane %v327, %v331
    %v333 = vlaneseq
    %v334 = vshrl.u32 %v333, 7
    %v335 = vsub.s32 1, %v334
    %v336 = vrot.slane %v327, %v335
    %v337 = vlaneseq
    %v338 = vshrl.u32 %v337, 7
    %v339 = vsub.s32 2, %v338
    %v340 = vrot.slane %v327, %v339
    %v341 = vlaneseq
    %v342 = vshrl.u32 %v341, 7
    %v343 = vsub.s32 3, %v342
    %v344 = vrot.slane %v327, %v343
    %349 = vmatprep.subr.mxu0 %v264
    %350 = vmatpush1.msra.mxu0 %v263
    %351 = vmatprep.subr.mxu0 %v268
    %352 = vmatpush1.msra.mxu0 %v267
    %353 = vmatprep.subr.mxu0 %v272
    %354 = vmatpush1.msra.mxu0 %v271
    %355 = vmatprep.subr.mxu0 %v276
    %356 = vmatpush1.msra.mxu0 %v275
    %357 = vmatprep.subr.mxu0 %v280
    %358 = vmatpush1.msra.mxu0 %v279
    %359 = vmatprep.subr.mxu0 %v284
    %360 = vmatpush1.msra.mxu0 %v283
    %361 = vmatprep.subr.mxu0 %v288
    %362 = vmatpush1.msra.mxu0 %v287
    %363 = vmatprep.subr.mxu0 %v292
    %364 = vmatpush1.msra.mxu0 %v291
    %365 = vmatprep.subr.mxu0 %v296
    %366 = vmatpush1.msra.mxu0 %v295
    %367 = vmatprep.subr.mxu0 %v300
    %368 = vmatpush1.msra.mxu0 %v299
    %369 = vmatprep.subr.mxu0 %v304
    %370 = vmatpush1.msra.mxu0 %v303
    %371 = vmatprep.subr.mxu0 %v308
    %372 = vmatpush1.msra.mxu0 %v307
    %373 = vmatprep.subr.mxu0 %v312
    %374 = vmatpush1.msra.mxu0 %v311
    %375 = vmatprep.subr.mxu0 %v316
    %376 = vmatpush1.msra.mxu0 %v315
    %377 = vmatprep.subr.mxu0 %v320
    %378 = vmatpush1.msra.mxu0 %v319
    %379 = vmatprep.subr.mxu0 %v324
    %380 = vmatpush1.msra.mxu0 %v323
    %381 = vmatprep.subr.mxu0 0.0
    %382 = vmatpush1.msra.mxu0 0.0
    %383 = vmatprep.subr.mxu0 0.0
    %384 = vmatpush1.msra.mxu0 0.0
    %385 = vmatprep.subr.mxu0 0.0
    %386 = vmatpush1.msra.mxu0 0.0
    %387 = vmatprep.subr.mxu0 0.0
    %388 = vmatpush1.msra.mxu0 0.0
    %389 = vmatprep.subr.mxu0 0.0
    %390 = vmatpush1.msra.mxu0 0.0
    %391 = vmatprep.subr.mxu0 0.0
    %392 = vmatpush1.msra.mxu0 0.0
    %393 = vmatprep.subr.mxu0 0.0
    %394 = vmatpush1.msra.mxu0 0.0
    %395 = vmatprep.subr.mxu0 0.0
    %396 = vmatpush1.msra.mxu0 0.0
    %397 = vmatprep.subr.mxu0 0.0
    %398 = vmatpush1.msra.mxu0 0.0
    %399 = vmatprep.subr.mxu0 0.0
    %400 = vmatpush1.msra.mxu0 0.0
    %401 = vmatprep.subr.mxu0 0.0
    %402 = vmatpush1.msra.mxu0 0.0
    %403 = vmatprep.subr.mxu0 0.0
    %404 = vmatpush1.msra.mxu0 0.0
    %405 = vmatprep.subr.mxu0 0.0
    %406 = vmatpush1.msra.mxu0 0.0
    %407 = vmatprep.subr.mxu0 0.0
    %408 = vmatpush1.msra.mxu0 0.0
    %409 = vmatprep.subr.mxu0 0.0
    %410 = vmatpush1.msra.mxu0 0.0
    %411 = vmatprep.subr.mxu0 0.0
    %412 = vmatpush1.msra.mxu0 0.0
    %413 = vmatprep.mubr.f32.mxu0 0.0
    %414 = vmatmul.mubr.f32.gmra.mrb[0].mxu0 %v225
    %v415 = vpop.f32.mrb[0].mxu0
    %v416 = vadd.f32 %v332, %v415
    %v417 = vpop.f32.mrb[0].mxu0
    %v418 = vadd.f32 %v336, %v417
    %419 = vmatprep.mubr.f32.mxu0 0.0
    %420 = vmatmul.mubr.f32.gmra.mrb[0].mxu0 %v230
    %v421 = vpop.f32.mrb[0].mxu0
    %v422 = vadd.f32 %v332, %v421
    %v423 = vpop.f32.mrb[0].mxu0
    %v424 = vadd.f32 %v336, %v423
    %425 = vmatprep.mubr.f32.mxu0 0.0
    %426 = vmatmul.mubr.f32.gmra.mrb[0].mxu0 %v235
    %v427 = vpop.f32.mrb[0].mxu0
    %v428 = vadd.f32 %v332, %v427
    %v429 = vpop.f32.mrb[0].mxu0
    %v430 = vadd.f32 %v336, %v429
    %431 = vmatprep.mubr.f32.mxu0 0.0
    %432 = vmatmul.mubr.f32.gmra.mrb[0].mxu0 %v240
    %v433 = vpop.f32.mrb[0].mxu0
    %v434 = vadd.f32 %v332, %v433
    %v435 = vpop.f32.mrb[0].mxu0
    %v436 = vadd.f32 %v336, %v435
    %437 = vmatprep.mubr.f32.mxu0 0.0
    %438 = vmatmul.mubr.f32.gmra.mrb[0].mxu0 %v245
    %v439 = vpop.f32.mrb[0].mxu0
    %v440 = vadd.f32 %v332, %v439
    %v441 = vpop.f32.mrb[0].mxu0
    %v442 = vadd.f32 %v336, %v441
    %443 = vmatprep.mubr.f32.mxu0 0.0
    %444 = vmatmul.mubr.f32.gmra.mrb[0].mxu0 %v250
    %v445 = vpop.f32.mrb[0].mxu0
    %v446 = vadd.f32 %v332, %v445
    %v447 = vpop.f32.mrb[0].mxu0
    %v448 = vadd.f32 %v336, %v447
    %449 = vmatprep.mubr.f32.mxu0 0.0
    %450 = vmatmul.mubr.f32.gmra.mrb[0].mxu0 %v255
    %v451 = vpop.f32.mrb[0].mxu0
    %v452 = vadd.f32 %v332, %v451
    %v453 = vpop.f32.mrb[0].mxu0
    %v454 = vadd.f32 %v336, %v453
    %455 = vmatprep.mubr.f32.mxu0 0.0
    %456 = vmatmul.mubr.f32.gmra.mrb[0].mxu0 %v260
    %v457 = vpop.f32.mrb[0].mxu0
    %v458 = vadd.f32 %v332, %v457
    %v459 = vpop.f32.mrb[0].mxu0
    %v460 = vadd.f32 %v336, %v459
    %461 = vdwg.mxu0
    %462 = vmatprep.subr.mxu0 %v266
    %463 = vmatpush1.msra.mxu0 %v265
    %464 = vmatprep.subr.mxu0 %v270
    %465 = vmatpush1.msra.mxu0 %v269
    %466 = vmatprep.subr.mxu0 %v274
    %467 = vmatpush1.msra.mxu0 %v273
    %468 = vmatprep.subr.mxu0 %v278
    %469 = vmatpush1.msra.mxu0 %v277
    %470 = vmatprep.subr.mxu0 %v282
    %471 = vmatpush1.msra.mxu0 %v281
    %472 = vmatprep.subr.mxu0 %v286
    %473 = vmatpush1.msra.mxu0 %v285
    %474 = vmatprep.subr.mxu0 %v290
    %475 = vmatpush1.msra.mxu0 %v289
    %476 = vmatprep.subr.mxu0 %v294
    %477 = vmatpush1.msra.mxu0 %v293
    %478 = vmatprep.subr.mxu0 %v298
    %479 = vmatpush1.msra.mxu0 %v297
    %480 = vmatprep.subr.mxu0 %v302
    %481 = vmatpush1.msra.mxu0 %v301
    %482 = vmatprep.subr.mxu0 %v306
    %483 = vmatpush1.msra.mxu0 %v305
    %484 = vmatprep.subr.mxu0 %v310
    %485 = vmatpush1.msra.mxu0 %v309
    %486 = vmatprep.subr.mxu0 %v314
    %487 = vmatpush1.msra.mxu0 %v313
    %488 = vmatprep.subr.mxu0 %v318
    %489 = vmatpush1.msra.mxu0 %v317
    %490 = vmatprep.subr.mxu0 %v322
    %491 = vmatpush1.msra.mxu0 %v321
    %492 = vmatprep.subr.mxu0 %v326
    %493 = vmatpush1.msra.mxu0 %v325
    %494 = vmatprep.subr.mxu0 0.0
    %495 = vmatpush1.msra.mxu0 0.0
    %496 = vmatprep.subr.mxu0 0.0
    %497 = vmatpush1.msra.mxu0 0.0
    %498 = vmatprep.subr.mxu0 0.0
    %499 = vmatpush1.msra.mxu0 0.0
    %500 = vmatprep.subr.mxu0 0.0
    %501 = vmatpush1.msra.mxu0 0.0
    %502 = vmatprep.subr.mxu0 0.0
    %503 = vmatpush1.msra.mxu0 0.0
    %504 = vmatprep.subr.mxu0 0.0
    %505 = vmatpush1.msra.mxu0 0.0
    %506 = vmatprep.subr.mxu0 0.0
    %507 = vmatpush1.msra.mxu0 0.0
    %508 = vmatprep.subr.mxu0 0.0
    %509 = vmatpush1.msra.mxu0 0.0
    %510 = vmatprep.subr.mxu0 0.0
    %511 = vmatpush1.msra.mxu0 0.0
    %512 = vmatprep.subr.mxu0 0.0
    %513 = vmatpush1.msra.mxu0 0.0
    %514 = vmatprep.subr.mxu0 0.0
    %515 = vmatpush1.msra.mxu0 0.0
    %516 = vmatprep.subr.mxu0 0.0
    %517 = vmatpush1.msra.mxu0 0.0
    %518 = vmatprep.subr.mxu0 0.0
    %519 = vmatpush1.msra.mxu0 0.0
    %520 = vmatprep.subr.mxu0 0.0
    %521 = vmatpush1.msra.mxu0 0.0
    %522 = vmatprep.subr.mxu0 0.0
    %523 = vmatpush1.msra.mxu0 0.0
    %524 = vmatprep.subr.mxu0 0.0
    %525 = vmatpush1.msra.mxu0 0.0
    %526 = vmatprep.mubr.f32.mxu0 0.0
    %527 = vmatmul.mubr.f32.gmra.mrb[0].mxu0 %v225
    %v528 = vpop.f32.mrb[0].mxu0
    %v529 = vadd.f32 %v340, %v528
    %v530 = vpop.f32.mrb[0].mxu0
    %v531 = vadd.f32 %v344, %v530
    %532 = vmatprep.mubr.f32.mxu0 0.0
    %533 = vmatmul.mubr.f32.gmra.mrb[0].mxu0 %v230
    %v534 = vpop.f32.mrb[0].mxu0
    %v535 = vadd.f32 %v340, %v534
    %v536 = vpop.f32.mrb[0].mxu0
    %v537 = vadd.f32 %v344, %v536
    %538 = vmatprep.mubr.f32.mxu0 0.0
    %539 = vmatmul.mubr.f32.gmra.mrb[0].mxu0 %v235
    %v540 = vpop.f32.mrb[0].mxu0
    %v541 = vadd.f32 %v340, %v540
    %v542 = vpop.f32.mrb[0].mxu0
    %v543 = vadd.f32 %v344, %v542
    %544 = vmatprep.mubr.f32.mxu0 0.0
    %545 = vmatmul.mubr.f32.gmra.mrb[0].mxu0 %v240
    %v546 = vpop.f32.mrb[0].mxu0
    %v547 = vadd.f32 %v340, %v546
    %v548 = vpop.f32.mrb[0].mxu0
    %v549 = vadd.f32 %v344, %v548
    %550 = vmatprep.mubr.f32.mxu0 0.0
    %551 = vmatmul.mubr.f32.gmra.mrb[0].mxu0 %v245
    %v552 = vpop.f32.mrb[0].mxu0
    %v553 = vadd.f32 %v340, %v552
    %v554 = vpop.f32.mrb[0].mxu0
    %v555 = vadd.f32 %v344, %v554
    %556 = vmatprep.mubr.f32.mxu0 0.0
    %557 = vmatmul.mubr.f32.gmra.mrb[0].mxu0 %v250
    %v558 = vpop.f32.mrb[0].mxu0
    %v559 = vadd.f32 %v340, %v558
    %v560 = vpop.f32.mrb[0].mxu0
    %v561 = vadd.f32 %v344, %v560
    %562 = vmatprep.mubr.f32.mxu0 0.0
    %563 = vmatmul.mubr.f32.gmra.mrb[0].mxu0 %v255
    %v564 = vpop.f32.mrb[0].mxu0
    %v565 = vadd.f32 %v340, %v564
    %v566 = vpop.f32.mrb[0].mxu0
    %v567 = vadd.f32 %v344, %v566
    %568 = vmatprep.mubr.f32.mxu0 0.0
    %569 = vmatmul.mubr.f32.gmra.mrb[0].mxu0 %v260
    %v570 = vpop.f32.mrb[0].mxu0
    %v571 = vadd.f32 %v340, %v570
    %v572 = vpop.f32.mrb[0].mxu0
    %v573 = vadd.f32 %v344, %v572
    %574 = vdwg.mxu0
    %575 = vst [vmem:[#allocation2] sm:$0xff] %v416
    %576 = vst [vmem:[#allocation2 + $0x8] sm:$0xff] %v418
    %577 = vst [vmem:[#allocation2 + $0x10] sm:$0xff] %v529
    %578 = vst [vmem:[#allocation2 + $0x18] sm:$0xff] %v531
    %579 = vst [vmem:[#allocation2 + $0x20] sm:$0xff] %v422
    %580 = vst [vmem:[#allocation2 + $0x28] sm:$0xff] %v424
    %581 = vst [vmem:[#allocation2 + $0x30] sm:$0xff] %v535
    %582 = vst [vmem:[#allocation2 + $0x38] sm:$0xff] %v537
    %583 = vst [vmem:[#allocation2 + $0x40] sm:$0xff] %v428
    %584 = vst [vmem:[#allocation2 + $0x48] sm:$0xff] %v430
    %585 = vst [vmem:[#allocation2 + $0x50] sm:$0xff] %v541
    %586 = vst [vmem:[#allocation2 + $0x58] sm:$0xff] %v543
    %587 = vst [vmem:[#allocation2 + $0x60] sm:$0xff] %v434
    %588 = vst [vmem:[#allocation2 + $0x68] sm:$0xff] %v436
    %589 = vst [vmem:[#allocation2 + $0x70] sm:$0xff] %v547
    %590 = vst [vmem:[#allocation2 + $0x78] sm:$0xff] %v549
    %591 = vst [vmem:[#allocation2 + $0x80] sm:$0xff] %v440
    %592 = vst [vmem:[#allocation2 + $0x88] sm:$0xff] %v442
    %593 = vst [vmem:[#allocation2 + $0x90] sm:$0xff] %v553
    %594 = vst [vmem:[#allocation2 + $0x98] sm:$0xff] %v555
    %595 = vst [vmem:[#allocation2 + $0xa0] sm:$0xff] %v446
    %596 = vst [vmem:[#allocation2 + $0xa8] sm:$0xff] %v448
    %597 = vst [vmem:[#allocation2 + $0xb0] sm:$0xff] %v559
    %598 = vst [vmem:[#allocation2 + $0xb8] sm:$0xff] %v561
    %599 = vst [vmem:[#allocation2 + $0xc0] sm:$0xff] %v452
    %600 = vst [vmem:[#allocation2 + $0xc8] sm:$0xff] %v454
    %601 = vst [vmem:[#allocation2 + $0xd0] sm:$0xff] %v565
    %602 = vst [vmem:[#allocation2 + $0xd8] sm:$0xff] %v567
    %603 = vst [vmem:[#allocation2 + $0xe0] sm:$0xff] %v458
    %604 = vst [vmem:[#allocation2 + $0xe8] sm:$0xff] %v460
    %605 = vst [vmem:[#allocation2 + $0xf0] sm:$0xff] %v571
    %606 = vst [vmem:[#allocation2 + $0xf8] sm:$0xff] %v573
    %v607 = vld [vmem:[%s1] sm:$0xff]
    %v608 = vld [vmem:[%s2] sm:$0xff]
    %v609 = vld [vmem:[#allocation7] sm:$0xff]
    %v610 = vld [vmem:[#allocation7 + $0x8] sm:$0xff]
    %v611 = vld [vmem:[#allocation7 + $0x10] sm:$0xff]
    %v612 = vld [vmem:[#allocation7 + $0x18] sm:$0xff]
    %v613 = vld [vmem:[#allocation7 + $0x20] sm:$0xff]
    %v614 = vld [vmem:[#allocation7 + $0x28] sm:$0xff]
    %v615 = vld [vmem:[#allocation7 + $0x30] sm:$0xff]
    %v616 = vld [vmem:[#allocation7 + $0x38] sm:$0xff]
    %v617 = vld [vmem:[#allocation7 + $0x40] sm:$0xff]
    %v618 = vld [vmem:[#allocation7 + $0x48] sm:$0xff]
    %v619 = vld [vmem:[#allocation7 + $0x50] sm:$0xff]
    %v620 = vld [vmem:[#allocation7 + $0x58] sm:$0xff]
    %v621 = vld [vmem:[#allocation7 + $0x60] sm:$0xff]
    %v622 = vld [vmem:[#allocation7 + $0x68] sm:$0xff]
    %v623 = vld [vmem:[#allocation7 + $0x70] sm:$0xff]
    %v624 = vld [vmem:[#allocation7 + $0x78] sm:$0xff]
    %v625 = vld [vmem:[#allocation7 + $0x80] sm:$0xff]
    %v626 = vld [vmem:[#allocation7 + $0x88] sm:$0xff]
    %v627 = vld [vmem:[#allocation7 + $0x90] sm:$0xff]
    %v628 = vld [vmem:[#allocation7 + $0x98] sm:$0xff]
    %v629 = vld [vmem:[#allocation7 + $0xa0] sm:$0xff]
    %v630 = vld [vmem:[#allocation7 + $0xa8] sm:$0xff]
    %v631 = vld [vmem:[#allocation7 + $0xb0] sm:$0xff]
    %v632 = vld [vmem:[#allocation7 + $0xb8] sm:$0xff]
    %v633 = vld [vmem:[#allocation7 + $0xc0] sm:$0xff]
    %v634 = vld [vmem:[#allocation7 + $0xc8] sm:$0xff]
    %v635 = vld [vmem:[#allocation7 + $0xd0] sm:$0xff]
    %v636 = vld [vmem:[#allocation7 + $0xd8] sm:$0xff]
    %v637 = vld [vmem:[#allocation7 + $0xe0] sm:$0xff]
    %v638 = vld [vmem:[#allocation7 + $0xe8] sm:$0xff]
    %v639 = vld [vmem:[#allocation7 + $0xf0] sm:$0xff]
    %v640 = vld [vmem:[#allocation7 + $0xf8] sm:$0xff]
    %v641 = vld [vmem:[#allocation7 + $0x100] sm:$0xff]
    %v642 = vld [vmem:[#allocation7 + $0x108] sm:$0xff]
    %v643 = vld [vmem:[#allocation7 + $0x110] sm:$0xff]
    %v644 = vld [vmem:[#allocation7 + $0x118] sm:$0xff]
    %v645 = vld [vmem:[#allocation7 + $0x120] sm:$0xff]
    %v646 = vld [vmem:[#allocation7 + $0x128] sm:$0xff]
    %v647 = vld [vmem:[#allocation7 + $0x130] sm:$0xff]
    %v648 = vld [vmem:[#allocation7 + $0x138] sm:$0xff]
    %v649 = vld [vmem:[#allocation7 + $0x140] sm:$0xff]
    %v650 = vld [vmem:[#allocation7 + $0x148] sm:$0xff]
    %v651 = vld [vmem:[#allocation7 + $0x150] sm:$0xff]
    %v652 = vld [vmem:[#allocation7 + $0x158] sm:$0xff]
    %v653 = vld [vmem:[#allocation7 + $0x160] sm:$0xff]
    %v654 = vld [vmem:[#allocation7 + $0x168] sm:$0xff]
    %v655 = vld [vmem:[#allocation7 + $0x170] sm:$0xff]
    %v656 = vld [vmem:[#allocation7 + $0x178] sm:$0xff]
    %v657 = vld [vmem:[#allocation7 + $0x180] sm:$0xff]
    %v658 = vld [vmem:[#allocation7 + $0x188] sm:$0xff]
    %v659 = vld [vmem:[#allocation7 + $0x190] sm:$0xff]
    %v660 = vld [vmem:[#allocation7 + $0x198] sm:$0xff]
    %v661 = vld [vmem:[#allocation7 + $0x1a0] sm:$0xff]
    %v662 = vld [vmem:[#allocation7 + $0x1a8] sm:$0xff]
    %v663 = vld [vmem:[#allocation7 + $0x1b0] sm:$0xff]
    %v664 = vld [vmem:[#allocation7 + $0x1b8] sm:$0xff]
    %v665 = vld [vmem:[#allocation7 + $0x1c0] sm:$0xff]
    %v666 = vld [vmem:[#allocation7 + $0x1c8] sm:$0xff]
    %v667 = vld [vmem:[#allocation7 + $0x1d0] sm:$0xff]
    %v668 = vld [vmem:[#allocation7 + $0x1d8] sm:$0xff]
    %v669 = vld [vmem:[#allocation7 + $0x1e0] sm:$0xff]
    %v670 = vld [vmem:[#allocation7 + $0x1e8] sm:$0xff]
    %v671 = vld [vmem:[#allocation7 + $0x1f0] sm:$0xff]
    %v672 = vld [vmem:[#allocation7 + $0x1f8] sm:$0xff]
    %v673 = vld [vmem:[#allocation2] sm:$0xff]
    %v674 = vld [vmem:[#allocation2 + $0x8] sm:$0xff]
    %v675 = vld [vmem:[#allocation2 + $0x10] sm:$0xff]
    %v676 = vld [vmem:[#allocation2 + $0x18] sm:$0xff]
    %677 = vmatprep.subr.mxu0 %v610
    %678 = vmatpush1.msra.mxu0 %v609
    %679 = vmatprep.subr.mxu0 %v614
    %680 = vmatpush1.msra.mxu0 %v613
    %681 = vmatprep.subr.mxu0 %v618
    %682 = vmatpush1.msra.mxu0 %v617
    %683 = vmatprep.subr.mxu0 %v622
    %684 = vmatpush1.msra.mxu0 %v621
    %685 = vmatprep.subr.mxu0 %v626
    %686 = vmatpush1.msra.mxu0 %v625
    %687 = vmatprep.subr.mxu0 %v630
    %688 = vmatpush1.msra.mxu0 %v629
    %689 = vmatprep.subr.mxu0 %v634
    %690 = vmatpush1.msra.mxu0 %v633
    %691 = vmatprep.subr.mxu0 %v638
    %692 = vmatpush1.msra.mxu0 %v637
    %693 = vmatprep.subr.mxu0 %v642
    %694 = vmatpush1.msra.mxu0 %v641
    %695 = vmatprep.subr.mxu0 %v646
    %696 = vmatpush1.msra.mxu0 %v645
    %697 = vmatprep.subr.mxu0 %v650
    %698 = vmatpush1.msra.mxu0 %v649
    %699 = vmatprep.subr.mxu0 %v654
    %700 = vmatpush1.msra.mxu0 %v653
    %701 = vmatprep.subr.mxu0 %v658
    %702 = vmatpush1.msra.mxu0 %v657
    %703 = vmatprep.subr.mxu0 %v662
    %704 = vmatpush1.msra.mxu0 %v661
    %705 = vmatprep.subr.mxu0 %v666
    %706 = vmatpush1.msra.mxu0 %v665
    %707 = vmatprep.subr.mxu0 %v670
    %708 = vmatpush1.msra.mxu0 %v669
    %709 = vmatprep.subr.mxu0 0.0
    %710 = vmatpush1.msra.mxu0 0.0
    %711 = vmatprep.subr.mxu0 0.0
    %712 = vmatpush1.msra.mxu0 0.0
    %713 = vmatprep.subr.mxu0 0.0
    %714 = vmatpush1.msra.mxu0 0.0
    %715 = vmatprep.subr.mxu0 0.0
    %716 = vmatpush1.msra.mxu0 0.0
    %717 = vmatprep.subr.mxu0 0.0
    %718 = vmatpush1.msra.mxu0 0.0
    %719 = vmatprep.subr.mxu0 0.0
    %720 = vmatpush1.msra.mxu0 0.0
    %721 = vmatprep.subr.mxu0 0.0
    %722 = vmatpush1.msra.mxu0 0.0
    %723 = vmatprep.subr.mxu0 0.0
    %724 = vmatpush1.msra.mxu0 0.0
    %725 = vmatprep.subr.mxu0 0.0
    %726 = vmatpush1.msra.mxu0 0.0
    %727 = vmatprep.subr.mxu0 0.0
    %728 = vmatpush1.msra.mxu0 0.0
    %729 = vmatprep.subr.mxu0 0.0
    %730 = vmatpush1.msra.mxu0 0.0
    %731 = vmatprep.subr.mxu0 0.0
    %732 = vmatpush1.msra.mxu0 0.0
    %733 = vmatprep.subr.mxu0 0.0
    %734 = vmatpush1.msra.mxu0 0.0
    %735 = vmatprep.subr.mxu0 0.0
    %736 = vmatpush1.msra.mxu0 0.0
    %737 = vmatprep.subr.mxu0 0.0
    %738 = vmatpush1.msra.mxu0 0.0
    %739 = vmatprep.subr.mxu0 0.0
    %740 = vmatpush1.msra.mxu0 0.0
    %741 = vmatprep.mubr.f32.mxu0 0.0
    %742 = vmatmul.mubr.f32.gmra.mrb[0].mxu0 %v607
    %v743 = vpop.f32.mrb[0].mxu0
    %v744 = vadd.f32 0.0, %v743
    %v745 = vpop.f32.mrb[0].mxu0
    %v746 = vadd.f32 0.0, %v745
    %747 = vdwg.mxu0
    %748 = vmatprep.subr.mxu0 %v612
    %749 = vmatpush1.msra.mxu0 %v611
    %750 = vmatprep.subr.mxu0 %v616
    %751 = vmatpush1.msra.mxu0 %v615
    %752 = vmatprep.subr.mxu0 %v620
    %753 = vmatpush1.msra.mxu0 %v619
    %754 = vmatprep.subr.mxu0 %v624
    %755 = vmatpush1.msra.mxu0 %v623
    %756 = vmatprep.subr.mxu0 %v628
    %757 = vmatpush1.msra.mxu0 %v627
    %758 = vmatprep.subr.mxu0 %v632
    %759 = vmatpush1.msra.mxu0 %v631
    %760 = vmatprep.subr.mxu0 %v636
    %761 = vmatpush1.msra.mxu0 %v635
    %762 = vmatprep.subr.mxu0 %v640
    %763 = vmatpush1.msra.mxu0 %v639
    %764 = vmatprep.subr.mxu0 %v644
    %765 = vmatpush1.msra.mxu0 %v643
    %766 = vmatprep.subr.mxu0 %v648
    %767 = vmatpush1.msra.mxu0 %v647
    %768 = vmatprep.subr.mxu0 %v652
    %769 = vmatpush1.msra.mxu0 %v651
    %770 = vmatprep.subr.mxu0 %v656
    %771 = vmatpush1.msra.mxu0 %v655
    %772 = vmatprep.subr.mxu0 %v660
    %773 = vmatpush1.msra.mxu0 %v659
    %774 = vmatprep.subr.mxu0 %v664
    %775 = vmatpush1.msra.mxu0 %v663
    %776 = vmatprep.subr.mxu0 %v668
    %777 = vmatpush1.msra.mxu0 %v667
    %778 = vmatprep.subr.mxu0 %v672
    %779 = vmatpush1.msra.mxu0 %v671
    %780 = vmatprep.subr.mxu0 0.0
    %781 = vmatpush1.msra.mxu0 0.0
    %782 = vmatprep.subr.mxu0 0.0
    %783 = vmatpush1.msra.mxu0 0.0
    %784 = vmatprep.subr.mxu0 0.0
    %785 = vmatpush1.msra.mxu0 0.0
    %786 = vmatprep.subr.mxu0 0.0
    %787 = vmatpush1.msra.mxu0 0.0
    %788 = vmatprep.subr.mxu0 0.0
    %789 = vmatpush1.msra.mxu0 0.0
    %790 = vmatprep.subr.mxu0 0.0
    %791 = vmatpush1.msra.mxu0 0.0
    %792 = vmatprep.subr.mxu0 0.0
    %793 = vmatpush1.msra.mxu0 0.0
    %794 = vmatprep.subr.mxu0 0.0
    %795 = vmatpush1.msra.mxu0 0.0
    %796 = vmatprep.subr.mxu0 0.0
    %797 = vmatpush1.msra.mxu0 0.0
    %798 = vmatprep.subr.mxu0 0.0
    %799 = vmatpush1.msra.mxu0 0.0
    %800 = vmatprep.subr.mxu0 0.0
    %801 = vmatpush1.msra.mxu0 0.0
    %802 = vmatprep.subr.mxu0 0.0
    %803 = vmatpush1.msra.mxu0 0.0
    %804 = vmatprep.subr.mxu0 0.0
    %805 = vmatpush1.msra.mxu0 0.0
    %806 = vmatprep.subr.mxu0 0.0
    %807 = vmatpush1.msra.mxu0 0.0
    %808 = vmatprep.subr.mxu0 0.0
    %809 = vmatpush1.msra.mxu0 0.0
    %810 = vmatprep.subr.mxu0 0.0
    %811 = vmatpush1.msra.mxu0 0.0
    %812 = vmatprep.mubr.f32.mxu0 0.0
    %813 = vmatmul.mubr.f32.gmra.mrb[0].mxu0 %v607
    %v814 = vpop.f32.mrb[0].mxu0
    %v815 = vadd.f32 0.0, %v814
    %v816 = vpop.f32.mrb[0].mxu0
    %v817 = vadd.f32 0.0, %v816
    %818 = vdwg.mxu0
    %v819 = vadd.f32 %v673, %v744
    %v820 = vadd.f32 %v674, %v746
    %v821 = vadd.f32 %v675, %v815
    %v822 = vadd.f32 %v676, %v817
    %v823 = vxor.u32 %v819, 2147483648
    %v824 = vmul.f32 %v823, 1.442695
    %v825 = vpow.pop %v824
    %v826 = vadd.f32 %v825, 1.0
    %v827 = vrcp.pop %v826
    %v828 = vmul.f32 1.0, %v827
    %v829 = vxor.u32 %v820, 2147483648
    %v830 = vmul.f32 %v829, 1.442695
    %v831 = vpow.pop %v830
    %v832 = vadd.f32 %v831, 1.0
    %v833 = vrcp.pop %v832
    %v834 = vmul.f32 1.0, %v833
    %v835 = vtanh.pop %v821
    %v836 = vxor.u32 %v822, 2147483648
    %v837 = vmul.f32 %v836, 1.442695
    %v838 = vpow.pop %v837
    %v839 = vadd.f32 %v838, 1.0
    %v840 = vrcp.pop %v839
    %v841 = vmul.f32 1.0, %v840
    %v842 = vmul.f32 %v834, %v608
    %v843 = vmul.f32 %v828, %v835
    %v844 = vadd.f32 %v842, %v843
    %v845 = vtanh.pop %v844
    %v846 = vmul.f32 %v841, %v845
    %847 = vst [vmem:[#allocation3] sm:$0xff] %v846
    %v848 = vld [vmem:[#allocation2 + $0x20] sm:$0xff]
    %v849 = vld [vmem:[#allocation2 + $0x28] sm:$0xff]
    %v850 = vld [vmem:[#allocation2 + $0x30] sm:$0xff]
    %v851 = vld [vmem:[#allocation2 + $0x38] sm:$0xff]
    %852 = vmatprep.subr.mxu0 %v610
    %853 = vmatpush1.msra.mxu0 %v609
    %854 = vmatprep.subr.mxu0 %v614
    %855 = vmatpush1.msra.mxu0 %v613
    %856 = vmatprep.subr.mxu0 %v618
    %857 = vmatpush1.msra.mxu0 %v617
    %858 = vmatprep.subr.mxu0 %v622
    %859 = vmatpush1.msra.mxu0 %v621
    %860 = vmatprep.subr.mxu0 %v626
    %861 = vmatpush1.msra.mxu0 %v625
    %862 = vmatprep.subr.mxu0 %v630
    %863 = vmatpush1.msra.mxu0 %v629
    %864 = vmatprep.subr.mxu0 %v634
    %865 = vmatpush1.msra.mxu0 %v633
    %866 = vmatprep.subr.mxu0 %v638
    %867 = vmatpush1.msra.mxu0 %v637
    %868 = vmatprep.subr.mxu0 %v642
    %869 = vmatpush1.msra.mxu0 %v641
    %870 = vmatprep.subr.mxu0 %v646
    %871 = vmatpush1.msra.mxu0 %v645
    %872 = vmatprep.subr.mxu0 %v650
    %873 = vmatpush1.msra.mxu0 %v649
    %874 = vmatprep.subr.mxu0 %v654
    %875 = vmatpush1.msra.mxu0 %v653
    %876 = vmatprep.subr.mxu0 %v658
    %877 = vmatpush1.msra.mxu0 %v657
    %878 = vmatprep.subr.mxu0 %v662
    %879 = vmatpush1.msra.mxu0 %v661
    %880 = vmatprep.subr.mxu0 %v666
    %881 = vmatpush1.msra.mxu0 %v665
    %882 = vmatprep.subr.mxu0 %v670
    %883 = vmatpush1.msra.mxu0 %v669
    %884 = vmatprep.subr.mxu0 0.0
    %885 = vmatpush1.msra.mxu0 0.0
    %886 = vmatprep.subr.mxu0 0.0
    %887 = vmatpush1.msra.mxu0 0.0
    %888 = vmatprep.subr.mxu0 0.0
    %889 = vmatpush1.msra.mxu0 0.0
    %890 = vmatprep.subr.mxu0 0.0
    %891 = vmatpush1.msra.mxu0 0.0
    %892 = vmatprep.subr.mxu0 0.0
    %893 = vmatpush1.msra.mxu0 0.0
    %894 = vmatprep.subr.mxu0 0.0
    %895 = vmatpush1.msra.mxu0 0.0
    %896 = vmatprep.subr.mxu0 0.0
    %897 = vmatpush1.msra.mxu0 0.0
    %898 = vmatprep.subr.mxu0 0.0
    %899 = vmatpush1.msra.mxu0 0.0
    %900 = vmatprep.subr.mxu0 0.0
    %901 = vmatpush1.msra.mxu0 0.0
    %902 = vmatprep.subr.mxu0 0.0
    %903 = vmatpush1.msra.mxu0 0.0
    %904 = vmatprep.subr.mxu0 0.0
    %905 = vmatpush1.msra.mxu0 0.0
    %906 = vmatprep.subr.mxu0 0.0
    %907 = vmatpush1.msra.mxu0 0.0
    %908 = vmatprep.subr.mxu0 0.0
    %909 = vmatpush1.msra.mxu0 0.0
    %910 = vmatprep.subr.mxu0 0.0
    %911 = vmatpush1.msra.mxu0 0.0
    %912 = vmatprep.subr.mxu0 0.0
    %913 = vmatpush1.msra.mxu0 0.0
    %914 = vmatprep.subr.mxu0 0.0
    %915 = vmatpush1.msra.mxu0 0.0
    %916 = vmatprep.mubr.f32.mxu0 0.0
    %917 = vmatmul.mubr.f32.gmra.mrb[0].mxu0 %v846
    %v918 = vpop.f32.mrb[0].mxu0
    %v919 = vadd.f32 0.0, %v918
    %v920 = vpop.f32.mrb[0].mxu0
    %v921 = vadd.f32 0.0, %v920
    %922 = vdwg.mxu0
    %923 = vmatprep.subr.mxu0 %v612
    %924 = vmatpush1.msra.mxu0 %v611
    %925 = vmatprep.subr.mxu0 %v616
    %926 = vmatpush1.msra.mxu0 %v615
    %927 = vmatprep.subr.mxu0 %v620
    %928 = vmatpush1.msra.mxu0 %v619
    %929 = vmatprep.subr.mxu0 %v624
    %930 = vmatpush1.msra.mxu0 %v623
    %931 = vmatprep.subr.mxu0 %v628
    %932 = vmatpush1.msra.mxu0 %v627
    %933 = vmatprep.subr.mxu0 %v632
    %934 = vmatpush1.msra.mxu0 %v631
    %935 = vmatprep.subr.mxu0 %v636
    %936 = vmatpush1.msra.mxu0 %v635
    %937 = vmatprep.subr.mxu0 %v640
    %938 = vmatpush1.msra.mxu0 %v639
    %939 = vmatprep.subr.mxu0 %v644
    %940 = vmatpush1.msra.mxu0 %v643
    %941 = vmatprep.subr.mxu0 %v648
    %942 = vmatpush1.msra.mxu0 %v647
    %943 = vmatprep.subr.mxu0 %v652
    %944 = vmatpush1.msra.mxu0 %v651
    %945 = vmatprep.subr.mxu0 %v656
    %946 = vmatpush1.msra.mxu0 %v655
    %947 = vmatprep.subr.mxu0 %v660
    %948 = vmatpush1.msra.mxu0 %v659
    %949 = vmatprep.subr.mxu0 %v664
    %950 = vmatpush1.msra.mxu0 %v663
    %951 = vmatprep.subr.mxu0 %v668
    %952 = vmatpush1.msra.mxu0 %v667
    %953 = vmatprep.subr.mxu0 %v672
    %954 = vmatpush1.msra.mxu0 %v671
    %955 = vmatprep.subr.mxu0 0.0
    %956 = vmatpush1.msra.mxu0 0.0
    %957 = vmatprep.subr.mxu0 0.0
    %958 = vmatpush1.msra.mxu0 0.0
    %959 = vmatprep.subr.mxu0 0.0
    %960 = vmatpush1.msra.mxu0 0.0
    %961 = vmatprep.subr.mxu0 0.0
    %962 = vmatpush1.msra.mxu0 0.0
    %963 = vmatprep.subr.mxu0 0.0
    %964 = vmatpush1.msra.mxu0 0.0
    %965 = vmatprep.subr.mxu0 0.0
    %966 = vmatpush1.msra.mxu0 0.0
    %967 = vmatprep.subr.mxu0 0.0
    %968 = vmatpush1.msra.mxu0 0.0
    %969 = vmatprep.subr.mxu0 0.0
    %970 = vmatpush1.msra.mxu0 0.0
    %971 = vmatprep.subr.mxu0 0.0
    %972 = vmatpush1.msra.mxu0 0.0
    %973 = vmatprep.subr.mxu0 0.0
    %974 = vmatpush1.msra.mxu0 0.0
    %975 = vmatprep.subr.mxu0 0.0
    %976 = vmatpush1.msra.mxu0 0.0
    %977 = vmatprep.subr.mxu0 0.0
    %978 = vmatpush1.msra.mxu0 0.0
    %979 = vmatprep.subr.mxu0 0.0
    %980 = vmatpush1.msra.mxu0 0.0
    %981 = vmatprep.subr.mxu0 0.0
    %982 = vmatpush1.msra.mxu0 0.0
    %983 = vmatprep.subr.mxu0 0.0
    %984 = vmatpush1.msra.mxu0 0.0
    %985 = vmatprep.subr.mxu0 0.0
    %986 = vmatpush1.msra.mxu0 0.0
    %987 = vmatprep.mubr.f32.mxu0 0.0
    %988 = vmatmul.mubr.f32.gmra.mrb[0].mxu0 %v846
    %v989 = vpop.f32.mrb[0].mxu0
    %v990 = vadd.f32 0.0, %v989
    %v991 = vpop.f32.mrb[0].mxu0
    %v992 = vadd.f32 0.0, %v991
    %993 = vdwg.mxu0
    %v994 = vadd.f32 %v848, %v919
    %v995 = vadd.f32 %v849, %v921
    %v996 = vadd.f32 %v850, %v990
    %v997 = vadd.f32 %v851, %v992
    %v998 = vxor.u32 %v994, 2147483648
    %v999 = vmul.f32 %v998, 1.442695
    %v1000 = vpow.pop %v999
    %v1001 = vadd.f32 %v1000, 1.0
    %v1002 = vrcp.pop %v1001
    %v1003 = vmul.f32 1.0, %v1002
    %v1004 = vxor.u32 %v995, 2147483648
    %v1005 = vmul.f32 %v1004, 1.442695
    %v1006 = vpow.pop %v1005
    %v1007 = vadd.f32 %v1006, 1.0
    %v1008 = vrcp.pop %v1007
    %v1009 = vmul.f32 1.0, %v1008
    %v1010 = vtanh.pop %v996
    %v1011 = vxor.u32 %v997, 2147483648
    %v1012 = vmul.f32 %v1011, 1.442695
    %v1013 = vpow.pop %v1012
    %v1014 = vadd.f32 %v1013, 1.0
    %v1015 = vrcp.pop %v1014
    %v1016 = vmul.f32 1.0, %v1015
    %v1017 = vmul.f32 %v1009, %v844
    %v1018 = vmul.f32 %v1003, %v1010
    %v1019 = vadd.f32 %v1017, %v1018
    %v1020 = vtanh.pop %v1019
    %v1021 = vmul.f32 %v1016, %v1020
    %1022 = vst [vmem:[#allocation3 + $0x8] sm:$0xff] %v1021
    %v1023 = vld [vmem:[#allocation2 + $0x40] sm:$0xff]
    %v1024 = vld [vmem:[#allocation2 + $0x48] sm:$0xff]
    %v1025 = vld [vmem:[#allocation2 + $0x50] sm:$0xff]
    %v1026 = vld [vmem:[#allocation2 + $0x58] sm:$0xff]
    %1027 = vmatprep.subr.mxu0 %v610
    %1028 = vmatpush1.msra.mxu0 %v609
    %1029 = vmatprep.subr.mxu0 %v614
    %1030 = vmatpush1.msra.mxu0 %v613
    %1031 = vmatprep.subr.mxu0 %v618
    %1032 = vmatpush1.msra.mxu0 %v617
    %1033 = vmatprep.subr.mxu0 %v622
    %1034 = vmatpush1.msra.mxu0 %v621
    %1035 = vmatprep.subr.mxu0 %v626
    %1036 = vmatpush1.msra.mxu0 %v625
    %1037 = vmatprep.subr.mxu0 %v630
    %1038 = vmatpush1.msra.mxu0 %v629
    %1039 = vmatprep.subr.mxu0 %v634
    %1040 = vmatpush1.msra.mxu0 %v633
    %1041 = vmatprep.subr.mxu0 %v638
    %1042 = vmatpush1.msra.mxu0 %v637
    %1043 = vmatprep.subr.mxu0 %v642
    %1044 = vmatpush1.msra.mxu0 %v641
    %1045 = vmatprep.subr.mxu0 %v646
    %1046 = vmatpush1.msra.mxu0 %v645
    %1047 = vmatprep.subr.mxu0 %v650
    %1048 = vmatpush1.msra.mxu0 %v649
    %1049 = vmatprep.subr.mxu0 %v654
    %1050 = vmatpush1.msra.mxu0 %v653
    %1051 = vmatprep.subr.mxu0 %v658
    %1052 = vmatpush1.msra.mxu0 %v657
    %1053 = vmatprep.subr.mxu0 %v662
    %1054 = vmatpush1.msra.mxu0 %v661
    %1055 = vmatprep.subr.mxu0 %v666
    %1056 = vmatpush1.msra.mxu0 %v665
    %1057 = vmatprep.subr.mxu0 %v670
    %1058 = vmatpush1.msra.mxu0 %v669
    %1059 = vmatprep.subr.mxu0 0.0
    %1060 = vmatpush1.msra.mxu0 0.0
    %1061 = vmatprep.subr.mxu0 0.0
    %1062 = vmatpush1.msra.mxu0 0.0
    %1063 = vmatprep.subr.mxu0 0.0
    %1064 = vmatpush1.msra.mxu0 0.0
    %1065 = vmatprep.subr.mxu0 0.0
    %1066 = vmatpush1.msra.mxu0 0.0
    %1067 = vmatprep.subr.mxu0 0.0
    %1068 = vmatpush1.msra.mxu0 0.0
    %1069 = vmatprep.subr.mxu0 0.0
    %1070 = vmatpush1.msra.mxu0 0.0
    %1071 = vmatprep.subr.mxu0 0.0
    %1072 = vmatpush1.msra.mxu0 0.0
    %1073 = vmatprep.subr.mxu0 0.0
    %1074 = vmatpush1.msra.mxu0 0.0
    %1075 = vmatprep.subr.mxu0 0.0
    %1076 = vmatpush1.msra.mxu0 0.0
    %1077 = vmatprep.subr.mxu0 0.0
    %1078 = vmatpush1.msra.mxu0 0.0
    %1079 = vmatprep.subr.mxu0 0.0
    %1080 = vmatpush1.msra.mxu0 0.0
    %1081 = vmatprep.subr.mxu0 0.0
    %1082 = vmatpush1.msra.mxu0 0.0
    %1083 = vmatprep.subr.mxu0 0.0
    %1084 = vmatpush1.msra.mxu0 0.0
    %1085 = vmatprep.subr.mxu0 0.0
    %1086 = vmatpush1.msra.mxu0 0.0
    %1087 = vmatprep.subr.mxu0 0.0
    %1088 = vmatpush1.msra.mxu0 0.0
    %1089 = vmatprep.subr.mxu0 0.0
    %1090 = vmatpush1.msra.mxu0 0.0
    %1091 = vmatprep.mubr.f32.mxu0 0.0
    %1092 = vmatmul.mubr.f32.gmra.mrb[0].mxu0 %v1021
    %v1093 = vpop.f32.mrb[0].mxu0
    %v1094 = vadd.f32 0.0, %v1093
    %v1095 = vpop.f32.mrb[0].mxu0
    %v1096 = vadd.f32 0.0, %v1095
    %1097 = vdwg.mxu0
    %1098 = vmatprep.subr.mxu0 %v612
    %1099 = vmatpush1.msra.mxu0 %v611
    %1100 = vmatprep.subr.mxu0 %v616
    %1101 = vmatpush1.msra.mxu0 %v615
    %1102 = vmatprep.subr.mxu0 %v620
    %1103 = vmatpush1.msra.mxu0 %v619
    %1104 = vmatprep.subr.mxu0 %v624
    %1105 = vmatpush1.msra.mxu0 %v623
    %1106 = vmatprep.subr.mxu0 %v628
    %1107 = vmatpush1.msra.mxu0 %v627
    %1108 = vmatprep.subr.mxu0 %v632
    %1109 = vmatpush1.msra.mxu0 %v631
    %1110 = vmatprep.subr.mxu0 %v636
    %1111 = vmatpush1.msra.mxu0 %v635
    %1112 = vmatprep.subr.mxu0 %v640
    %1113 = vmatpush1.msra.mxu0 %v639
    %1114 = vmatprep.subr.mxu0 %v644
    %1115 = vmatpush1.msra.mxu0 %v643
    %1116 = vmatprep.subr.mxu0 %v648
    %1117 = vmatpush1.msra.mxu0 %v647
    %1118 = vmatprep.subr.mxu0 %v652
    %1119 = vmatpush1.msra.mxu0 %v651
    %1120 = vmatprep.subr.mxu0 %v656
    %1121 = vmatpush1.msra.mxu0 %v655
    %1122 = vmatprep.subr.mxu0 %v660
    %1123 = vmatpush1.msra.mxu0 %v659
    %1124 = vmatprep.subr.mxu0 %v664
    %1125 = vmatpush1.msra.mxu0 %v663
    %1126 = vmatprep.subr.mxu0 %v668
    %1127 = vmatpush1.msra.mxu0 %v667
    %1128 = vmatprep.subr.mxu0 %v672
    %1129 = vmatpush1.msra.mxu0 %v671
    %1130 = vmatprep.subr.mxu0 0.0
    %1131 = vmatpush1.msra.mxu0 0.0
    %1132 = vmatprep.subr.mxu0 0.0
    %1133 = vmatpush1.msra.mxu0 0.0
    %1134 = vmatprep.subr.mxu0 0.0
    %1135 = vmatpush1.msra.mxu0 0.0
    %1136 = vmatprep.subr.mxu0 0.0
    %1137 = vmatpush1.msra.mxu0 0.0
    %1138 = vmatprep.subr.mxu0 0.0
    %1139 = vmatpush1.msra.mxu0 0.0
    %1140 = vmatprep.subr.mxu0 0.0
    %1141 = vmatpush1.msra.mxu0 0.0
    %1142 = vmatprep.subr.mxu0 0.0
    %1143 = vmatpush1.msra.mxu0 0.0
    %1144 = vmatprep.subr.mxu0 0.0
    %1145 = vmatpush1.msra.mxu0 0.0
    %1146 = vmatprep.subr.mxu0 0.0
    %1147 = vmatpush1.msra.mxu0 0.0
    %1148 = vmatprep.subr.mxu0 0.0
    %1149 = vmatpush1.msra.mxu0 0.0
    %1150 = vmatprep.subr.mxu0 0.0
    %1151 = vmatpush1.msra.mxu0 0.0
    %1152 = vmatprep.subr.mxu0 0.0
    %1153 = vmatpush1.msra.mxu0 0.0
    %1154 = vmatprep.subr.mxu0 0.0
    %1155 = vmatpush1.msra.mxu0 0.0
    %1156 = vmatprep.subr.mxu0 0.0
    %1157 = vmatpush1.msra.mxu0 0.0
    %1158 = vmatprep.subr.mxu0 0.0
    %1159 = vmatpush1.msra.mxu0 0.0
    %1160 = vmatprep.subr.mxu0 0.0
    %1161 = vmatpush1.msra.mxu0 0.0
    %1162 = vmatprep.mubr.f32.mxu0 0.0
    %1163 = vmatmul.mubr.f32.gmra.mrb[0].mxu0 %v1021
    %v1164 = vpop.f32.mrb[0].mxu0
    %v1165 = vadd.f32 0.0, %v1164
    %v1166 = vpop.f32.mrb[0].mxu0
    %v1167 = vadd.f32 0.0, %v1166
    %1168 = vdwg.mxu0
    %v1169 = vadd.f32 %v1023, %v1094
    %v1170 = vadd.f32 %v1024, %v1096
    %v1171 = vadd.f32 %v1025, %v1165
    %v1172 = vadd.f32 %v1026, %v1167
    %v1173 = vxor.u32 %v1169, 2147483648
    %v1174 = vmul.f32 %v1173, 1.442695
    %v1175 = vpow.pop %v1174
    %v1176 = vadd.f32 %v1175, 1.0
    %v1177 = vrcp.pop %v1176
    %v1178 = vmul.f32 1.0, %v1177
    %v1179 = vxor.u32 %v1170, 2147483648
    %v1180 = vmul.f32 %v1179, 1.442695
    %v1181 = vpow.pop %v1180
    %v1182 = vadd.f32 %v1181, 1.0
    %v1183 = vrcp.pop %v1182
    %v1184 = vmul.f32 1.0, %v1183
    %v1185 = vtanh.pop %v1171
    %v1186 = vxor.u32 %v1172, 2147483648
    %v1187 = vmul.f32 %v1186, 1.442695
    %v1188 = vpow.pop %v1187
    %v1189 = vadd.f32 %v1188, 1.0
    %v1190 = vrcp.pop %v1189
    %v1191 = vmul.f32 1.0, %v1190
    %v1192 = vmul.f32 %v1184, %v1019
    %v1193 = vmul.f32 %v1178, %v1185
    %v1194 = vadd.f32 %v1192, %v1193
    %v1195 = vtanh.pop %v1194
    %v1196 = vmul.f32 %v1191, %v1195
    %1197 = vst [vmem:[#allocation3 + $0x10] sm:$0xff] %v1196
    %v1198 = vld [vmem:[#allocation2 + $0x60] sm:$0xff]
    %v1199 = vld [vmem:[#allocation2 + $0x68] sm:$0xff]
    %v1200 = vld [vmem:[#allocation2 + $0x70] sm:$0xff]
    %v1201 = vld [vmem:[#allocation2 + $0x78] sm:$0xff]
    %1202 = vmatprep.subr.mxu0 %v610
    %1203 = vmatpush1.msra.mxu0 %v609
    %1204 = vmatprep.subr.mxu0 %v614
    %1205 = vmatpush1.msra.mxu0 %v613
    %1206 = vmatprep.subr.mxu0 %v618
    %1207 = vmatpush1.msra.mxu0 %v617
    %1208 = vmatprep.subr.mxu0 %v622
    %1209 = vmatpush1.msra.mxu0 %v621
    %1210 = vmatprep.subr.mxu0 %v626
    %1211 = vmatpush1.msra.mxu0 %v625
    %1212 = vmatprep.subr.mxu0 %v630
    %1213 = vmatpush1.msra.mxu0 %v629
    %1214 = vmatprep.subr.mxu0 %v634
    %1215 = vmatpush1.msra.mxu0 %v633
    %1216 = vmatprep.subr.mxu0 %v638
    %1217 = vmatpush1.msra.mxu0 %v637
    %1218 = vmatprep.subr.mxu0 %v642
    %1219 = vmatpush1.msra.mxu0 %v641
    %1220 = vmatprep.subr.mxu0 %v646
    %1221 = vmatpush1.msra.mxu0 %v645
    %1222 = vmatprep.subr.mxu0 %v650
    %1223 = vmatpush1.msra.mxu0 %v649
    %1224 = vmatprep.subr.mxu0 %v654
    %1225 = vmatpush1.msra.mxu0 %v653
    %1226 = vmatprep.subr.mxu0 %v658
    %1227 = vmatpush1.msra.mxu0 %v657
    %1228 = vmatprep.subr.mxu0 %v662
    %1229 = vmatpush1.msra.mxu0 %v661
    %1230 = vmatprep.subr.mxu0 %v666
    %1231 = vmatpush1.msra.mxu0 %v665
    %1232 = vmatprep.subr.mxu0 %v670
    %1233 = vmatpush1.msra.mxu0 %v669
    %1234 = vmatprep.subr.mxu0 0.0
    %1235 = vmatpush1.msra.mxu0 0.0
    %1236 = vmatprep.subr.mxu0 0.0
    %1237 = vmatpush1.msra.mxu0 0.0
    %1238 = vmatprep.subr.mxu0 0.0
    %1239 = vmatpush1.msra.mxu0 0.0
    %1240 = vmatprep.subr.mxu0 0.0
    %1241 = vmatpush1.msra.mxu0 0.0
    %1242 = vmatprep.subr.mxu0 0.0
    %1243 = vmatpush1.msra.mxu0 0.0
    %1244 = vmatprep.subr.mxu0 0.0
    %1245 = vmatpush1.msra.mxu0 0.0
    %1246 = vmatprep.subr.mxu0 0.0
    %1247 = vmatpush1.msra.mxu0 0.0
    %1248 = vmatprep.subr.mxu0 0.0
    %1249 = vmatpush1.msra.mxu0 0.0
    %1250 = vmatprep.subr.mxu0 0.0
    %1251 = vmatpush1.msra.mxu0 0.0
    %1252 = vmatprep.subr.mxu0 0.0
    %1253 = vmatpush1.msra.mxu0 0.0
    %1254 = vmatprep.subr.mxu0 0.0
    %1255 = vmatpush1.msra.mxu0 0.0
    %1256 = vmatprep.subr.mxu0 0.0
    %1257 = vmatpush1.msra.mxu0 0.0
    %1258 = vmatprep.subr.mxu0 0.0
    %1259 = vmatpush1.msra.mxu0 0.0
    %1260 = vmatprep.subr.mxu0 0.0
    %1261 = vmatpush1.msra.mxu0 0.0
    %1262 = vmatprep.subr.mxu0 0.0
    %1263 = vmatpush1.msra.mxu0 0.0
    %1264 = vmatprep.subr.mxu0 0.0
    %1265 = vmatpush1.msra.mxu0 0.0
    %1266 = vmatprep.mubr.f32.mxu0 0.0
    %1267 = vmatmul.mubr.f32.gmra.mrb[0].mxu0 %v1196
    %v1268 = vpop.f32.mrb[0].mxu0
    %v1269 = vadd.f32 0.0, %v1268
    %v1270 = vpop.f32.mrb[0].mxu0
    %v1271 = vadd.f32 0.0, %v1270
    %1272 = vdwg.mxu0
    %1273 = vmatprep.subr.mxu0 %v612
    %1274 = vmatpush1.msra.mxu0 %v611
    %1275 = vmatprep.subr.mxu0 %v616
    %1276 = vmatpush1.msra.mxu0 %v615
    %1277 = vmatprep.subr.mxu0 %v620
    %1278 = vmatpush1.msra.mxu0 %v619
    %1279 = vmatprep.subr.mxu0 %v624
    %1280 = vmatpush1.msra.mxu0 %v623
    %1281 = vmatprep.subr.mxu0 %v628
    %1282 = vmatpush1.msra.mxu0 %v627
    %1283 = vmatprep.subr.mxu0 %v632
    %1284 = vmatpush1.msra.mxu0 %v631
    %1285 = vmatprep.subr.mxu0 %v636
    %1286 = vmatpush1.msra.mxu0 %v635
    %1287 = vmatprep.subr.mxu0 %v640
    %1288 = vmatpush1.msra.mxu0 %v639
    %1289 = vmatprep.subr.mxu0 %v644
    %1290 = vmatpush1.msra.mxu0 %v643
    %1291 = vmatprep.subr.mxu0 %v648
    %1292 = vmatpush1.msra.mxu0 %v647
    %1293 = vmatprep.subr.mxu0 %v652
    %1294 = vmatpush1.msra.mxu0 %v651
    %1295 = vmatprep.subr.mxu0 %v656
    %1296 = vmatpush1.msra.mxu0 %v655
    %1297 = vmatprep.subr.mxu0 %v660
    %1298 = vmatpush1.msra.mxu0 %v659
    %1299 = vmatprep.subr.mxu0 %v664
    %1300 = vmatpush1.msra.mxu0 %v663
    %1301 = vmatprep.subr.mxu0 %v668
    %1302 = vmatpush1.msra.mxu0 %v667
    %1303 = vmatprep.subr.mxu0 %v672
    %1304 = vmatpush1.msra.mxu0 %v671
    %1305 = vmatprep.subr.mxu0 0.0
    %1306 = vmatpush1.msra.mxu0 0.0
    %1307 = vmatprep.subr.mxu0 0.0
    %1308 = vmatpush1.msra.mxu0 0.0
    %1309 = vmatprep.subr.mxu0 0.0
    %1310 = vmatpush1.msra.mxu0 0.0
    %1311 = vmatprep.subr.mxu0 0.0
    %1312 = vmatpush1.msra.mxu0 0.0
    %1313 = vmatprep.subr.mxu0 0.0
    %1314 = vmatpush1.msra.mxu0 0.0
    %1315 = vmatprep.subr.mxu0 0.0
    %1316 = vmatpush1.msra.mxu0 0.0
    %1317 = vmatprep.subr.mxu0 0.0
    %1318 = vmatpush1.msra.mxu0 0.0
    %1319 = vmatprep.subr.mxu0 0.0
    %1320 = vmatpush1.msra.mxu0 0.0
    %1321 = vmatprep.subr.mxu0 0.0
    %1322 = vmatpush1.msra.mxu0 0.0
    %1323 = vmatprep.subr.mxu0 0.0
    %1324 = vmatpush1.msra.mxu0 0.0
    %1325 = vmatprep.subr.mxu0 0.0
    %1326 = vmatpush1.msra.mxu0 0.0
    %1327 = vmatprep.subr.mxu0 0.0
    %1328 = vmatpush1.msra.mxu0 0.0
    %1329 = vmatprep.subr.mxu0 0.0
    %1330 = vmatpush1.msra.mxu0 0.0
    %1331 = vmatprep.subr.mxu0 0.0
    %1332 = vmatpush1.msra.mxu0 0.0
    %1333 = vmatprep.subr.mxu0 0.0
    %1334 = vmatpush1.msra.mxu0 0.0
    %1335 = vmatprep.subr.mxu0 0.0
    %1336 = vmatpush1.msra.mxu0 0.0
    %1337 = vmatprep.mubr.f32.mxu0 0.0
    %1338 = vmatmul.mubr.f32.gmra.mrb[0].mxu0 %v1196
    %v1339 = vpop.f32.mrb[0].mxu0
    %v1340 = vadd.f32 0.0, %v1339
    %v1341 = vpop.f32.mrb[0].mxu0
    %v1342 = vadd.f32 0.0, %v1341
    %1343 = vdwg.mxu0
    %v1344 = vadd.f32 %v1198, %v1269
    %v1345 = vadd.f32 %v1199, %v1271
    %v1346 = vadd.f32 %v1200, %v1340
    %v1347 = vadd.f32 %v1201, %v1342
    %v1348 = vxor.u32 %v1344, 2147483648
    %v1349 = vmul.f32 %v1348, 1.442695
    %v1350 = vpow.pop %v1349
    %v1351 = vadd.f32 %v1350, 1.0
    %v1352 = vrcp.pop %v1351
    %v1353 = vmul.f32 1.0, %v1352
    %v1354 = vxor.u32 %v1345, 2147483648
    %v1355 = vmul.f32 %v1354, 1.442695
    %v1356 = vpow.pop %v1355
    %v1357 = vadd.f32 %v1356, 1.0
    %v1358 = vrcp.pop %v1357
    %v1359 = vmul.f32 1.0, %v1358
    %v1360 = vtanh.pop %v1346
    %v1361 = vxor.u32 %v1347, 2147483648
    %v1362 = vmul.f32 %v1361, 1.442695
    %v1363 = vpow.pop %v1362
    %v1364 = vadd.f32 %v1363, 1.0
    %v1365 = vrcp.pop %v1364
    %v1366 = vmul.f32 1.0, %v1365
    %v1367 = vmul.f32 %v1359, %v1194
    %v1368 = vmul.f32 %v1353, %v1360
    %v1369 = vadd.f32 %v1367, %v1368
    %v1370 = vtanh.pop %v1369
    %v1371 = vmul.f32 %v1366, %v1370
    %1372 = vst [vmem:[#allocation3 + $0x18] sm:$0xff] %v1371
    %v1373 = vld [vmem:[#allocation2 + $0x80] sm:$0xff]
    %v1374 = vld [vmem:[#allocation2 + $0x88] sm:$0xff]
    %v1375 = vld [vmem:[#allocation2 + $0x90] sm:$0xff]
    %v1376 = vld [vmem:[#allocation2 + $0x98] sm:$0xff]
    %1377 = vmatprep.subr.mxu0 %v610
    %1378 = vmatpush1.msra.mxu0 %v609
    %1379 = vmatprep.subr.mxu0 %v614
    %1380 = vmatpush1.msra.mxu0 %v613
    %1381 = vmatprep.subr.mxu0 %v618
    %1382 = vmatpush1.msra.mxu0 %v617
    %1383 = vmatprep.subr.mxu0 %v622
    %1384 = vmatpush1.msra.mxu0 %v621
    %1385 = vmatprep.subr.mxu0 %v626
    %1386 = vmatpush1.msra.mxu0 %v625
    %1387 = vmatprep.subr.mxu0 %v630
    %1388 = vmatpush1.msra.mxu0 %v629
    %1389 = vmatprep.subr.mxu0 %v634
    %1390 = vmatpush1.msra.mxu0 %v633
    %1391 = vmatprep.subr.mxu0 %v638
    %1392 = vmatpush1.msra.mxu0 %v637
    %1393 = vmatprep.subr.mxu0 %v642
    %1394 = vmatpush1.msra.mxu0 %v641
    %1395 = vmatprep.subr.mxu0 %v646
    %1396 = vmatpush1.msra.mxu0 %v645
    %1397 = vmatprep.subr.mxu0 %v650
    %1398 = vmatpush1.msra.mxu0 %v649
    %1399 = vmatprep.subr.mxu0 %v654
    %1400 = vmatpush1.msra.mxu0 %v653
    %1401 = vmatprep.subr.mxu0 %v658
    %1402 = vmatpush1.msra.mxu0 %v657
    %1403 = vmatprep.subr.mxu0 %v662
    %1404 = vmatpush1.msra.mxu0 %v661
    %1405 = vmatprep.subr.mxu0 %v666
    %1406 = vmatpush1.msra.mxu0 %v665
    %1407 = vmatprep.subr.mxu0 %v670
    %1408 = vmatpush1.msra.mxu0 %v669
    %1409 = vmatprep.subr.mxu0 0.0
    %1410 = vmatpush1.msra.mxu0 0.0
    %1411 = vmatprep.subr.mxu0 0.0
    %1412 = vmatpush1.msra.mxu0 0.0
    %1413 = vmatprep.subr.mxu0 0.0
    %1414 = vmatpush1.msra.mxu0 0.0
    %1415 = vmatprep.subr.mxu0 0.0
    %1416 = vmatpush1.msra.mxu0 0.0
    %1417 = vmatprep.subr.mxu0 0.0
    %1418 = vmatpush1.msra.mxu0 0.0
    %1419 = vmatprep.subr.mxu0 0.0
    %1420 = vmatpush1.msra.mxu0 0.0
    %1421 = vmatprep.subr.mxu0 0.0
    %1422 = vmatpush1.msra.mxu0 0.0
    %1423 = vmatprep.subr.mxu0 0.0
    %1424 = vmatpush1.msra.mxu0 0.0
    %1425 = vmatprep.subr.mxu0 0.0
    %1426 = vmatpush1.msra.mxu0 0.0
    %1427 = vmatprep.subr.mxu0 0.0
    %1428 = vmatpush1.msra.mxu0 0.0
    %1429 = vmatprep.subr.mxu0 0.0
    %1430 = vmatpush1.msra.mxu0 0.0
    %1431 = vmatprep.subr.mxu0 0.0
    %1432 = vmatpush1.msra.mxu0 0.0
    %1433 = vmatprep.subr.mxu0 0.0
    %1434 = vmatpush1.msra.mxu0 0.0
    %1435 = vmatprep.subr.mxu0 0.0
    %1436 = vmatpush1.msra.mxu0 0.0
    %1437 = vmatprep.subr.mxu0 0.0
    %1438 = vmatpush1.msra.mxu0 0.0
    %1439 = vmatprep.subr.mxu0 0.0
    %1440 = vmatpush1.msra.mxu0 0.0
    %1441 = vmatprep.mubr.f32.mxu0 0.0
    %1442 = vmatmul.mubr.f32.gmra.mrb[0].mxu0 %v1371
    %v1443 = vpop.f32.mrb[0].mxu0
    %v1444 = vadd.f32 0.0, %v1443
    %v1445 = vpop.f32.mrb[0].mxu0
    %v1446 = vadd.f32 0.0, %v1445
    %1447 = vdwg.mxu0
    %1448 = vmatprep.subr.mxu0 %v612
    %1449 = vmatpush1.msra.mxu0 %v611
    %1450 = vmatprep.subr.mxu0 %v616
    %1451 = vmatpush1.msra.mxu0 %v615
    %1452 = vmatprep.subr.mxu0 %v620
    %1453 = vmatpush1.msra.mxu0 %v619
    %1454 = vmatprep.subr.mxu0 %v624
    %1455 = vmatpush1.msra.mxu0 %v623
    %1456 = vmatprep.subr.mxu0 %v628
    %1457 = vmatpush1.msra.mxu0 %v627
    %1458 = vmatprep.subr.mxu0 %v632
    %1459 = vmatpush1.msra.mxu0 %v631
    %1460 = vmatprep.subr.mxu0 %v636
    %1461 = vmatpush1.msra.mxu0 %v635
    %1462 = vmatprep.subr.mxu0 %v640
    %1463 = vmatpush1.msra.mxu0 %v639
    %1464 = vmatprep.subr.mxu0 %v644
    %1465 = vmatpush1.msra.mxu0 %v643
    %1466 = vmatprep.subr.mxu0 %v648
    %1467 = vmatpush1.msra.mxu0 %v647
    %1468 = vmatprep.subr.mxu0 %v652
    %1469 = vmatpush1.msra.mxu0 %v651
    %1470 = vmatprep.subr.mxu0 %v656
    %1471 = vmatpush1.msra.mxu0 %v655
    %1472 = vmatprep.subr.mxu0 %v660
    %1473 = vmatpush1.msra.mxu0 %v659
    %1474 = vmatprep.subr.mxu0 %v664
    %1475 = vmatpush1.msra.mxu0 %v663
    %1476 = vmatprep.subr.mxu0 %v668
    %1477 = vmatpush1.msra.mxu0 %v667
    %1478 = vmatprep.subr.mxu0 %v672
    %1479 = vmatpush1.msra.mxu0 %v671
    %1480 = vmatprep.subr.mxu0 0.0
    %1481 = vmatpush1.msra.mxu0 0.0
    %1482 = vmatprep.subr.mxu0 0.0
    %1483 = vmatpush1.msra.mxu0 0.0
    %1484 = vmatprep.subr.mxu0 0.0
    %1485 = vmatpush1.msra.mxu0 0.0
    %1486 = vmatprep.subr.mxu0 0.0
    %1487 = vmatpush1.msra.mxu0 0.0
    %1488 = vmatprep.subr.mxu0 0.0
    %1489 = vmatpush1.msra.mxu0 0.0
    %1490 = vmatprep.subr.mxu0 0.0
    %1491 = vmatpush1.msra.mxu0 0.0
    %1492 = vmatprep.subr.mxu0 0.0
    %1493 = vmatpush1.msra.mxu0 0.0
    %1494 = vmatprep.subr.mxu0 0.0
    %1495 = vmatpush1.msra.mxu0 0.0
    %1496 = vmatprep.subr.mxu0 0.0
    %1497 = vmatpush1.msra.mxu0 0.0
    %1498 = vmatprep.subr.mxu0 0.0
    %1499 = vmatpush1.msra.mxu0 0.0
    %1500 = vmatprep.subr.mxu0 0.0
    %1501 = vmatpush1.msra.mxu0 0.0
    %1502 = vmatprep.subr.mxu0 0.0
    %1503 = vmatpush1.msra.mxu0 0.0
    %1504 = vmatprep.subr.mxu0 0.0
    %1505 = vmatpush1.msra.mxu0 0.0
    %1506 = vmatprep.subr.mxu0 0.0
    %1507 = vmatpush1.msra.mxu0 0.0
    %1508 = vmatprep.subr.mxu0 0.0
    %1509 = vmatpush1.msra.mxu0 0.0
    %1510 = vmatprep.subr.mxu0 0.0
    %1511 = vmatpush1.msra.mxu0 0.0
    %1512 = vmatprep.mubr.f32.mxu0 0.0
    %1513 = vmatmul.mubr.f32.gmra.mrb[0].mxu0 %v1371
    %v1514 = vpop.f32.mrb[0].mxu0
    %v1515 = vadd.f32 0.0, %v1514
    %v1516 = vpop.f32.mrb[0].mxu0
    %v1517 = vadd.f32 0.0, %v1516
    %1518 = vdwg.mxu0
    %v1519 = vadd.f32 %v1373, %v1444
    %v1520 = vadd.f32 %v1374, %v1446
    %v1521 = vadd.f32 %v1375, %v1515
    %v1522 = vadd.f32 %v1376, %v1517
    %v1523 = vxor.u32 %v1519, 2147483648
    %v1524 = vmul.f32 %v1523, 1.442695
    %v1525 = vpow.pop %v1524
    %v1526 = vadd.f32 %v1525, 1.0
    %v1527 = vrcp.pop %v1526
    %v1528 = vmul.f32 1.0, %v1527
    %v1529 = vxor.u32 %v1520, 2147483648
    %v1530 = vmul.f32 %v1529, 1.442695
    %v1531 = vpow.pop %v1530
    %v1532 = vadd.f32 %v1531, 1.0
    %v1533 = vrcp.pop %v1532
    %v1534 = vmul.f32 1.0, %v1533
    %v1535 = vtanh.pop %v1521
    %v1536 = vxor.u32 %v1522, 2147483648
    %v1537 = vmul.f32 %v1536, 1.442695
    %v1538 = vpow.pop %v1537
    %v1539 = vadd.f32 %v1538, 1.0
    %v1540 = vrcp.pop %v1539
    %v1541 = vmul.f32 1.0, %v1540
    %v1542 = vmul.f32 %v1534, %v1369
    %v1543 = vmul.f32 %v1528, %v1535
    %v1544 = vadd.f32 %v1542, %v1543
    %v1545 = vtanh.pop %v1544
    %v1546 = vmul.f32 %v1541, %v1545
    %1547 = vst [vmem:[#allocation3 + $0x20] sm:$0xff] %v1546
    %v1548 = vld [vmem:[#allocation2 + $0xa0] sm:$0xff]
    %v1549 = vld [vmem:[#allocation2 + $0xa8] sm:$0xff]
    %v1550 = vld [vmem:[#allocation2 + $0xb0] sm:$0xff]
    %v1551 = vld [vmem:[#allocation2 + $0xb8] sm:$0xff]
    %1552 = vmatprep.subr.mxu0 %v610
    %1553 = vmatpush1.msra.mxu0 %v609
    %1554 = vmatprep.subr.mxu0 %v614
    %1555 = vmatpush1.msra.mxu0 %v613
    %1556 = vmatprep.subr.mxu0 %v618
    %1557 = vmatpush1.msra.mxu0 %v617
    %1558 = vmatprep.subr.mxu0 %v622
    %1559 = vmatpush1.msra.mxu0 %v621
    %1560 = vmatprep.subr.mxu0 %v626
    %1561 = vmatpush1.msra.mxu0 %v625
    %1562 = vmatprep.subr.mxu0 %v630
    %1563 = vmatpush1.msra.mxu0 %v629
    %1564 = vmatprep.subr.mxu0 %v634
    %1565 = vmatpush1.msra.mxu0 %v633
    %1566 = vmatprep.subr.mxu0 %v638
    %1567 = vmatpush1.msra.mxu0 %v637
    %1568 = vmatprep.subr.mxu0 %v642
    %1569 = vmatpush1.msra.mxu0 %v641
    %1570 = vmatprep.subr.mxu0 %v646
    %1571 = vmatpush1.msra.mxu0 %v645
    %1572 = vmatprep.subr.mxu0 %v650
    %1573 = vmatpush1.msra.mxu0 %v649
    %1574 = vmatprep.subr.mxu0 %v654
    %1575 = vmatpush1.msra.mxu0 %v653
    %1576 = vmatprep.subr.mxu0 %v658
    %1577 = vmatpush1.msra.mxu0 %v657
    %1578 = vmatprep.subr.mxu0 %v662
    %1579 = vmatpush1.msra.mxu0 %v661
    %1580 = vmatprep.subr.mxu0 %v666
    %1581 = vmatpush1.msra.mxu0 %v665
    %1582 = vmatprep.subr.mxu0 %v670
    %1583 = vmatpush1.msra.mxu0 %v669
    %1584 = vmatprep.subr.mxu0 0.0
    %1585 = vmatpush1.msra.mxu0 0.0
    %1586 = vmatprep.subr.mxu0 0.0
    %1587 = vmatpush1.msra.mxu0 0.0
    %1588 = vmatprep.subr.mxu0 0.0
    %1589 = vmatpush1.msra.mxu0 0.0
    %1590 = vmatprep.subr.mxu0 0.0
    %1591 = vmatpush1.msra.mxu0 0.0
    %1592 = vmatprep.subr.mxu0 0.0
    %1593 = vmatpush1.msra.mxu0 0.0
    %1594 = vmatprep.subr.mxu0 0.0
    %1595 = vmatpush1.msra.mxu0 0.0
    %1596 = vmatprep.subr.mxu0 0.0
    %1597 = vmatpush1.msra.mxu0 0.0
    %1598 = vmatprep.subr.mxu0 0.0
    %1599 = vmatpush1.msra.mxu0 0.0
    %1600 = vmatprep.subr.mxu0 0.0
    %1601 = vmatpush1.msra.mxu0 0.0
    %1602 = vmatprep.subr.mxu0 0.0
    %1603 = vmatpush1.msra.mxu0 0.0
    %1604 = vmatprep.subr.mxu0 0.0
    %1605 = vmatpush1.msra.mxu0 0.0
    %1606 = vmatprep.subr.mxu0 0.0
    %1607 = vmatpush1.msra.mxu0 0.0
    %1608 = vmatprep.subr.mxu0 0.0
    %1609 = vmatpush1.msra.mxu0 0.0
    %1610 = vmatprep.subr.mxu0 0.0
    %1611 = vmatpush1.msra.mxu0 0.0
    %1612 = vmatprep.subr.mxu0 0.0
    %1613 = vmatpush1.msra.mxu0 0.0
    %1614 = vmatprep.subr.mxu0 0.0
    %1615 = vmatpush1.msra.mxu0 0.0
    %1616 = vmatprep.mubr.f32.mxu0 0.0
    %1617 = vmatmul.mubr.f32.gmra.mrb[0].mxu0 %v1546
    %v1618 = vpop.f32.mrb[0].mxu0
    %v1619 = vadd.f32 0.0, %v1618
    %v1620 = vpop.f32.mrb[0].mxu0
    %v1621 = vadd.f32 0.0, %v1620
    %1622 = vdwg.mxu0
    %1623 = vmatprep.subr.mxu0 %v612
    %1624 = vmatpush1.msra.mxu0 %v611
    %1625 = vmatprep.subr.mxu0 %v616
    %1626 = vmatpush1.msra.mxu0 %v615
    %1627 = vmatprep.subr.mxu0 %v620
    %1628 = vmatpush1.msra.mxu0 %v619
    %1629 = vmatprep.subr.mxu0 %v624
    %1630 = vmatpush1.msra.mxu0 %v623
    %1631 = vmatprep.subr.mxu0 %v628
    %1632 = vmatpush1.msra.mxu0 %v627
    %1633 = vmatprep.subr.mxu0 %v632
    %1634 = vmatpush1.msra.mxu0 %v631
    %1635 = vmatprep.subr.mxu0 %v636
    %1636 = vmatpush1.msra.mxu0 %v635
    %1637 = vmatprep.subr.mxu0 %v640
    %1638 = vmatpush1.msra.mxu0 %v639
    %1639 = vmatprep.subr.mxu0 %v644
    %1640 = vmatpush1.msra.mxu0 %v643
    %1641 = vmatprep.subr.mxu0 %v648
    %1642 = vmatpush1.msra.mxu0 %v647
    %1643 = vmatprep.subr.mxu0 %v652
    %1644 = vmatpush1.msra.mxu0 %v651
    %1645 = vmatprep.subr.mxu0 %v656
    %1646 = vmatpush1.msra.mxu0 %v655
    %1647 = vmatprep.subr.mxu0 %v660
    %1648 = vmatpush1.msra.mxu0 %v659
    %1649 = vmatprep.subr.mxu0 %v664
    %1650 = vmatpush1.msra.mxu0 %v663
    %1651 = vmatprep.subr.mxu0 %v668
    %1652 = vmatpush1.msra.mxu0 %v667
    %1653 = vmatprep.subr.mxu0 %v672
    %1654 = vmatpush1.msra.mxu0 %v671
    %1655 = vmatprep.subr.mxu0 0.0
    %1656 = vmatpush1.msra.mxu0 0.0
    %1657 = vmatprep.subr.mxu0 0.0
    %1658 = vmatpush1.msra.mxu0 0.0
    %1659 = vmatprep.subr.mxu0 0.0
    %1660 = vmatpush1.msra.mxu0 0.0
    %1661 = vmatprep.subr.mxu0 0.0
    %1662 = vmatpush1.msra.mxu0 0.0
    %1663 = vmatprep.subr.mxu0 0.0
    %1664 = vmatpush1.msra.mxu0 0.0
    %1665 = vmatprep.subr.mxu0 0.0
    %1666 = vmatpush1.msra.mxu0 0.0
    %1667 = vmatprep.subr.mxu0 0.0
    %1668 = vmatpush1.msra.mxu0 0.0
    %1669 = vmatprep.subr.mxu0 0.0
    %1670 = vmatpush1.msra.mxu0 0.0
    %1671 = vmatprep.subr.mxu0 0.0
    %1672 = vmatpush1.msra.mxu0 0.0
    %1673 = vmatprep.subr.mxu0 0.0
    %1674 = vmatpush1.msra.mxu0 0.0
    %1675 = vmatprep.subr.mxu0 0.0
    %1676 = vmatpush1.msra.mxu0 0.0
    %1677 = vmatprep.subr.mxu0 0.0
    %1678 = vmatpush1.msra.mxu0 0.0
    %1679 = vmatprep.subr.mxu0 0.0
    %1680 = vmatpush1.msra.mxu0 0.0
    %1681 = vmatprep.subr.mxu0 0.0
    %1682 = vmatpush1.msra.mxu0 0.0
    %1683 = vmatprep.subr.mxu0 0.0
    %1684 = vmatpush1.msra.mxu0 0.0
    %1685 = vmatprep.subr.mxu0 0.0
    %1686 = vmatpush1.msra.mxu0 0.0
    %1687 = vmatprep.mubr.f32.mxu0 0.0
    %1688 = vmatmul.mubr.f32.gmra.mrb[0].mxu0 %v1546
    %v1689 = vpop.f32.mrb[0].mxu0
    %v1690 = vadd.f32 0.0, %v1689
    %v1691 = vpop.f32.mrb[0].mxu0
    %v1692 = vadd.f32 0.0, %v1691
    %1693 = vdwg.mxu0
    %v1694 = vadd.f32 %v1548, %v1619
    %v1695 = vadd.f32 %v1549, %v1621
    %v1696 = vadd.f32 %v1550, %v1690
    %v1697 = vadd.f32 %v1551, %v1692
    %v1698 = vxor.u32 %v1694, 2147483648
    %v1699 = vmul.f32 %v1698, 1.442695
    %v1700 = vpow.pop %v1699
    %v1701 = vadd.f32 %v1700, 1.0
    %v1702 = vrcp.pop %v1701
    %v1703 = vmul.f32 1.0, %v1702
    %v1704 = vxor.u32 %v1695, 2147483648
    %v1705 = vmul.f32 %v1704, 1.442695
    %v1706 = vpow.pop %v1705
    %v1707 = vadd.f32 %v1706, 1.0
    %v1708 = vrcp.pop %v1707
    %v1709 = vmul.f32 1.0, %v1708
    %v1710 = vtanh.pop %v1696
    %v1711 = vxor.u32 %v1697, 2147483648
    %v1712 = vmul.f32 %v1711, 1.442695
    %v1713 = vpow.pop %v1712
    %v1714 = vadd.f32 %v1713, 1.0
    %v1715 = vrcp.pop %v1714
    %v1716 = vmul.f32 1.0, %v1715
    %v1717 = vmul.f32 %v1709, %v1544
    %v1718 = vmul.f32 %v1703, %v1710
    %v1719 = vadd.f32 %v1717, %v1718
    %v1720 = vtanh.pop %v1719
    %v1721 = vmul.f32 %v1716, %v1720
    %1722 = vst [vmem:[#allocation3 + $0x28] sm:$0xff] %v1721
    %v1723 = vld [vmem:[#allocation2 + $0xc0] sm:$0xff]
    %v1724 = vld [vmem:[#allocation2 + $0xc8] sm:$0xff]
    %v1725 = vld [vmem:[#allocation2 + $0xd0] sm:$0xff]
    %v1726 = vld [vmem:[#allocation2 + $0xd8] sm:$0xff]
    %1727 = vmatprep.subr.mxu0 %v610
    %1728 = vmatpush1.msra.mxu0 %v609
    %1729 = vmatprep.subr.mxu0 %v614
    %1730 = vmatpush1.msra.mxu0 %v613
    %1731 = vmatprep.subr.mxu0 %v618
    %1732 = vmatpush1.msra.mxu0 %v617
    %1733 = vmatprep.subr.mxu0 %v622
    %1734 = vmatpush1.msra.mxu0 %v621
    %1735 = vmatprep.subr.mxu0 %v626
    %1736 = vmatpush1.msra.mxu0 %v625
    %1737 = vmatprep.subr.mxu0 %v630
    %1738 = vmatpush1.msra.mxu0 %v629
    %1739 = vmatprep.subr.mxu0 %v634
    %1740 = vmatpush1.msra.mxu0 %v633
    %1741 = vmatprep.subr.mxu0 %v638
    %1742 = vmatpush1.msra.mxu0 %v637
    %1743 = vmatprep.subr.mxu0 %v642
    %1744 = vmatpush1.msra.mxu0 %v641
    %1745 = vmatprep.subr.mxu0 %v646
    %1746 = vmatpush1.msra.mxu0 %v645
    %1747 = vmatprep.subr.mxu0 %v650
    %1748 = vmatpush1.msra.mxu0 %v649
    %1749 = vmatprep.subr.mxu0 %v654
    %1750 = vmatpush1.msra.mxu0 %v653
    %1751 = vmatprep.subr.mxu0 %v658
    %1752 = vmatpush1.msra.mxu0 %v657
    %1753 = vmatprep.subr.mxu0 %v662
    %1754 = vmatpush1.msra.mxu0 %v661
    %1755 = vmatprep.subr.mxu0 %v666
    %1756 = vmatpush1.msra.mxu0 %v665
    %1757 = vmatprep.subr.mxu0 %v670
    %1758 = vmatpush1.msra.mxu0 %v669
    %1759 = vmatprep.subr.mxu0 0.0
    %1760 = vmatpush1.msra.mxu0 0.0
    %1761 = vmatprep.subr.mxu0 0.0
    %1762 = vmatpush1.msra.mxu0 0.0
    %1763 = vmatprep.subr.mxu0 0.0
    %1764 = vmatpush1.msra.mxu0 0.0
    %1765 = vmatprep.subr.mxu0 0.0
    %1766 = vmatpush1.msra.mxu0 0.0
    %1767 = vmatprep.subr.mxu0 0.0
    %1768 = vmatpush1.msra.mxu0 0.0
    %1769 = vmatprep.subr.mxu0 0.0
    %1770 = vmatpush1.msra.mxu0 0.0
    %1771 = vmatprep.subr.mxu0 0.0
    %1772 = vmatpush1.msra.mxu0 0.0
    %1773 = vmatprep.subr.mxu0 0.0
    %1774 = vmatpush1.msra.mxu0 0.0
    %1775 = vmatprep.subr.mxu0 0.0
    %1776 = vmatpush1.msra.mxu0 0.0
    %1777 = vmatprep.subr.mxu0 0.0
    %1778 = vmatpush1.msra.mxu0 0.0
    %1779 = vmatprep.subr.mxu0 0.0
    %1780 = vmatpush1.msra.mxu0 0.0
    %1781 = vmatprep.subr.mxu0 0.0
    %1782 = vmatpush1.msra.mxu0 0.0
    %1783 = vmatprep.subr.mxu0 0.0
    %1784 = vmatpush1.msra.mxu0 0.0
    %1785 = vmatprep.subr.mxu0 0.0
    %1786 = vmatpush1.msra.mxu0 0.0
    %1787 = vmatprep.subr.mxu0 0.0
    %1788 = vmatpush1.msra.mxu0 0.0
    %1789 = vmatprep.subr.mxu0 0.0
    %1790 = vmatpush1.msra.mxu0 0.0
    %1791 = vmatprep.mubr.f32.mxu0 0.0
    %1792 = vmatmul.mubr.f32.gmra.mrb[0].mxu0 %v1721
    %v1793 = vpop.f32.mrb[0].mxu0
    %v1794 = vadd.f32 0.0, %v1793
    %v1795 = vpop.f32.mrb[0].mxu0
    %v1796 = vadd.f32 0.0, %v1795
    %1797 = vdwg.mxu0
    %1798 = vmatprep.subr.mxu0 %v612
    %1799 = vmatpush1.msra.mxu0 %v611
    %1800 = vmatprep.subr.mxu0 %v616
    %1801 = vmatpush1.msra.mxu0 %v615
    %1802 = vmatprep.subr.mxu0 %v620
    %1803 = vmatpush1.msra.mxu0 %v619
    %1804 = vmatprep.subr.mxu0 %v624
    %1805 = vmatpush1.msra.mxu0 %v623
    %1806 = vmatprep.subr.mxu0 %v628
    %1807 = vmatpush1.msra.mxu0 %v627
    %1808 = vmatprep.subr.mxu0 %v632
    %1809 = vmatpush1.msra.mxu0 %v631
    %1810 = vmatprep.subr.mxu0 %v636
    %1811 = vmatpush1.msra.mxu0 %v635
    %1812 = vmatprep.subr.mxu0 %v640
    %1813 = vmatpush1.msra.mxu0 %v639
    %1814 = vmatprep.subr.mxu0 %v644
    %1815 = vmatpush1.msra.mxu0 %v643
    %1816 = vmatprep.subr.mxu0 %v648
    %1817 = vmatpush1.msra.mxu0 %v647
    %1818 = vmatprep.subr.mxu0 %v652
    %1819 = vmatpush1.msra.mxu0 %v651
    %1820 = vmatprep.subr.mxu0 %v656
    %1821 = vmatpush1.msra.mxu0 %v655
    %1822 = vmatprep.subr.mxu0 %v660
    %1823 = vmatpush1.msra.mxu0 %v659
    %1824 = vmatprep.subr.mxu0 %v664
    %1825 = vmatpush1.msra.mxu0 %v663
    %1826 = vmatprep.subr.mxu0 %v668
    %1827 = vmatpush1.msra.mxu0 %v667
    %1828 = vmatprep.subr.mxu0 %v672
    %1829 = vmatpush1.msra.mxu0 %v671
    %1830 = vmatprep.subr.mxu0 0.0
    %1831 = vmatpush1.msra.mxu0 0.0
    %1832 = vmatprep.subr.mxu0 0.0
    %1833 = vmatpush1.msra.mxu0 0.0
    %1834 = vmatprep.subr.mxu0 0.0
    %1835 = vmatpush1.msra.mxu0 0.0
    %1836 = vmatprep.subr.mxu0 0.0
    %1837 = vmatpush1.msra.mxu0 0.0
    %1838 = vmatprep.subr.mxu0 0.0
    %1839 = vmatpush1.msra.mxu0 0.0
    %1840 = vmatprep.subr.mxu0 0.0
    %1841 = vmatpush1.msra.mxu0 0.0
    %1842 = vmatprep.subr.mxu0 0.0
    %1843 = vmatpush1.msra.mxu0 0.0
    %1844 = vmatprep.subr.mxu0 0.0
    %1845 = vmatpush1.msra.mxu0 0.0
    %1846 = vmatprep.subr.mxu0 0.0
    %1847 = vmatpush1.msra.mxu0 0.0
    %1848 = vmatprep.subr.mxu0 0.0
    %1849 = vmatpush1.msra.mxu0 0.0
    %1850 = vmatprep.subr.mxu0 0.0
    %1851 = vmatpush1.msra.mxu0 0.0
    %1852 = vmatprep.subr.mxu0 0.0
    %1853 = vmatpush1.msra.mxu0 0.0
    %1854 = vmatprep.subr.mxu0 0.0
    %1855 = vmatpush1.msra.mxu0 0.0
    %1856 = vmatprep.subr.mxu0 0.0
    %1857 = vmatpush1.msra.mxu0 0.0
    %1858 = vmatprep.subr.mxu0 0.0
    %1859 = vmatpush1.msra.mxu0 0.0
    %1860 = vmatprep.subr.mxu0 0.0
    %1861 = vmatpush1.msra.mxu0 0.0
    %1862 = vmatprep.mubr.f32.mxu0 0.0
    %1863 = vmatmul.mubr.f32.gmra.mrb[0].mxu0 %v1721
    %v1864 = vpop.f32.mrb[0].mxu0
    %v1865 = vadd.f32 0.0, %v1864
    %v1866 = vpop.f32.mrb[0].mxu0
    %v1867 = vadd.f32 0.0, %v1866
    %1868 = vdwg.mxu0
    %v1869 = vadd.f32 %v1723, %v1794
    %v1870 = vadd.f32 %v1724, %v1796
    %v1871 = vadd.f32 %v1725, %v1865
    %v1872 = vadd.f32 %v1726, %v1867
    %v1873 = vxor.u32 %v1869, 2147483648
    %v1874 = vmul.f32 %v1873, 1.442695
    %v1875 = vpow.pop %v1874
    %v1876 = vadd.f32 %v1875, 1.0
    %v1877 = vrcp.pop %v1876
    %v1878 = vmul.f32 1.0, %v1877
    %v1879 = vxor.u32 %v1870, 2147483648
    %v1880 = vmul.f32 %v1879, 1.442695
    %v1881 = vpow.pop %v1880
    %v1882 = vadd.f32 %v1881, 1.0
    %v1883 = vrcp.pop %v1882
    %v1884 = vmul.f32 1.0, %v1883
    %v1885 = vtanh.pop %v1871
    %v1886 = vxor.u32 %v1872, 2147483648
    %v1887 = vmul.f32 %v1886, 1.442695
    %v1888 = vpow.pop %v1887
    %v1889 = vadd.f32 %v1888, 1.0
    %v1890 = vrcp.pop %v1889
    %v1891 = vmul.f32 1.0, %v1890
    %v1892 = vmul.f32 %v1884, %v1719
    %v1893 = vmul.f32 %v1878, %v1885
    %v1894 = vadd.f32 %v1892, %v1893
    %v1895 = vtanh.pop %v1894
    %v1896 = vmul.f32 %v1891, %v1895
    %1897 = vst [vmem:[#allocation3 + $0x30] sm:$0xff] %v1896
    %v1898 = vld [vmem:[#allocation2 + $0xe0] sm:$0xff]
    %v1899 = vld [vmem:[#allocation2 + $0xe8] sm:$0xff]
    %v1900 = vld [vmem:[#allocation2 + $0xf0] sm:$0xff]
    %v1901 = vld [vmem:[#allocation2 + $0xf8] sm:$0xff]
    %1902 = vmatprep.subr.mxu0 %v610
    %1903 = vmatpush1.msra.mxu0 %v609
    %1904 = vmatprep.subr.mxu0 %v614
    %1905 = vmatpush1.msra.mxu0 %v613
    %1906 = vmatprep.subr.mxu0 %v618
    %1907 = vmatpush1.msra.mxu0 %v617
    %1908 = vmatprep.subr.mxu0 %v622
    %1909 = vmatpush1.msra.mxu0 %v621
    %1910 = vmatprep.subr.mxu0 %v626
    %1911 = vmatpush1.msra.mxu0 %v625
    %1912 = vmatprep.subr.mxu0 %v630
    %1913 = vmatpush1.msra.mxu0 %v629
    %1914 = vmatprep.subr.mxu0 %v634
    %1915 = vmatpush1.msra.mxu0 %v633
    %1916 = vmatprep.subr.mxu0 %v638
    %1917 = vmatpush1.msra.mxu0 %v637
    %1918 = vmatprep.subr.mxu0 %v642
    %1919 = vmatpush1.msra.mxu0 %v641
    %1920 = vmatprep.subr.mxu0 %v646
    %1921 = vmatpush1.msra.mxu0 %v645
    %1922 = vmatprep.subr.mxu0 %v650
    %1923 = vmatpush1.msra.mxu0 %v649
    %1924 = vmatprep.subr.mxu0 %v654
    %1925 = vmatpush1.msra.mxu0 %v653
    %1926 = vmatprep.subr.mxu0 %v658
    %1927 = vmatpush1.msra.mxu0 %v657
    %1928 = vmatprep.subr.mxu0 %v662
    %1929 = vmatpush1.msra.mxu0 %v661
    %1930 = vmatprep.subr.mxu0 %v666
    %1931 = vmatpush1.msra.mxu0 %v665
    %1932 = vmatprep.subr.mxu0 %v670
    %1933 = vmatpush1.msra.mxu0 %v669
    %1934 = vmatprep.subr.mxu0 0.0
    %1935 = vmatpush1.msra.mxu0 0.0
    %1936 = vmatprep.subr.mxu0 0.0
    %1937 = vmatpush1.msra.mxu0 0.0
    %1938 = vmatprep.subr.mxu0 0.0
    %1939 = vmatpush1.msra.mxu0 0.0
    %1940 = vmatprep.subr.mxu0 0.0
    %1941 = vmatpush1.msra.mxu0 0.0
    %1942 = vmatprep.subr.mxu0 0.0
    %1943 = vmatpush1.msra.mxu0 0.0
    %1944 = vmatprep.subr.mxu0 0.0
    %1945 = vmatpush1.msra.mxu0 0.0
    %1946 = vmatprep.subr.mxu0 0.0
    %1947 = vmatpush1.msra.mxu0 0.0
    %1948 = vmatprep.subr.mxu0 0.0
    %1949 = vmatpush1.msra.mxu0 0.0
    %1950 = vmatprep.subr.mxu0 0.0
    %1951 = vmatpush1.msra.mxu0 0.0
    %1952 = vmatprep.subr.mxu0 0.0
    %1953 = vmatpush1.msra.mxu0 0.0
    %1954 = vmatprep.subr.mxu0 0.0
    %1955 = vmatpush1.msra.mxu0 0.0
    %1956 = vmatprep.subr.mxu0 0.0
    %1957 = vmatpush1.msra.mxu0 0.0
    %1958 = vmatprep.subr.mxu0 0.0
    %1959 = vmatpush1.msra.mxu0 0.0
    %1960 = vmatprep.subr.mxu0 0.0
    %1961 = vmatpush1.msra.mxu0 0.0
    %1962 = vmatprep.subr.mxu0 0.0
    %1963 = vmatpush1.msra.mxu0 0.0
    %1964 = vmatprep.subr.mxu0 0.0
    %1965 = vmatpush1.msra.mxu0 0.0
    %1966 = vmatprep.mubr.f32.mxu0 0.0
    %1967 = vmatmul.mubr.f32.gmra.mrb[0].mxu0 %v1896
    %v1968 = vpop.f32.mrb[0].mxu0
    %v1969 = vadd.f32 0.0, %v1968
    %v1970 = vpop.f32.mrb[0].mxu0
    %v1971 = vadd.f32 0.0, %v1970
    %1972 = vdwg.mxu0
    %1973 = vmatprep.subr.mxu0 %v612
    %1974 = vmatpush1.msra.mxu0 %v611
    %1975 = vmatprep.subr.mxu0 %v616
    %1976 = vmatpush1.msra.mxu0 %v615
    %1977 = vmatprep.subr.mxu0 %v620
    %1978 = vmatpush1.msra.mxu0 %v619
    %1979 = vmatprep.subr.mxu0 %v624
    %1980 = vmatpush1.msra.mxu0 %v623
    %1981 = vmatprep.subr.mxu0 %v628
    %1982 = vmatpush1.msra.mxu0 %v627
    %1983 = vmatprep.subr.mxu0 %v632
    %1984 = vmatpush1.msra.mxu0 %v631
    %1985 = vmatprep.subr.mxu0 %v636
    %1986 = vmatpush1.msra.mxu0 %v635
    %1987 = vmatprep.subr.mxu0 %v640
    %1988 = vmatpush1.msra.mxu0 %v639
    %1989 = vmatprep.subr.mxu0 %v644
    %1990 = vmatpush1.msra.mxu0 %v643
    %1991 = vmatprep.subr.mxu0 %v648
    %1992 = vmatpush1.msra.mxu0 %v647
    %1993 = vmatprep.subr.mxu0 %v652
    %1994 = vmatpush1.msra.mxu0 %v651
    %1995 = vmatprep.subr.mxu0 %v656
    %1996 = vmatpush1.msra.mxu0 %v655
    %1997 = vmatprep.subr.mxu0 %v660
    %1998 = vmatpush1.msra.mxu0 %v659
    %1999 = vmatprep.subr.mxu0 %v664
    %2000 = vmatpush1.msra.mxu0 %v663
    %2001 = vmatprep.subr.mxu0 %v668
    %2002 = vmatpush1.msra.mxu0 %v667
    %2003 = vmatprep.subr.mxu0 %v672
    %2004 = vmatpush1.msra.mxu0 %v671
    %2005 = vmatprep.subr.mxu0 0.0
    %2006 = vmatpush1.msra.mxu0 0.0
    %2007 = vmatprep.subr.mxu0 0.0
    %2008 = vmatpush1.msra.mxu0 0.0
    %2009 = vmatprep.subr.mxu0 0.0
    %2010 = vmatpush1.msra.mxu0 0.0
    %2011 = vmatprep.subr.mxu0 0.0
    %2012 = vmatpush1.msra.mxu0 0.0
    %2013 = vmatprep.subr.mxu0 0.0
    %2014 = vmatpush1.msra.mxu0 0.0
    %2015 = vmatprep.subr.mxu0 0.0
    %2016 = vmatpush1.msra.mxu0 0.0
    %2017 = vmatprep.subr.mxu0 0.0
    %2018 = vmatpush1.msra.mxu0 0.0
    %2019 = vmatprep.subr.mxu0 0.0
    %2020 = vmatpush1.msra.mxu0 0.0
    %2021 = vmatprep.subr.mxu0 0.0
    %2022 = vmatpush1.msra.mxu0 0.0
    %2023 = vmatprep.subr.mxu0 0.0
    %2024 = vmatpush1.msra.mxu0 0.0
    %2025 = vmatprep.subr.mxu0 0.0
    %2026 = vmatpush1.msra.mxu0 0.0
    %2027 = vmatprep.subr.mxu0 0.0
    %2028 = vmatpush1.msra.mxu0 0.0
    %2029 = vmatprep.subr.mxu0 0.0
    %2030 = vmatpush1.msra.mxu0 0.0
    %2031 = vmatprep.subr.mxu0 0.0
    %2032 = vmatpush1.msra.mxu0 0.0
    %2033 = vmatprep.subr.mxu0 0.0
    %2034 = vmatpush1.msra.mxu0 0.0
    %2035 = vmatprep.subr.mxu0 0.0
    %2036 = vmatpush1.msra.mxu0 0.0
    %2037 = vmatprep.mubr.f32.mxu0 0.0
    %2038 = vmatmul.mubr.f32.gmra.mrb[0].mxu0 %v1896
    %v2039 = vpop.f32.mrb[0].mxu0
    %v2040 = vadd.f32 0.0, %v2039
    %v2041 = vpop.f32.mrb[0].mxu0
    %v2042 = vadd.f32 0.0, %v2041
    %2043 = vdwg.mxu0
    %v2044 = vadd.f32 %v1898, %v1969
    %v2045 = vadd.f32 %v1899, %v1971
    %v2046 = vadd.f32 %v1900, %v2040
    %v2047 = vadd.f32 %v1901, %v2042
    %v2048 = vxor.u32 %v2044, 2147483648
    %v2049 = vmul.f32 %v2048, 1.442695
    %v2050 = vpow.pop %v2049
    %v2051 = vadd.f32 %v2050, 1.0
    %v2052 = vrcp.pop %v2051
    %v2053 = vmul.f32 1.0, %v2052
    %v2054 = vxor.u32 %v2045, 2147483648
    %v2055 = vmul.f32 %v2054, 1.442695
    %v2056 = vpow.pop %v2055
    %v2057 = vadd.f32 %v2056, 1.0
    %v2058 = vrcp.pop %v2057
    %v2059 = vmul.f32 1.0, %v2058
    %v2060 = vtanh.pop %v2046
    %v2061 = vxor.u32 %v2047, 2147483648
    %v2062 = vmul.f32 %v2061, 1.442695
    %v2063 = vpow.pop %v2062
    %v2064 = vadd.f32 %v2063, 1.0
    %v2065 = vrcp.pop %v2064
    %v2066 = vmul.f32 1.0, %v2065
    %v2067 = vmul.f32 %v2059, %v1894
    %v2068 = vmul.f32 %v2053, %v2060
    %v2069 = vadd.f32 %v2067, %v2068
    %v2070 = vtanh.pop %v2069
    %v2071 = vmul.f32 %v2066, %v2070
    %2072 = vst [vmem:[#allocation3 + $0x38] sm:$0xff] %v2071
    %v2073 = vld [vmem:[#allocation3] sm:$0xff]
    %v2074 = vld [vmem:[#allocation3 + $0x8] sm:$0xff]
    %v2075 = vld [vmem:[#allocation3 + $0x10] sm:$0xff]
    %v2076 = vld [vmem:[#allocation3 + $0x18] sm:$0xff]
    %v2077 = vld [vmem:[#allocation3 + $0x20] sm:$0xff]
    %v2078 = vld [vmem:[#allocation3 + $0x28] sm:$0xff]
    %v2079 = vld [vmem:[#allocation3 + $0x30] sm:$0xff]
    %v2080 = vld [vmem:[#allocation3 + $0x38] sm:$0xff]
    %v2081 = vld [vmem:[#allocation9] sm:$0xff]
    %v2082 = vld [vmem:[#allocation9 + $0x8] sm:$0xff]
    %v2083 = vld [vmem:[#allocation9 + $0x10] sm:$0xff]
    %v2084 = vld [vmem:[#allocation9 + $0x18] sm:$0xff]
    %v2085 = vld [vmem:[#allocation9 + $0x20] sm:$0xff]
    %v2086 = vld [vmem:[#allocation9 + $0x28] sm:$0xff]
    %v2087 = vld [vmem:[#allocation9 + $0x30] sm:$0xff]
    %v2088 = vld [vmem:[#allocation9 + $0x38] sm:$0xff]
    %v2089 = vld [vmem:[#allocation9 + $0x40] sm:$0xff]
    %v2090 = vld [vmem:[#allocation9 + $0x48] sm:$0xff]
    %v2091 = vld [vmem:[#allocation9 + $0x50] sm:$0xff]
    %v2092 = vld [vmem:[#allocation9 + $0x58] sm:$0xff]
    %v2093 = vld [vmem:[#allocation9 + $0x60] sm:$0xff]
    %v2094 = vld [vmem:[#allocation9 + $0x68] sm:$0xff]
    %v2095 = vld [vmem:[#allocation9 + $0x70] sm:$0xff]
    %v2096 = vld [vmem:[#allocation9 + $0x78] sm:$0xff]
    %v2097 = vld [vmem:[#allocation9 + $0x80] sm:$0xff]
    %v2098 = vld [vmem:[#allocation9 + $0x88] sm:$0xff]
    %v2099 = vld [vmem:[#allocation9 + $0x90] sm:$0xff]
    %v2100 = vld [vmem:[#allocation9 + $0x98] sm:$0xff]
    %v2101 = vld [vmem:[#allocation9 + $0xa0] sm:$0xff]
    %v2102 = vld [vmem:[#allocation9 + $0xa8] sm:$0xff]
    %v2103 = vld [vmem:[#allocation9 + $0xb0] sm:$0xff]
    %v2104 = vld [vmem:[#allocation9 + $0xb8] sm:$0xff]
    %v2105 = vld [vmem:[#allocation9 + $0xc0] sm:$0xff]
    %v2106 = vld [vmem:[#allocation9 + $0xc8] sm:$0xff]
    %v2107 = vld [vmem:[#allocation9 + $0xd0] sm:$0xff]
    %v2108 = vld [vmem:[#allocation9 + $0xd8] sm:$0xff]
    %v2109 = vld [vmem:[#allocation9 + $0xe0] sm:$0xff]
    %v2110 = vld [vmem:[#allocation9 + $0xe8] sm:$0xff]
    %v2111 = vld [vmem:[#allocation9 + $0xf0] sm:$0xff]
    %v2112 = vld [vmem:[#allocation9 + $0xf8] sm:$0xff]
    %v2113 = vld [vmem:[#allocation9 + $0x100] sm:$0xff]
    %v2114 = vld [vmem:[#allocation9 + $0x108] sm:$0xff]
    %v2115 = vld [vmem:[#allocation9 + $0x110] sm:$0xff]
    %v2116 = vld [vmem:[#allocation9 + $0x118] sm:$0xff]
    %v2117 = vld [vmem:[#allocation9 + $0x120] sm:$0xff]
    %v2118 = vld [vmem:[#allocation9 + $0x128] sm:$0xff]
    %v2119 = vld [vmem:[#allocation9 + $0x130] sm:$0xff]
    %v2120 = vld [vmem:[#allocation9 + $0x138] sm:$0xff]
    %v2121 = vld [vmem:[#allocation9 + $0x140] sm:$0xff]
    %v2122 = vld [vmem:[#allocation9 + $0x148] sm:$0xff]
    %v2123 = vld [vmem:[#allocation9 + $0x150] sm:$0xff]
    %v2124 = vld [vmem:[#allocation9 + $0x158] sm:$0xff]
    %v2125 = vld [vmem:[#allocation9 + $0x160] sm:$0xff]
    %v2126 = vld [vmem:[#allocation9 + $0x168] sm:$0xff]
    %v2127 = vld [vmem:[#allocation9 + $0x170] sm:$0xff]
    %v2128 = vld [vmem:[#allocation9 + $0x178] sm:$0xff]
    %v2129 = vld [vmem:[#allocation9 + $0x180] sm:$0xff]
    %v2130 = vld [vmem:[#allocation9 + $0x188] sm:$0xff]
    %v2131 = vld [vmem:[#allocation9 + $0x190] sm:$0xff]
    %v2132 = vld [vmem:[#allocation9 + $0x198] sm:$0xff]
    %v2133 = vld [vmem:[#allocation9 + $0x1a0] sm:$0xff]
    %v2134 = vld [vmem:[#allocation9 + $0x1a8] sm:$0xff]
    %v2135 = vld [vmem:[#allocation9 + $0x1b0] sm:$0xff]
    %v2136 = vld [vmem:[#allocation9 + $0x1b8] sm:$0xff]
    %v2137 = vld [vmem:[#allocation9 + $0x1c0] sm:$0xff]
    %v2138 = vld [vmem:[#allocation9 + $0x1c8] sm:$0xff]
    %v2139 = vld [vmem:[#allocation9 + $0x1d0] sm:$0xff]
    %v2140 = vld [vmem:[#allocation9 + $0x1d8] sm:$0xff]
    %v2141 = vld [vmem:[#allocation9 + $0x1e0] sm:$0xff]
    %v2142 = vld [vmem:[#allocation9 + $0x1e8] sm:$0xff]
    %v2143 = vld [vmem:[#allocation9 + $0x1f0] sm:$0xff]
    %v2144 = vld [vmem:[#allocation9 + $0x1f8] sm:$0xff]
    %v2145 = vld [vmem:[%s10] sm:$0xf]
    %v2147 = vlaneseq
    %v2148 = vshrl.u32 %v2147, 7
    %v2149 = vsub.s32 0, %v2148
    %v2150 = vrot.slane %v2145, %v2149
    %v2151 = vlaneseq
    %v2152 = vshrl.u32 %v2151, 7
    %v2153 = vsub.s32 1, %v2152
    %v2154 = vrot.slane %v2145, %v2153
    %v2155 = vlaneseq
    %v2156 = vshrl.u32 %v2155, 7
    %v2157 = vsub.s32 2, %v2156
    %v2158 = vrot.slane %v2145, %v2157
    %v2159 = vlaneseq
    %v2160 = vshrl.u32 %v2159, 7
    %v2161 = vsub.s32 3, %v2160
    %v2162 = vrot.slane %v2145, %v2161
    %2167 = vmatprep.subr.mxu0 %v2082
    %2168 = vmatpush1.msra.mxu0 %v2081
    %2169 = vmatprep.subr.mxu0 %v2086
    %2170 = vmatpush1.msra.mxu0 %v2085
    %2171 = vmatprep.subr.mxu0 %v2090
    %2172 = vmatpush1.msra.mxu0 %v2089
    %2173 = vmatprep.subr.mxu0 %v2094
    %2174 = vmatpush1.msra.mxu0 %v2093
    %2175 = vmatprep.subr.mxu0 %v2098
    %2176 = vmatpush1.msra.mxu0 %v2097
    %2177 = vmatprep.subr.mxu0 %v2102
    %2178 = vmatpush1.msra.mxu0 %v2101
    %2179 = vmatprep.subr.mxu0 %v2106
    %2180 = vmatpush1.msra.mxu0 %v2105
    %2181 = vmatprep.subr.mxu0 %v2110
    %2182 = vmatpush1.msra.mxu0 %v2109
    %2183 = vmatprep.subr.mxu0 %v2114
    %2184 = vmatpush1.msra.mxu0 %v2113
    %2185 = vmatprep.subr.mxu0 %v2118
    %2186 = vmatpush1.msra.mxu0 %v2117
    %2187 = vmatprep.subr.mxu0 %v2122
    %2188 = vmatpush1.msra.mxu0 %v2121
    %2189 = vmatprep.subr.mxu0 %v2126
    %2190 = vmatpush1.msra.mxu0 %v2125
    %2191 = vmatprep.subr.mxu0 %v2130
    %2192 = vmatpush1.msra.mxu0 %v2129
    %2193 = vmatprep.subr.mxu0 %v2134
    %2194 = vmatpush1.msra.mxu0 %v2133
    %2195 = vmatprep.subr.mxu0 %v2138
    %2196 = vmatpush1.msra.mxu0 %v2137
    %2197 = vmatprep.subr.mxu0 %v2142
    %2198 = vmatpush1.msra.mxu0 %v2141
    %2199 = vmatprep.subr.mxu0 0.0
    %2200 = vmatpush1.msra.mxu0 0.0
    %2201 = vmatprep.subr.mxu0 0.0
    %2202 = vmatpush1.msra.mxu0 0.0
    %2203 = vmatprep.subr.mxu0 0.0
    %2204 = vmatpush1.msra.mxu0 0.0
    %2205 = vmatprep.subr.mxu0 0.0
    %2206 = vmatpush1.msra.mxu0 0.0
    %2207 = vmatprep.subr.mxu0 0.0
    %2208 = vmatpush1.msra.mxu0 0.0
    %2209 = vmatprep.subr.mxu0 0.0
    %2210 = vmatpush1.msra.mxu0 0.0
    %2211 = vmatprep.subr.mxu0 0.0
    %2212 = vmatpush1.msra.mxu0 0.0
    %2213 = vmatprep.subr.mxu0 0.0
    %2214 = vmatpush1.msra.mxu0 0.0
    %2215 = vmatprep.subr.mxu0 0.0
    %2216 = vmatpush1.msra.mxu0 0.0
    %2217 = vmatprep.subr.mxu0 0.0
    %2218 = vmatpush1.msra.mxu0 0.0
    %2219 = vmatprep.subr.mxu0 0.0
    %2220 = vmatpush1.msra.mxu0 0.0
    %2221 = vmatprep.subr.mxu0 0.0
    %2222 = vmatpush1.msra.mxu0 0.0
    %2223 = vmatprep.subr.mxu0 0.0
    %2224 = vmatpush1.msra.mxu0 0.0
    %2225 = vmatprep.subr.mxu0 0.0
    %2226 = vmatpush1.msra.mxu0 0.0
    %2227 = vmatprep.subr.mxu0 0.0
    %2228 = vmatpush1.msra.mxu0 0.0
    %2229 = vmatprep.subr.mxu0 0.0
    %2230 = vmatpush1.msra.mxu0 0.0
    %2231 = vmatprep.mubr.f32.mxu0 0.0
    %2232 = vmatmul.mubr.f32.gmra.mrb[0].mxu0 %v2073
    %v2233 = vpop.f32.mrb[0].mxu0
    %v2234 = vadd.f32 %v2150, %v2233
    %v2235 = vpop.f32.mrb[0].mxu0
    %v2236 = vadd.f32 %v2154, %v2235
    %2237 = vmatprep.mubr.f32.mxu0 0.0
    %2238 = vmatmul.mubr.f32.gmra.mrb[0].mxu0 %v2074
    %v2239 = vpop.f32.mrb[0].mxu0
    %v2240 = vadd.f32 %v2150, %v2239
    %v2241 = vpop.f32.mrb[0].mxu0
    %v2242 = vadd.f32 %v2154, %v2241
    %2243 = vmatprep.mubr.f32.mxu0 0.0
    %2244 = vmatmul.mubr.f32.gmra.mrb[0].mxu0 %v2075
    %v2245 = vpop.f32.mrb[0].mxu0
    %v2246 = vadd.f32 %v2150, %v2245
    %v2247 = vpop.f32.mrb[0].mxu0
    %v2248 = vadd.f32 %v2154, %v2247
    %2249 = vmatprep.mubr.f32.mxu0 0.0
    %2250 = vmatmul.mubr.f32.gmra.mrb[0].mxu0 %v2076
    %v2251 = vpop.f32.mrb[0].mxu0
    %v2252 = vadd.f32 %v2150, %v2251
    %v2253 = vpop.f32.mrb[0].mxu0
    %v2254 = vadd.f32 %v2154, %v2253
    %2255 = vmatprep.mubr.f32.mxu0 0.0
    %2256 = vmatmul.mubr.f32.gmra.mrb[0].mxu0 %v2077
    %v2257 = vpop.f32.mrb[0].mxu0
    %v2258 = vadd.f32 %v2150, %v2257
    %v2259 = vpop.f32.mrb[0].mxu0
    %v2260 = vadd.f32 %v2154, %v2259
    %2261 = vmatprep.mubr.f32.mxu0 0.0
    %2262 = vmatmul.mubr.f32.gmra.mrb[0].mxu0 %v2078
    %v2263 = vpop.f32.mrb[0].mxu0
    %v2264 = vadd.f32 %v2150, %v2263
    %v2265 = vpop.f32.mrb[0].mxu0
    %v2266 = vadd.f32 %v2154, %v2265
    %2267 = vmatprep.mubr.f32.mxu0 0.0
    %2268 = vmatmul.mubr.f32.gmra.mrb[0].mxu0 %v2079
    %v2269 = vpop.f32.mrb[0].mxu0
    %v2270 = vadd.f32 %v2150, %v2269
    %v2271 = vpop.f32.mrb[0].mxu0
    %v2272 = vadd.f32 %v2154, %v2271
    %2273 = vmatprep.mubr.f32.mxu0 0.0
    %2274 = vmatmul.mubr.f32.gmra.mrb[0].mxu0 %v2080
    %v2275 = vpop.f32.mrb[0].mxu0
    %v2276 = vadd.f32 %v2150, %v2275
    %v2277 = vpop.f32.mrb[0].mxu0
    %v2278 = vadd.f32 %v2154, %v2277
    %2279 = vdwg.mxu0
    %2280 = vmatprep.subr.mxu0 %v2084
    %2281 = vmatpush1.msra.mxu0 %v2083
    %2282 = vmatprep.subr.mxu0 %v2088
    %2283 = vmatpush1.msra.mxu0 %v2087
    %2284 = vmatprep.subr.mxu0 %v2092
    %2285 = vmatpush1.msra.mxu0 %v2091
    %2286 = vmatprep.subr.mxu0 %v2096
    %2287 = vmatpush1.msra.mxu0 %v2095
    %2288 = vmatprep.subr.mxu0 %v2100
    %2289 = vmatpush1.msra.mxu0 %v2099
    %2290 = vmatprep.subr.mxu0 %v2104
    %2291 = vmatpush1.msra.mxu0 %v2103
    %2292 = vmatprep.subr.mxu0 %v2108
    %2293 = vmatpush1.msra.mxu0 %v2107
    %2294 = vmatprep.subr.mxu0 %v2112
    %2295 = vmatpush1.msra.mxu0 %v2111
    %2296 = vmatprep.subr.mxu0 %v2116
    %2297 = vmatpush1.msra.mxu0 %v2115
    %2298 = vmatprep.subr.mxu0 %v2120
    %2299 = vmatpush1.msra.mxu0 %v2119
    %2300 = vmatprep.subr.mxu0 %v2124
    %2301 = vmatpush1.msra.mxu0 %v2123
    %2302 = vmatprep.subr.mxu0 %v2128
    %2303 = vmatpush1.msra.mxu0 %v2127
    %2304 = vmatprep.subr.mxu0 %v2132
    %2305 = vmatpush1.msra.mxu0 %v2131
    %2306 = vmatprep.subr.mxu0 %v2136
    %2307 = vmatpush1.msra.mxu0 %v2135
    %2308 = vmatprep.subr.mxu0 %v2140
    %2309 = vmatpush1.msra.mxu0 %v2139
    %2310 = vmatprep.subr.mxu0 %v2144
    %2311 = vmatpush1.msra.mxu0 %v2143
    %2312 = vmatprep.subr.mxu0 0.0
    %2313 = vmatpush1.msra.mxu0 0.0
    %2314 = vmatprep.subr.mxu0 0.0
    %2315 = vmatpush1.msra.mxu0 0.0
    %2316 = vmatprep.subr.mxu0 0.0
    %2317 = vmatpush1.msra.mxu0 0.0
    %2318 = vmatprep.subr.mxu0 0.0
    %2319 = vmatpush1.msra.mxu0 0.0
    %2320 = vmatprep.subr.mxu0 0.0
    %2321 = vmatpush1.msra.mxu0 0.0
    %2322 = vmatprep.subr.mxu0 0.0
    %2323 = vmatpush1.msra.mxu0 0.0
    %2324 = vmatprep.subr.mxu0 0.0
    %2325 = vmatpush1.msra.mxu0 0.0
    %2326 = vmatprep.subr.mxu0 0.0
    %2327 = vmatpush1.msra.mxu0 0.0
    %2328 = vmatprep.subr.mxu0 0.0
    %2329 = vmatpush1.msra.mxu0 0.0
    %2330 = vmatprep.subr.mxu0 0.0
    %2331 = vmatpush1.msra.mxu0 0.0
    %2332 = vmatprep.subr.mxu0 0.0
    %2333 = vmatpush1.msra.mxu0 0.0
    %2334 = vmatprep.subr.mxu0 0.0
    %2335 = vmatpush1.msra.mxu0 0.0
    %2336 = vmatprep.subr.mxu0 0.0
    %2337 = vmatpush1.msra.mxu0 0.0
    %2338 = vmatprep.subr.mxu0 0.0
    %2339 = vmatpush1.msra.mxu0 0.0
    %2340 = vmatprep.subr.mxu0 0.0
    %2341 = vmatpush1.msra.mxu0 0.0
    %2342 = vmatprep.subr.mxu0 0.0
    %2343 = vmatpush1.msra.mxu0 0.0
    %2344 = vmatprep.mubr.f32.mxu0 0.0
    %2345 = vmatmul.mubr.f32.gmra.mrb[0].mxu0 %v2073
    %v2346 = vpop.f32.mrb[0].mxu0
    %v2347 = vadd.f32 %v2158, %v2346
    %v2348 = vpop.f32.mrb[0].mxu0
    %v2349 = vadd.f32 %v2162, %v2348
    %2350 = vmatprep.mubr.f32.mxu0 0.0
    %2351 = vmatmul.mubr.f32.gmra.mrb[0].mxu0 %v2074
    %v2352 = vpop.f32.mrb[0].mxu0
    %v2353 = vadd.f32 %v2158, %v2352
    %v2354 = vpop.f32.mrb[0].mxu0
    %v2355 = vadd.f32 %v2162, %v2354
    %2356 = vmatprep.mubr.f32.mxu0 0.0
    %2357 = vmatmul.mubr.f32.gmra.mrb[0].mxu0 %v2075
    %v2358 = vpop.f32.mrb[0].mxu0
    %v2359 = vadd.f32 %v2158, %v2358
    %v2360 = vpop.f32.mrb[0].mxu0
    %v2361 = vadd.f32 %v2162, %v2360
    %2362 = vmatprep.mubr.f32.mxu0 0.0
    %2363 = vmatmul.mubr.f32.gmra.mrb[0].mxu0 %v2076
    %v2364 = vpop.f32.mrb[0].mxu0
    %v2365 = vadd.f32 %v2158, %v2364
    %v2366 = vpop.f32.mrb[0].mxu0
    %v2367 = vadd.f32 %v2162, %v2366
    %2368 = vmatprep.mubr.f32.mxu0 0.0
    %2369 = vmatmul.mubr.f32.gmra.mrb[0].mxu0 %v2077
    %v2370 = vpop.f32.mrb[0].mxu0
    %v2371 = vadd.f32 %v2158, %v2370
    %v2372 = vpop.f32.mrb[0].mxu0
    %v2373 = vadd.f32 %v2162, %v2372
    %2374 = vmatprep.mubr.f32.mxu0 0.0
    %2375 = vmatmul.mubr.f32.gmra.mrb[0].mxu0 %v2078
    %v2376 = vpop.f32.mrb[0].mxu0
    %v2377 = vadd.f32 %v2158, %v2376
    %v2378 = vpop.f32.mrb[0].mxu0
    %v2379 = vadd.f32 %v2162, %v2378
    %2380 = vmatprep.mubr.f32.mxu0 0.0
    %2381 = vmatmul.mubr.f32.gmra.mrb[0].mxu0 %v2079
    %v2382 = vpop.f32.mrb[0].mxu0
    %v2383 = vadd.f32 %v2158, %v2382
    %v2384 = vpop.f32.mrb[0].mxu0
    %v2385 = vadd.f32 %v2162, %v2384
    %2386 = vmatprep.mubr.f32.mxu0 0.0
    %2387 = vmatmul.mubr.f32.gmra.mrb[0].mxu0 %v2080
    %v2388 = vpop.f32.mrb[0].mxu0
    %v2389 = vadd.f32 %v2158, %v2388
    %v2390 = vpop.f32.mrb[0].mxu0
    %v2391 = vadd.f32 %v2162, %v2390
    %2392 = vdwg.mxu0
    %2393 = vst [vmem:[#allocation2] sm:$0xff] %v2234
    %2394 = vst [vmem:[#allocation2 + $0x8] sm:$0xff] %v2236
    %2395 = vst [vmem:[#allocation2 + $0x10] sm:$0xff] %v2347
    %2396 = vst [vmem:[#allocation2 + $0x18] sm:$0xff] %v2349
    %2397 = vst [vmem:[#allocation2 + $0x20] sm:$0xff] %v2240
    %2398 = vst [vmem:[#allocation2 + $0x28] sm:$0xff] %v2242
    %2399 = vst [vmem:[#allocation2 + $0x30] sm:$0xff] %v2353
    %2400 = vst [vmem:[#allocation2 + $0x38] sm:$0xff] %v2355
    %2401 = vst [vmem:[#allocation2 + $0x40] sm:$0xff] %v2246
    %2402 = vst [vmem:[#allocation2 + $0x48] sm:$0xff] %v2248
    %2403 = vst [vmem:[#allocation2 + $0x50] sm:$0xff] %v2359
    %2404 = vst [vmem:[#allocation2 + $0x58] sm:$0xff] %v2361
    %2405 = vst [vmem:[#allocation2 + $0x60] sm:$0xff] %v2252
    %2406 = vst [vmem:[#allocation2 + $0x68] sm:$0xff] %v2254
    %2407 = vst [vmem:[#allocation2 + $0x70] sm:$0xff] %v2365
    %2408 = vst [vmem:[#allocation2 + $0x78] sm:$0xff] %v2367
    %2409 = vst [vmem:[#allocation2 + $0x80] sm:$0xff] %v2258
    %2410 = vst [vmem:[#allocation2 + $0x88] sm:$0xff] %v2260
    %2411 = vst [vmem:[#allocation2 + $0x90] sm:$0xff] %v2371
    %2412 = vst [vmem:[#allocation2 + $0x98] sm:$0xff] %v2373
    %2413 = vst [vmem:[#allocation2 + $0xa0] sm:$0xff] %v2264
    %2414 = vst [vmem:[#allocation2 + $0xa8] sm:$0xff] %v2266
    %2415 = vst [vmem:[#allocation2 + $0xb0] sm:$0xff] %v2377
    %2416 = vst [vmem:[#allocation2 + $0xb8] sm:$0xff] %v2379
    %2417 = vst [vmem:[#allocation2 + $0xc0] sm:$0xff] %v2270
    %2418 = vst [vmem:[#allocation2 + $0xc8] sm:$0xff] %v2272
    %2419 = vst [vmem:[#allocation2 + $0xd0] sm:$0xff] %v2383
    %2420 = vst [vmem:[#allocation2 + $0xd8] sm:$0xff] %v2385
    %2421 = vst [vmem:[#allocation2 + $0xe0] sm:$0xff] %v2276
    %2422 = vst [vmem:[#allocation2 + $0xe8] sm:$0xff] %v2278
    %2423 = vst [vmem:[#allocation2 + $0xf0] sm:$0xff] %v2389
    %2424 = vst [vmem:[#allocation2 + $0xf8] sm:$0xff] %v2391
    %s2425 = scalar_lea.vmem %s1, 8
    %v2426 = vld [vmem:[%s2425] sm:$0xff]
    %s2427 = scalar_lea.vmem %s2, 8
    %v2428 = vld [vmem:[%s2427] sm:$0xff]
    %v2429 = vld [vmem:[#allocation10] sm:$0xff]
    %v2430 = vld [vmem:[#allocation10 + $0x8] sm:$0xff]
    %v2431 = vld [vmem:[#allocation10 + $0x10] sm:$0xff]
    %v2432 = vld [vmem:[#allocation10 + $0x18] sm:$0xff]
    %v2433 = vld [vmem:[#allocation10 + $0x20] sm:$0xff]
    %v2434 = vld [vmem:[#allocation10 + $0x28] sm:$0xff]
    %v2435 = vld [vmem:[#allocation10 + $0x30] sm:$0xff]
    %v2436 = vld [vmem:[#allocation10 + $0x38] sm:$0xff]
    %v2437 = vld [vmem:[#allocation10 + $0x40] sm:$0xff]
    %v2438 = vld [vmem:[#allocation10 + $0x48] sm:$0xff]
    %v2439 = vld [vmem:[#allocation10 + $0x50] sm:$0xff]
    %v2440 = vld [vmem:[#allocation10 + $0x58] sm:$0xff]
    %v2441 = vld [vmem:[#allocation10 + $0x60] sm:$0xff]
    %v2442 = vld [vmem:[#allocation10 + $0x68] sm:$0xff]
    %v2443 = vld [vmem:[#allocation10 + $0x70] sm:$0xff]
    %v2444 = vld [vmem:[#allocation10 + $0x78] sm:$0xff]
    %v2445 = vld [vmem:[#allocation10 + $0x80] sm:$0xff]
    %v2446 = vld [vmem:[#allocation10 + $0x88] sm:$0xff]
    %v2447 = vld [vmem:[#allocation10 + $0x90] sm:$0xff]
    %v2448 = vld [vmem:[#allocation10 + $0x98] sm:$0xff]
    %v2449 = vld [vmem:[#allocation10 + $0xa0] sm:$0xff]
    %v2450 = vld [vmem:[#allocation10 + $0xa8] sm:$0xff]
    %v2451 = vld [vmem:[#allocation10 + $0xb0] sm:$0xff]
    %v2452 = vld [vmem:[#allocation10 + $0xb8] sm:$0xff]
    %v2453 = vld [vmem:[#allocation10 + $0xc0] sm:$0xff]
    %v2454 = vld [vmem:[#allocation10 + $0xc8] sm:$0xff]
    %v2455 = vld [vmem:[#allocation10 + $0xd0] sm:$0xff]
    %v2456 = vld [vmem:[#allocation10 + $0xd8] sm:$0xff]
    %v2457 = vld [vmem:[#allocation10 + $0xe0] sm:$0xff]
    %v2458 = vld [vmem:[#allocation10 + $0xe8] sm:$0xff]
    %v2459 = vld [vmem:[#allocation10 + $0xf0] sm:$0xff]
    %v2460 = vld [vmem:[#allocation10 + $0xf8] sm:$0xff]
    %v2461 = vld [vmem:[#allocation10 + $0x100] sm:$0xff]
    %v2462 = vld [vmem:[#allocation10 + $0x108] sm:$0xff]
    %v2463 = vld [vmem:[#allocation10 + $0x110] sm:$0xff]
    %v2464 = vld [vmem:[#allocation10 + $0x118] sm:$0xff]
    %v2465 = vld [vmem:[#allocation10 + $0x120] sm:$0xff]
    %v2466 = vld [vmem:[#allocation10 + $0x128] sm:$0xff]
    %v2467 = vld [vmem:[#allocation10 + $0x130] sm:$0xff]
    %v2468 = vld [vmem:[#allocation10 + $0x138] sm:$0xff]
    %v2469 = vld [vmem:[#allocation10 + $0x140] sm:$0xff]
    %v2470 = vld [vmem:[#allocation10 + $0x148] sm:$0xff]
    %v2471 = vld [vmem:[#allocation10 + $0x150] sm:$0xff]
    %v2472 = vld [vmem:[#allocation10 + $0x158] sm:$0xff]
    %v2473 = vld [vmem:[#allocation10 + $0x160] sm:$0xff]
    %v2474 = vld [vmem:[#allocation10 + $0x168] sm:$0xff]
    %v2475 = vld [vmem:[#allocation10 + $0x170] sm:$0xff]
    %v2476 = vld [vmem:[#allocation10 + $0x178] sm:$0xff]
    %v2477 = vld [vmem:[#allocation10 + $0x180] sm:$0xff]
    %v2478 = vld [vmem:[#allocation10 + $0x188] sm:$0xff]
    %v2479 = vld [vmem:[#allocation10 + $0x190] sm:$0xff]
    %v2480 = vld [vmem:[#allocation10 + $0x198] sm:$0xff]
    %v2481 = vld [vmem:[#allocation10 + $0x1a0] sm:$0xff]
    %v2482 = vld [vmem:[#allocation10 + $0x1a8] sm:$0xff]
    %v2483 = vld [vmem:[#allocation10 + $0x1b0] sm:$0xff]
    %v2484 = vld [vmem:[#allocation10 + $0x1b8] sm:$0xff]
    %v2485 = vld [vmem:[#allocation10 + $0x1c0] sm:$0xff]
    %v2486 = vld [vmem:[#allocation10 + $0x1c8] sm:$0xff]
    %v2487 = vld [vmem:[#allocation10 + $0x1d0] sm:$0xff]
    %v2488 = vld [vmem:[#allocation10 + $0x1d8] sm:$0xff]
    %v2489 = vld [vmem:[#allocation10 + $0x1e0] sm:$0xff]
    %v2490 = vld [vmem:[#allocation10 + $0x1e8] sm:$0xff]
    %v2491 = vld [vmem:[#allocation10 + $0x1f0] sm:$0xff]
    %v2492 = vld [vmem:[#allocation10 + $0x1f8] sm:$0xff]
    %v2493 = vld [vmem:[#allocation2] sm:$0xff]
    %v2494 = vld [vmem:[#allocation2 + $0x8] sm:$0xff]
    %v2495 = vld [vmem:[#allocation2 + $0x10] sm:$0xff]
    %v2496 = vld [vmem:[#allocation2 + $0x18] sm:$0xff]
    %2497 = vmatprep.subr.mxu0 %v2430
    %2498 = vmatpush1.msra.mxu0 %v2429
    %2499 = vmatprep.subr.mxu0 %v2434
    %2500 = vmatpush1.msra.mxu0 %v2433
    %2501 = vmatprep.subr.mxu0 %v2438
    %2502 = vmatpush1.msra.mxu0 %v2437
    %2503 = vmatprep.subr.mxu0 %v2442
    %2504 = vmatpush1.msra.mxu0 %v2441
    %2505 = vmatprep.subr.mxu0 %v2446
    %2506 = vmatpush1.msra.mxu0 %v2445
    %2507 = vmatprep.subr.mxu0 %v2450
    %2508 = vmatpush1.msra.mxu0 %v2449
    %2509 = vmatprep.subr.mxu0 %v2454
    %2510 = vmatpush1.msra.mxu0 %v2453
    %2511 = vmatprep.subr.mxu0 %v2458
    %2512 = vmatpush1.msra.mxu0 %v2457
    %2513 = vmatprep.subr.mxu0 %v2462
    %2514 = vmatpush1.msra.mxu0 %v2461
    %2515 = vmatprep.subr.mxu0 %v2466
    %2516 = vmatpush1.msra.mxu0 %v2465
    %2517 = vmatprep.subr.mxu0 %v2470
    %2518 = vmatpush1.msra.mxu0 %v2469
    %2519 = vmatprep.subr.mxu0 %v2474
    %2520 = vmatpush1.msra.mxu0 %v2473
    %2521 = vmatprep.subr.mxu0 %v2478
    %2522 = vmatpush1.msra.mxu0 %v2477
    %2523 = vmatprep.subr.mxu0 %v2482
    %2524 = vmatpush1.msra.mxu0 %v2481
    %2525 = vmatprep.subr.mxu0 %v2486
    %2526 = vmatpush1.msra.mxu0 %v2485
    %2527 = vmatprep.subr.mxu0 %v2490
    %2528 = vmatpush1.msra.mxu0 %v2489
    %2529 = vmatprep.subr.mxu0 0.0
    %2530 = vmatpush1.msra.mxu0 0.0
    %2531 = vmatprep.subr.mxu0 0.0
    %2532 = vmatpush1.msra.mxu0 0.0
    %2533 = vmatprep.subr.mxu0 0.0
    %2534 = vmatpush1.msra.mxu0 0.0
    %2535 = vmatprep.subr.mxu0 0.0
    %2536 = vmatpush1.msra.mxu0 0.0
    %2537 = vmatprep.subr.mxu0 0.0
    %2538 = vmatpush1.msra.mxu0 0.0
    %2539 = vmatprep.subr.mxu0 0.0
    %2540 = vmatpush1.msra.mxu0 0.0
    %2541 = vmatprep.subr.mxu0 0.0
    %2542 = vmatpush1.msra.mxu0 0.0
    %2543 = vmatprep.subr.mxu0 0.0
    %2544 = vmatpush1.msra.mxu0 0.0
    %2545 = vmatprep.subr.mxu0 0.0
    %2546 = vmatpush1.msra.mxu0 0.0
    %2547 = vmatprep.subr.mxu0 0.0
    %2548 = vmatpush1.msra.mxu0 0.0
    %2549 = vmatprep.subr.mxu0 0.0
    %2550 = vmatpush1.msra.mxu0 0.0
    %2551 = vmatprep.subr.mxu0 0.0
    %2552 = vmatpush1.msra.mxu0 0.0
    %2553 = vmatprep.subr.mxu0 0.0
    %2554 = vmatpush1.msra.mxu0 0.0
    %2555 = vmatprep.subr.mxu0 0.0
    %2556 = vmatpush1.msra.mxu0 0.0
    %2557 = vmatprep.subr.mxu0 0.0
    %2558 = vmatpush1.msra.mxu0 0.0
    %2559 = vmatprep.subr.mxu0 0.0
    %2560 = vmatpush1.msra.mxu0 0.0
    %2561 = vmatprep.mubr.f32.mxu0 0.0
    %2562 = vmatmul.mubr.f32.gmra.mrb[0].mxu0 %v2426
    %v2563 = vpop.f32.mrb[0].mxu0
    %v2564 = vadd.f32 0.0, %v2563
    %v2565 = vpop.f32.mrb[0].mxu0
    %v2566 = vadd.f32 0.0, %v2565
    %2567 = vdwg.mxu0
    %2568 = vmatprep.subr.mxu0 %v2432
    %2569 = vmatpush1.msra.mxu0 %v2431
    %2570 = vmatprep.subr.mxu0 %v2436
    %2571 = vmatpush1.msra.mxu0 %v2435
    %2572 = vmatprep.subr.mxu0 %v2440
    %2573 = vmatpush1.msra.mxu0 %v2439
    %2574 = vmatprep.subr.mxu0 %v2444
    %2575 = vmatpush1.msra.mxu0 %v2443
    %2576 = vmatprep.subr.mxu0 %v2448
    %2577 = vmatpush1.msra.mxu0 %v2447
    %2578 = vmatprep.subr.mxu0 %v2452
    %2579 = vmatpush1.msra.mxu0 %v2451
    %2580 = vmatprep.subr.mxu0 %v2456
    %2581 = vmatpush1.msra.mxu0 %v2455
    %2582 = vmatprep.subr.mxu0 %v2460
    %2583 = vmatpush1.msra.mxu0 %v2459
    %2584 = vmatprep.subr.mxu0 %v2464
    %2585 = vmatpush1.msra.mxu0 %v2463
    %2586 = vmatprep.subr.mxu0 %v2468
    %2587 = vmatpush1.msra.mxu0 %v2467
    %2588 = vmatprep.subr.mxu0 %v2472
    %2589 = vmatpush1.msra.mxu0 %v2471
    %2590 = vmatprep.subr.mxu0 %v2476
    %2591 = vmatpush1.msra.mxu0 %v2475
    %2592 = vmatprep.subr.mxu0 %v2480
    %2593 = vmatpush1.msra.mxu0 %v2479
    %2594 = vmatprep.subr.mxu0 %v2484
    %2595 = vmatpush1.msra.mxu0 %v2483
    %2596 = vmatprep.subr.mxu0 %v2488
    %2597 = vmatpush1.msra.mxu0 %v2487
    %2598 = vmatprep.subr.mxu0 %v2492
    %2599 = vmatpush1.msra.mxu0 %v2491
    %2600 = vmatprep.subr.mxu0 0.0
    %2601 = vmatpush1.msra.mxu0 0.0
    %2602 = vmatprep.subr.mxu0 0.0
    %2603 = vmatpush1.msra.mxu0 0.0
    %2604 = vmatprep.subr.mxu0 0.0
    %2605 = vmatpush1.msra.mxu0 0.0
    %2606 = vmatprep.subr.mxu0 0.0
    %2607 = vmatpush1.msra.mxu0 0.0
    %2608 = vmatprep.subr.mxu0 0.0
    %2609 = vmatpush1.msra.mxu0 0.0
    %2610 = vmatprep.subr.mxu0 0.0
    %2611 = vmatpush1.msra.mxu0 0.0
    %2612 = vmatprep.subr.mxu0 0.0
    %2613 = vmatpush1.msra.mxu0 0.0
    %2614 = vmatprep.subr.mxu0 0.0
    %2615 = vmatpush1.msra.mxu0 0.0
    %2616 = vmatprep.subr.mxu0 0.0
    %2617 = vmatpush1.msra.mxu0 0.0
    %2618 = vmatprep.subr.mxu0 0.0
    %2619 = vmatpush1.msra.mxu0 0.0
    %2620 = vmatprep.subr.mxu0 0.0
    %2621 = vmatpush1.msra.mxu0 0.0
    %2622 = vmatprep.subr.mxu0 0.0
    %2623 = vmatpush1.msra.mxu0 0.0
    %2624 = vmatprep.subr.mxu0 0.0
    %2625 = vmatpush1.msra.mxu0 0.0
    %2626 = vmatprep.subr.mxu0 0.0
    %2627 = vmatpush1.msra.mxu0 0.0
    %2628 = vmatprep.subr.mxu0 0.0
    %2629 = vmatpush1.msra.mxu0 0.0
    %2630 = vmatprep.subr.mxu0 0.0
    %2631 = vmatpush1.msra.mxu0 0.0
    %2632 = vmatprep.mubr.f32.mxu0 0.0
    %2633 = vmatmul.mubr.f32.gmra.mrb[0].mxu0 %v2426
    %v2634 = vpop.f32.mrb[0].mxu0
    %v2635 = vadd.f32 0.0, %v2634
    %v2636 = vpop.f32.mrb[0].mxu0
    %v2637 = vadd.f32 0.0, %v2636
    %2638 = vdwg.mxu0
    %v2639 = vadd.f32 %v2493, %v2564
    %v2640 = vadd.f32 %v2494, %v2566
    %v2641 = vadd.f32 %v2495, %v2635
    %v2642 = vadd.f32 %v2496, %v2637
    %v2643 = vxor.u32 %v2639, 2147483648
    %v2644 = vmul.f32 %v2643, 1.442695
    %v2645 = vpow.pop %v2644
    %v2646 = vadd.f32 %v2645, 1.0
    %v2647 = vrcp.pop %v2646
    %v2648 = vmul.f32 1.0, %v2647
    %v2649 = vxor.u32 %v2640, 2147483648
    %v2650 = vmul.f32 %v2649, 1.442695
    %v2651 = vpow.pop %v2650
    %v2652 = vadd.f32 %v2651, 1.0
    %v2653 = vrcp.pop %v2652
    %v2654 = vmul.f32 1.0, %v2653
    %v2655 = vtanh.pop %v2641
    %v2656 = vxor.u32 %v2642, 2147483648
    %v2657 = vmul.f32 %v2656, 1.442695
    %v2658 = vpow.pop %v2657
    %v2659 = vadd.f32 %v2658, 1.0
    %v2660 = vrcp.pop %v2659
    %v2661 = vmul.f32 1.0, %v2660
    %v2662 = vmul.f32 %v2654, %v2428
    %v2663 = vmul.f32 %v2648, %v2655
    %v2664 = vadd.f32 %v2662, %v2663
    %v2665 = vtanh.pop %v2664
    %v2666 = vmul.f32 %v2661, %v2665
    %2667 = vst [vmem:[#allocation3] sm:$0xff] %v2666
    %v2668 = vld [vmem:[#allocation2 + $0x20] sm:$0xff]
    %v2669 = vld [vmem:[#allocation2 + $0x28] sm:$0xff]
    %v2670 = vld [vmem:[#allocation2 + $0x30] sm:$0xff]
    %v2671 = vld [vmem:[#allocation2 + $0x38] sm:$0xff]
    %2672 = vmatprep.subr.mxu0 %v2430
    %2673 = vmatpush1.msra.mxu0 %v2429
    %2674 = vmatprep.subr.mxu0 %v2434
    %2675 = vmatpush1.msra.mxu0 %v2433
    %2676 = vmatprep.subr.mxu0 %v2438
    %2677 = vmatpush1.msra.mxu0 %v2437
    %2678 = vmatprep.subr.mxu0 %v2442
    %2679 = vmatpush1.msra.mxu0 %v2441
    %2680 = vmatprep.subr.mxu0 %v2446
    %2681 = vmatpush1.msra.mxu0 %v2445
    %2682 = vmatprep.subr.mxu0 %v2450
    %2683 = vmatpush1.msra.mxu0 %v2449
    %2684 = vmatprep.subr.mxu0 %v2454
    %2685 = vmatpush1.msra.mxu0 %v2453
    %2686 = vmatprep.subr.mxu0 %v2458
    %2687 = vmatpush1.msra.mxu0 %v2457
    %2688 = vmatprep.subr.mxu0 %v2462
    %2689 = vmatpush1.msra.mxu0 %v2461
    %2690 = vmatprep.subr.mxu0 %v2466
    %2691 = vmatpush1.msra.mxu0 %v2465
    %2692 = vmatprep.subr.mxu0 %v2470
    %2693 = vmatpush1.msra.mxu0 %v2469
    %2694 = vmatprep.subr.mxu0 %v2474
    %2695 = vmatpush1.msra.mxu0 %v2473
    %2696 = vmatprep.subr.mxu0 %v2478
    %2697 = vmatpush1.msra.mxu0 %v2477
    %2698 = vmatprep.subr.mxu0 %v2482
    %2699 = vmatpush1.msra.mxu0 %v2481
    %2700 = vmatprep.subr.mxu0 %v2486
    %2701 = vmatpush1.msra.mxu0 %v2485
    %2702 = vmatprep.subr.mxu0 %v2490
    %2703 = vmatpush1.msra.mxu0 %v2489
    %2704 = vmatprep.subr.mxu0 0.0
    %2705 = vmatpush1.msra.mxu0 0.0
    %2706 = vmatprep.subr.mxu0 0.0
    %2707 = vmatpush1.msra.mxu0 0.0
    %2708 = vmatprep.subr.mxu0 0.0
    %2709 = vmatpush1.msra.mxu0 0.0
    %2710 = vmatprep.subr.mxu0 0.0
    %2711 = vmatpush1.msra.mxu0 0.0
    %2712 = vmatprep.subr.mxu0 0.0
    %2713 = vmatpush1.msra.mxu0 0.0
    %2714 = vmatprep.subr.mxu0 0.0
    %2715 = vmatpush1.msra.mxu0 0.0
    %2716 = vmatprep.subr.mxu0 0.0
    %2717 = vmatpush1.msra.mxu0 0.0
    %2718 = vmatprep.subr.mxu0 0.0
    %2719 = vmatpush1.msra.mxu0 0.0
    %2720 = vmatprep.subr.mxu0 0.0
    %2721 = vmatpush1.msra.mxu0 0.0
    %2722 = vmatprep.subr.mxu0 0.0
    %2723 = vmatpush1.msra.mxu0 0.0
    %2724 = vmatprep.subr.mxu0 0.0
    %2725 = vmatpush1.msra.mxu0 0.0
    %2726 = vmatprep.subr.mxu0 0.0
    %2727 = vmatpush1.msra.mxu0 0.0
    %2728 = vmatprep.subr.mxu0 0.0
    %2729 = vmatpush1.msra.mxu0 0.0
    %2730 = vmatprep.subr.mxu0 0.0
    %2731 = vmatpush1.msra.mxu0 0.0
    %2732 = vmatprep.subr.mxu0 0.0
    %2733 = vmatpush1.msra.mxu0 0.0
    %2734 = vmatprep.subr.mxu0 0.0
    %2735 = vmatpush1.msra.mxu0 0.0
    %2736 = vmatprep.mubr.f32.mxu0 0.0
    %2737 = vmatmul.mubr.f32.gmra.mrb[0].mxu0 %v2666
    %v2738 = vpop.f32.mrb[0].mxu0
    %v2739 = vadd.f32 0.0, %v2738
    %v2740 = vpop.f32.mrb[0].mxu0
    %v2741 = vadd.f32 0.0, %v2740
    %2742 = vdwg.mxu0
    %2743 = vmatprep.subr.mxu0 %v2432
    %2744 = vmatpush1.msra.mxu0 %v2431
    %2745 = vmatprep.subr.mxu0 %v2436
    %2746 = vmatpush1.msra.mxu0 %v2435
    %2747 = vmatprep.subr.mxu0 %v2440
    %2748 = vmatpush1.msra.mxu0 %v2439
    %2749 = vmatprep.subr.mxu0 %v2444
    %2750 = vmatpush1.msra.mxu0 %v2443
    %2751 = vmatprep.subr.mxu0 %v2448
    %2752 = vmatpush1.msra.mxu0 %v2447
    %2753 = vmatprep.subr.mxu0 %v2452
    %2754 = vmatpush1.msra.mxu0 %v2451
    %2755 = vmatprep.subr.mxu0 %v2456
    %2756 = vmatpush1.msra.mxu0 %v2455
    %2757 = vmatprep.subr.mxu0 %v2460
    %2758 = vmatpush1.msra.mxu0 %v2459
    %2759 = vmatprep.subr.mxu0 %v2464
    %2760 = vmatpush1.msra.mxu0 %v2463
    %2761 = vmatprep.subr.mxu0 %v2468
    %2762 = vmatpush1.msra.mxu0 %v2467
    %2763 = vmatprep.subr.mxu0 %v2472
    %2764 = vmatpush1.msra.mxu0 %v2471
    %2765 = vmatprep.subr.mxu0 %v2476
    %2766 = vmatpush1.msra.mxu0 %v2475
    %2767 = vmatprep.subr.mxu0 %v2480
    %2768 = vmatpush1.msra.mxu0 %v2479
    %2769 = vmatprep.subr.mxu0 %v2484
    %2770 = vmatpush1.msra.mxu0 %v2483
    %2771 = vmatprep.subr.mxu0 %v2488
    %2772 = vmatpush1.msra.mxu0 %v2487
    %2773 = vmatprep.subr.mxu0 %v2492
    %2774 = vmatpush1.msra.mxu0 %v2491
    %2775 = vmatprep.subr.mxu0 0.0
    %2776 = vmatpush1.msra.mxu0 0.0
    %2777 = vmatprep.subr.mxu0 0.0
    %2778 = vmatpush1.msra.mxu0 0.0
    %2779 = vmatprep.subr.mxu0 0.0
    %2780 = vmatpush1.msra.mxu0 0.0
    %2781 = vmatprep.subr.mxu0 0.0
    %2782 = vmatpush1.msra.mxu0 0.0
    %2783 = vmatprep.subr.mxu0 0.0
    %2784 = vmatpush1.msra.mxu0 0.0
    %2785 = vmatprep.subr.mxu0 0.0
    %2786 = vmatpush1.msra.mxu0 0.0
    %2787 = vmatprep.subr.mxu0 0.0
    %2788 = vmatpush1.msra.mxu0 0.0
    %2789 = vmatprep.subr.mxu0 0.0
    %2790 = vmatpush1.msra.mxu0 0.0
    %2791 = vmatprep.subr.mxu0 0.0
    %2792 = vmatpush1.msra.mxu0 0.0
    %2793 = vmatprep.subr.mxu0 0.0
    %2794 = vmatpush1.msra.mxu0 0.0
    %2795 = vmatprep.subr.mxu0 0.0
    %2796 = vmatpush1.msra.mxu0 0.0
    %2797 = vmatprep.subr.mxu0 0.0
    %2798 = vmatpush1.msra.mxu0 0.0
    %2799 = vmatprep.subr.mxu0 0.0
    %2800 = vmatpush1.msra.mxu0 0.0
    %2801 = vmatprep.subr.mxu0 0.0
    %2802 = vmatpush1.msra.mxu0 0.0
    %2803 = vmatprep.subr.mxu0 0.0
    %2804 = vmatpush1.msra.mxu0 0.0
    %2805 = vmatprep.subr.mxu0 0.0
    %2806 = vmatpush1.msra.mxu0 0.0
    %2807 = vmatprep.mubr.f32.mxu0 0.0
    %2808 = vmatmul.mubr.f32.gmra.mrb[0].mxu0 %v2666
    %v2809 = vpop.f32.mrb[0].mxu0
    %v2810 = vadd.f32 0.0, %v2809
    %v2811 = vpop.f32.mrb[0].mxu0
    %v2812 = vadd.f32 0.0, %v2811
    %2813 = vdwg.mxu0
    %v2814 = vadd.f32 %v2668, %v2739
    %v2815 = vadd.f32 %v2669, %v2741
    %v2816 = vadd.f32 %v2670, %v2810
    %v2817 = vadd.f32 %v2671, %v2812
    %v2818 = vxor.u32 %v2814, 2147483648
    %v2819 = vmul.f32 %v2818, 1.442695
    %v2820 = vpow.pop %v2819
    %v2821 = vadd.f32 %v2820, 1.0
    %v2822 = vrcp.pop %v2821
    %v2823 = vmul.f32 1.0, %v2822
    %v2824 = vxor.u32 %v2815, 2147483648
    %v2825 = vmul.f32 %v2824, 1.442695
    %v2826 = vpow.pop %v2825
    %v2827 = vadd.f32 %v2826, 1.0
    %v2828 = vrcp.pop %v2827
    %v2829 = vmul.f32 1.0, %v2828
    %v2830 = vtanh.pop %v2816
    %v2831 = vxor.u32 %v2817, 2147483648
    %v2832 = vmul.f32 %v2831, 1.442695
    %v2833 = vpow.pop %v2832
    %v2834 = vadd.f32 %v2833, 1.0
    %v2835 = vrcp.pop %v2834
    %v2836 = vmul.f32 1.0, %v2835
    %v2837 = vmul.f32 %v2829, %v2664
    %v2838 = vmul.f32 %v2823, %v2830
    %v2839 = vadd.f32 %v2837, %v2838
    %v2840 = vtanh.pop %v2839
    %v2841 = vmul.f32 %v2836, %v2840
    %2842 = vst [vmem:[#allocation3 + $0x8] sm:$0xff] %v2841
    %v2843 = vld [vmem:[#allocation2 + $0x40] sm:$0xff]
    %v2844 = vld [vmem:[#allocation2 + $0x48] sm:$0xff]
    %v2845 = vld [vmem:[#allocation2 + $0x50] sm:$0xff]
    %v2846 = vld [vmem:[#allocation2 + $0x58] sm:$0xff]
    %2847 = vmatprep.subr.mxu0 %v2430
    %2848 = vmatpush1.msra.mxu0 %v2429
    %2849 = vmatprep.subr.mxu0 %v2434
    %2850 = vmatpush1.msra.mxu0 %v2433
    %2851 = vmatprep.subr.mxu0 %v2438
    %2852 = vmatpush1.msra.mxu0 %v2437
    %2853 = vmatprep.subr.mxu0 %v2442
    %2854 = vmatpush1.msra.mxu0 %v2441
    %2855 = vmatprep.subr.mxu0 %v2446
    %2856 = vmatpush1.msra.mxu0 %v2445
    %2857 = vmatprep.subr.mxu0 %v2450
    %2858 = vmatpush1.msra.mxu0 %v2449
    %2859 = vmatprep.subr.mxu0 %v2454
    %2860 = vmatpush1.msra.mxu0 %v2453
    %2861 = vmatprep.subr.mxu0 %v2458
    %2862 = vmatpush1.msra.mxu0 %v2457
    %2863 = vmatprep.subr.mxu0 %v2462
    %2864 = vmatpush1.msra.mxu0 %v2461
    %2865 = vmatprep.subr.mxu0 %v2466
    %2866 = vmatpush1.msra.mxu0 %v2465
    %2867 = vmatprep.subr.mxu0 %v2470
    %2868 = vmatpush1.msra.mxu0 %v2469
    %2869 = vmatprep.subr.mxu0 %v2474
    %2870 = vmatpush1.msra.mxu0 %v2473
    %2871 = vmatprep.subr.mxu0 %v2478
    %2872 = vmatpush1.msra.mxu0 %v2477
    %2873 = vmatprep.subr.mxu0 %v2482
    %2874 = vmatpush1.msra.mxu0 %v2481
    %2875 = vmatprep.subr.mxu0 %v2486
    %2876 = vmatpush1.msra.mxu0 %v2485
    %2877 = vmatprep.subr.mxu0 %v2490
    %2878 = vmatpush1.msra.mxu0 %v2489
    %2879 = vmatprep.subr.mxu0 0.0
    %2880 = vmatpush1.msra.mxu0 0.0
    %2881 = vmatprep.subr.mxu0 0.0
    %2882 = vmatpush1.msra.mxu0 0.0
    %2883 = vmatprep.subr.mxu0 0.0
    %2884 = vmatpush1.msra.mxu0 0.0
    %2885 = vmatprep.subr.mxu0 0.0
    %2886 = vmatpush1.msra.mxu0 0.0
    %2887 = vmatprep.subr.mxu0 0.0
    %2888 = vmatpush1.msra.mxu0 0.0
    %2889 = vmatprep.subr.mxu0 0.0
    %2890 = vmatpush1.msra.mxu0 0.0
    %2891 = vmatprep.subr.mxu0 0.0
    %2892 = vmatpush1.msra.mxu0 0.0
    %2893 = vmatprep.subr.mxu0 0.0
    %2894 = vmatpush1.msra.mxu0 0.0
    %2895 = vmatprep.subr.mxu0 0.0
    %2896 = vmatpush1.msra.mxu0 0.0
    %2897 = vmatprep.subr.mxu0 0.0
    %2898 = vmatpush1.msra.mxu0 0.0
    %2899 = vmatprep.subr.mxu0 0.0
    %2900 = vmatpush1.msra.mxu0 0.0
    %2901 = vmatprep.subr.mxu0 0.0
    %2902 = vmatpush1.msra.mxu0 0.0
    %2903 = vmatprep.subr.mxu0 0.0
    %2904 = vmatpush1.msra.mxu0 0.0
    %2905 = vmatprep.subr.mxu0 0.0
    %2906 = vmatpush1.msra.mxu0 0.0
    %2907 = vmatprep.subr.mxu0 0.0
    %2908 = vmatpush1.msra.mxu0 0.0
    %2909 = vmatprep.subr.mxu0 0.0
    %2910 = vmatpush1.msra.mxu0 0.0
    %2911 = vmatprep.mubr.f32.mxu0 0.0
    %2912 = vmatmul.mubr.f32.gmra.mrb[0].mxu0 %v2841
    %v2913 = vpop.f32.mrb[0].mxu0
    %v2914 = vadd.f32 0.0, %v2913
    %v2915 = vpop.f32.mrb[0].mxu0
    %v2916 = vadd.f32 0.0, %v2915
    %2917 = vdwg.mxu0
    %2918 = vmatprep.subr.mxu0 %v2432
    %2919 = vmatpush1.msra.mxu0 %v2431
    %2920 = vmatprep.subr.mxu0 %v2436
    %2921 = vmatpush1.msra.mxu0 %v2435
    %2922 = vmatprep.subr.mxu0 %v2440
    %2923 = vmatpush1.msra.mxu0 %v2439
    %2924 = vmatprep.subr.mxu0 %v2444
    %2925 = vmatpush1.msra.mxu0 %v2443
    %2926 = vmatprep.subr.mxu0 %v2448
    %2927 = vmatpush1.msra.mxu0 %v2447
    %2928 = vmatprep.subr.mxu0 %v2452
    %2929 = vmatpush1.msra.mxu0 %v2451
    %2930 = vmatprep.subr.mxu0 %v2456
    %2931 = vmatpush1.msra.mxu0 %v2455
    %2932 = vmatprep.subr.mxu0 %v2460
    %2933 = vmatpush1.msra.mxu0 %v2459
    %2934 = vmatprep.subr.mxu0 %v2464
    %2935 = vmatpush1.msra.mxu0 %v2463
    %2936 = vmatprep.subr.mxu0 %v2468
    %2937 = vmatpush1.msra.mxu0 %v2467
    %2938 = vmatprep.subr.mxu0 %v2472
    %2939 = vmatpush1.msra.mxu0 %v2471
    %2940 = vmatprep.subr.mxu0 %v2476
    %2941 = vmatpush1.msra.mxu0 %v2475
    %2942 = vmatprep.subr.mxu0 %v2480
    %2943 = vmatpush1.msra.mxu0 %v2479
    %2944 = vmatprep.subr.mxu0 %v2484
    %2945 = vmatpush1.msra.mxu0 %v2483
    %2946 = vmatprep.subr.mxu0 %v2488
    %2947 = vmatpush1.msra.mxu0 %v2487
    %2948 = vmatprep.subr.mxu0 %v2492
    %2949 = vmatpush1.msra.mxu0 %v2491
    %2950 = vmatprep.subr.mxu0 0.0
    %2951 = vmatpush1.msra.mxu0 0.0
    %2952 = vmatprep.subr.mxu0 0.0
    %2953 = vmatpush1.msra.mxu0 0.0
    %2954 = vmatprep.subr.mxu0 0.0
    %2955 = vmatpush1.msra.mxu0 0.0
    %2956 = vmatprep.subr.mxu0 0.0
    %2957 = vmatpush1.msra.mxu0 0.0
    %2958 = vmatprep.subr.mxu0 0.0
    %2959 = vmatpush1.msra.mxu0 0.0
    %2960 = vmatprep.subr.mxu0 0.0
    %2961 = vmatpush1.msra.mxu0 0.0
    %2962 = vmatprep.subr.mxu0 0.0
    %2963 = vmatpush1.msra.mxu0 0.0
    %2964 = vmatprep.subr.mxu0 0.0
    %2965 = vmatpush1.msra.mxu0 0.0
    %2966 = vmatprep.subr.mxu0 0.0
    %2967 = vmatpush1.msra.mxu0 0.0
    %2968 = vmatprep.subr.mxu0 0.0
    %2969 = vmatpush1.msra.mxu0 0.0
    %2970 = vmatprep.subr.mxu0 0.0
    %2971 = vmatpush1.msra.mxu0 0.0
    %2972 = vmatprep.subr.mxu0 0.0
    %2973 = vmatpush1.msra.mxu0 0.0
    %2974 = vmatprep.subr.mxu0 0.0
    %2975 = vmatpush1.msra.mxu0 0.0
    %2976 = vmatprep.subr.mxu0 0.0
    %2977 = vmatpush1.msra.mxu0 0.0
    %2978 = vmatprep.subr.mxu0 0.0
    %2979 = vmatpush1.msra.mxu0 0.0
    %2980 = vmatprep.subr.mxu0 0.0
    %2981 = vmatpush1.msra.mxu0 0.0
    %2982 = vmatprep.mubr.f32.mxu0 0.0
    %2983 = vmatmul.mubr.f32.gmra.mrb[0].mxu0 %v2841
    %v2984 = vpop.f32.mrb[0].mxu0
    %v2985 = vadd.f32 0.0, %v2984
    %v2986 = vpop.f32.mrb[0].mxu0
    %v2987 = vadd.f32 0.0, %v2986
    %2988 = vdwg.mxu0
    %v2989 = vadd.f32 %v2843, %v2914
    %v2990 = vadd.f32 %v2844, %v2916
    %v2991 = vadd.f32 %v2845, %v2985
    %v2992 = vadd.f32 %v2846, %v2987
    %v2993 = vxor.u32 %v2989, 2147483648
    %v2994 = vmul.f32 %v2993, 1.442695
    %v2995 = vpow.pop %v2994
    %v2996 = vadd.f32 %v2995, 1.0
    %v2997 = vrcp.pop %v2996
    %v2998 = vmul.f32 1.0, %v2997
    %v2999 = vxor.u32 %v2990, 2147483648
    %v3000 = vmul.f32 %v2999, 1.442695
    %v3001 = vpow.pop %v3000
    %v3002 = vadd.f32 %v3001, 1.0
    %v3003 = vrcp.pop %v3002
    %v3004 = vmul.f32 1.0, %v3003
    %v3005 = vtanh.pop %v2991
    %v3006 = vxor.u32 %v2992, 2147483648
    %v3007 = vmul.f32 %v3006, 1.442695
    %v3008 = vpow.pop %v3007
    %v3009 = vadd.f32 %v3008, 1.0
    %v3010 = vrcp.pop %v3009
    %v3011 = vmul.f32 1.0, %v3010
    %v3012 = vmul.f32 %v3004, %v2839
    %v3013 = vmul.f32 %v2998, %v3005
    %v3014 = vadd.f32 %v3012, %v3013
    %v3015 = vtanh.pop %v3014
    %v3016 = vmul.f32 %v3011, %v3015
    %3017 = vst [vmem:[#allocation3 + $0x10] sm:$0xff] %v3016
    %v3018 = vld [vmem:[#allocation2 + $0x60] sm:$0xff]
    %v3019 = vld [vmem:[#allocation2 + $0x68] sm:$0xff]
    %v3020 = vld [vmem:[#allocation2 + $0x70] sm:$0xff]
    %v3021 = vld [vmem:[#allocation2 + $0x78] sm:$0xff]
    %3022 = vmatprep.subr.mxu0 %v2430
    %3023 = vmatpush1.msra.mxu0 %v2429
    %3024 = vmatprep.subr.mxu0 %v2434
    %3025 = vmatpush1.msra.mxu0 %v2433
    %3026 = vmatprep.subr.mxu0 %v2438
    %3027 = vmatpush1.msra.mxu0 %v2437
    %3028 = vmatprep.subr.mxu0 %v2442
    %3029 = vmatpush1.msra.mxu0 %v2441
    %3030 = vmatprep.subr.mxu0 %v2446
    %3031 = vmatpush1.msra.mxu0 %v2445
    %3032 = vmatprep.subr.mxu0 %v2450
    %3033 = vmatpush1.msra.mxu0 %v2449
    %3034 = vmatprep.subr.mxu0 %v2454
    %3035 = vmatpush1.msra.mxu0 %v2453
    %3036 = vmatprep.subr.mxu0 %v2458
    %3037 = vmatpush1.msra.mxu0 %v2457
    %3038 = vmatprep.subr.mxu0 %v2462
    %3039 = vmatpush1.msra.mxu0 %v2461
    %3040 = vmatprep.subr.mxu0 %v2466
    %3041 = vmatpush1.msra.mxu0 %v2465
    %3042 = vmatprep.subr.mxu0 %v2470
    %3043 = vmatpush1.msra.mxu0 %v2469
    %3044 = vmatprep.subr.mxu0 %v2474
    %3045 = vmatpush1.msra.mxu0 %v2473
    %3046 = vmatprep.subr.mxu0 %v2478
    %3047 = vmatpush1.msra.mxu0 %v2477
    %3048 = vmatprep.subr.mxu0 %v2482
    %3049 = vmatpush1.msra.mxu0 %v2481
    %3050 = vmatprep.subr.mxu0 %v2486
    %3051 = vmatpush1.msra.mxu0 %v2485
    %3052 = vmatprep.subr.mxu0 %v2490
    %3053 = vmatpush1.msra.mxu0 %v2489
    %3054 = vmatprep.subr.mxu0 0.0
    %3055 = vmatpush1.msra.mxu0 0.0
    %3056 = vmatprep.subr.mxu0 0.0
    %3057 = vmatpush1.msra.mxu0 0.0
    %3058 = vmatprep.subr.mxu0 0.0
    %3059 = vmatpush1.msra.mxu0 0.0
    %3060 = vmatprep.subr.mxu0 0.0
    %3061 = vmatpush1.msra.mxu0 0.0
    %3062 = vmatprep.subr.mxu0 0.0
    %3063 = vmatpush1.msra.mxu0 0.0
    %3064 = vmatprep.subr.mxu0 0.0
    %3065 = vmatpush1.msra.mxu0 0.0
    %3066 = vmatprep.subr.mxu0 0.0
    %3067 = vmatpush1.msra.mxu0 0.0
    %3068 = vmatprep.subr.mxu0 0.0
    %3069 = vmatpush1.msra.mxu0 0.0
    %3070 = vmatprep.subr.mxu0 0.0
    %3071 = vmatpush1.msra.mxu0 0.0
    %3072 = vmatprep.subr.mxu0 0.0
    %3073 = vmatpush1.msra.mxu0 0.0
    %3074 = vmatprep.subr.mxu0 0.0
    %3075 = vmatpush1.msra.mxu0 0.0
    %3076 = vmatprep.subr.mxu0 0.0
    %3077 = vmatpush1.msra.mxu0 0.0
    %3078 = vmatprep.subr.mxu0 0.0
    %3079 = vmatpush1.msra.mxu0 0.0
    %3080 = vmatprep.subr.mxu0 0.0
    %3081 = vmatpush1.msra.mxu0 0.0
    %3082 = vmatprep.subr.mxu0 0.0
    %3083 = vmatpush1.msra.mxu0 0.0
    %3084 = vmatprep.subr.mxu0 0.0
    %3085 = vmatpush1.msra.mxu0 0.0
    %3086 = vmatprep.mubr.f32.mxu0 0.0
    %3087 = vmatmul.mubr.f32.gmra.mrb[0].mxu0 %v3016
    %v3088 = vpop.f32.mrb[0].mxu0
    %v3089 = vadd.f32 0.0, %v3088
    %v3090 = vpop.f32.mrb[0].mxu0
    %v3091 = vadd.f32 0.0, %v3090
    %3092 = vdwg.mxu0
    %3093 = vmatprep.subr.mxu0 %v2432
    %3094 = vmatpush1.msra.mxu0 %v2431
    %3095 = vmatprep.subr.mxu0 %v2436
    %3096 = vmatpush1.msra.mxu0 %v2435
    %3097 = vmatprep.subr.mxu0 %v2440
    %3098 = vmatpush1.msra.mxu0 %v2439
    %3099 = vmatprep.subr.mxu0 %v2444
    %3100 = vmatpush1.msra.mxu0 %v2443
    %3101 = vmatprep.subr.mxu0 %v2448
    %3102 = vmatpush1.msra.mxu0 %v2447
    %3103 = vmatprep.subr.mxu0 %v2452
    %3104 = vmatpush1.msra.mxu0 %v2451
    %3105 = vmatprep.subr.mxu0 %v2456
    %3106 = vmatpush1.msra.mxu0 %v2455
    %3107 = vmatprep.subr.mxu0 %v2460
    %3108 = vmatpush1.msra.mxu0 %v2459
    %3109 = vmatprep.subr.mxu0 %v2464
    %3110 = vmatpush1.msra.mxu0 %v2463
    %3111 = vmatprep.subr.mxu0 %v2468
    %3112 = vmatpush1.msra.mxu0 %v2467
    %3113 = vmatprep.subr.mxu0 %v2472
    %3114 = vmatpush1.msra.mxu0 %v2471
    %3115 = vmatprep.subr.mxu0 %v2476
    %3116 = vmatpush1.msra.mxu0 %v2475
    %3117 = vmatprep.subr.mxu0 %v2480
    %3118 = vmatpush1.msra.mxu0 %v2479
    %3119 = vmatprep.subr.mxu0 %v2484
    %3120 = vmatpush1.msra.mxu0 %v2483
    %3121 = vmatprep.subr.mxu0 %v2488
    %3122 = vmatpush1.msra.mxu0 %v2487
    %3123 = vmatprep.subr.mxu0 %v2492
    %3124 = vmatpush1.msra.mxu0 %v2491
    %3125 = vmatprep.subr.mxu0 0.0
    %3126 = vmatpush1.msra.mxu0 0.0
    %3127 = vmatprep.subr.mxu0 0.0
    %3128 = vmatpush1.msra.mxu0 0.0
    %3129 = vmatprep.subr.mxu0 0.0
    %3130 = vmatpush1.msra.mxu0 0.0
    %3131 = vmatprep.subr.mxu0 0.0
    %3132 = vmatpush1.msra.mxu0 0.0
    %3133 = vmatprep.subr.mxu0 0.0
    %3134 = vmatpush1.msra.mxu0 0.0
    %3135 = vmatprep.subr.mxu0 0.0
    %3136 = vmatpush1.msra.mxu0 0.0
    %3137 = vmatprep.subr.mxu0 0.0
    %3138 = vmatpush1.msra.mxu0 0.0
    %3139 = vmatprep.subr.mxu0 0.0
    %3140 = vmatpush1.msra.mxu0 0.0
    %3141 = vmatprep.subr.mxu0 0.0
    %3142 = vmatpush1.msra.mxu0 0.0
    %3143 = vmatprep.subr.mxu0 0.0
    %3144 = vmatpush1.msra.mxu0 0.0
    %3145 = vmatprep.subr.mxu0 0.0
    %3146 = vmatpush1.msra.mxu0 0.0
    %3147 = vmatprep.subr.mxu0 0.0
    %3148 = vmatpush1.msra.mxu0 0.0
    %3149 = vmatprep.subr.mxu0 0.0
    %3150 = vmatpush1.msra.mxu0 0.0
    %3151 = vmatprep.subr.mxu0 0.0
    %3152 = vmatpush1.msra.mxu0 0.0
    %3153 = vmatprep.subr.mxu0 0.0
    %3154 = vmatpush1.msra.mxu0 0.0
    %3155 = vmatprep.subr.mxu0 0.0
    %3156 = vmatpush1.msra.mxu0 0.0
    %3157 = vmatprep.mubr.f32.mxu0 0.0
    %3158 = vmatmul.mubr.f32.gmra.mrb[0].mxu0 %v3016
    %v3159 = vpop.f32.mrb[0].mxu0
    %v3160 = vadd.f32 0.0, %v3159
    %v3161 = vpop.f32.mrb[0].mxu0
    %v3162 = vadd.f32 0.0, %v3161
    %3163 = vdwg.mxu0
    %v3164 = vadd.f32 %v3018, %v3089
    %v3165 = vadd.f32 %v3019, %v3091
    %v3166 = vadd.f32 %v3020, %v3160
    %v3167 = vadd.f32 %v3021, %v3162
    %v3168 = vxor.u32 %v3164, 2147483648
    %v3169 = vmul.f32 %v3168, 1.442695
    %v3170 = vpow.pop %v3169
    %v3171 = vadd.f32 %v3170, 1.0
    %v3172 = vrcp.pop %v3171
    %v3173 = vmul.f32 1.0, %v3172
    %v3174 = vxor.u32 %v3165, 2147483648
    %v3175 = vmul.f32 %v3174, 1.442695
    %v3176 = vpow.pop %v3175
    %v3177 = vadd.f32 %v3176, 1.0
    %v3178 = vrcp.pop %v3177
    %v3179 = vmul.f32 1.0, %v3178
    %v3180 = vtanh.pop %v3166
    %v3181 = vxor.u32 %v3167, 2147483648
    %v3182 = vmul.f32 %v3181, 1.442695
    %v3183 = vpow.pop %v3182
    %v3184 = vadd.f32 %v3183, 1.0
    %v3185 = vrcp.pop %v3184
    %v3186 = vmul.f32 1.0, %v3185
    %v3187 = vmul.f32 %v3179, %v3014
    %v3188 = vmul.f32 %v3173, %v3180
    %v3189 = vadd.f32 %v3187, %v3188
    %v3190 = vtanh.pop %v3189
    %v3191 = vmul.f32 %v3186, %v3190
    %3192 = vst [vmem:[#allocation3 + $0x18] sm:$0xff] %v3191
    %v3193 = vld [vmem:[#allocation2 + $0x80] sm:$0xff]
    %v3194 = vld [vmem:[#allocation2 + $0x88] sm:$0xff]
    %v3195 = vld [vmem:[#allocation2 + $0x90] sm:$0xff]
    %v3196 = vld [vmem:[#allocation2 + $0x98] sm:$0xff]
    %3197 = vmatprep.subr.mxu0 %v2430
    %3198 = vmatpush1.msra.mxu0 %v2429
    %3199 = vmatprep.subr.mxu0 %v2434
    %3200 = vmatpush1.msra.mxu0 %v2433
    %3201 = vmatprep.subr.mxu0 %v2438
    %3202 = vmatpush1.msra.mxu0 %v2437
    %3203 = vmatprep.subr.mxu0 %v2442
    %3204 = vmatpush1.msra.mxu0 %v2441
    %3205 = vmatprep.subr.mxu0 %v2446
    %3206 = vmatpush1.msra.mxu0 %v2445
    %3207 = vmatprep.subr.mxu0 %v2450
    %3208 = vmatpush1.msra.mxu0 %v2449
    %3209 = vmatprep.subr.mxu0 %v2454
    %3210 = vmatpush1.msra.mxu0 %v2453
    %3211 = vmatprep.subr.mxu0 %v2458
    %3212 = vmatpush1.msra.mxu0 %v2457
    %3213 = vmatprep.subr.mxu0 %v2462
    %3214 = vmatpush1.msra.mxu0 %v2461
    %3215 = vmatprep.subr.mxu0 %v2466
    %3216 = vmatpush1.msra.mxu0 %v2465
    %3217 = vmatprep.subr.mxu0 %v2470
    %3218 = vmatpush1.msra.mxu0 %v2469
    %3219 = vmatprep.subr.mxu0 %v2474
    %3220 = vmatpush1.msra.mxu0 %v2473
    %3221 = vmatprep.subr.mxu0 %v2478
    %3222 = vmatpush1.msra.mxu0 %v2477
    %3223 = vmatprep.subr.mxu0 %v2482
    %3224 = vmatpush1.msra.mxu0 %v2481
    %3225 = vmatprep.subr.mxu0 %v2486
    %3226 = vmatpush1.msra.mxu0 %v2485
    %3227 = vmatprep.subr.mxu0 %v2490
    %3228 = vmatpush1.msra.mxu0 %v2489
    %3229 = vmatprep.subr.mxu0 0.0
    %3230 = vmatpush1.msra.mxu0 0.0
    %3231 = vmatprep.subr.mxu0 0.0
    %3232 = vmatpush1.msra.mxu0 0.0
    %3233 = vmatprep.subr.mxu0 0.0
    %3234 = vmatpush1.msra.mxu0 0.0
    %3235 = vmatprep.subr.mxu0 0.0
    %3236 = vmatpush1.msra.mxu0 0.0
    %3237 = vmatprep.subr.mxu0 0.0
    %3238 = vmatpush1.msra.mxu0 0.0
    %3239 = vmatprep.subr.mxu0 0.0
    %3240 = vmatpush1.msra.mxu0 0.0
    %3241 = vmatprep.subr.mxu0 0.0
    %3242 = vmatpush1.msra.mxu0 0.0
    %3243 = vmatprep.subr.mxu0 0.0
    %3244 = vmatpush1.msra.mxu0 0.0
    %3245 = vmatprep.subr.mxu0 0.0
    %3246 = vmatpush1.msra.mxu0 0.0
    %3247 = vmatprep.subr.mxu0 0.0
    %3248 = vmatpush1.msra.mxu0 0.0
    %3249 = vmatprep.subr.mxu0 0.0
    %3250 = vmatpush1.msra.mxu0 0.0
    %3251 = vmatprep.subr.mxu0 0.0
    %3252 = vmatpush1.msra.mxu0 0.0
    %3253 = vmatprep.subr.mxu0 0.0
    %3254 = vmatpush1.msra.mxu0 0.0
    %3255 = vmatprep.subr.mxu0 0.0
    %3256 = vmatpush1.msra.mxu0 0.0
    %3257 = vmatprep.subr.mxu0 0.0
    %3258 = vmatpush1.msra.mxu0 0.0
    %3259 = vmatprep.subr.mxu0 0.0
    %3260 = vmatpush1.msra.mxu0 0.0
    %3261 = vmatprep.mubr.f32.mxu0 0.0
    %3262 = vmatmul.mubr.f32.gmra.mrb[0].mxu0 %v3191
    %v3263 = vpop.f32.mrb[0].mxu0
    %v3264 = vadd.f32 0.0, %v3263
    %v3265 = vpop.f32.mrb[0].mxu0
    %v3266 = vadd.f32 0.0, %v3265
    %3267 = vdwg.mxu0
    %3268 = vmatprep.subr.mxu0 %v2432
    %3269 = vmatpush1.msra.mxu0 %v2431
    %3270 = vmatprep.subr.mxu0 %v2436
    %3271 = vmatpush1.msra.mxu0 %v2435
    %3272 = vmatprep.subr.mxu0 %v2440
    %3273 = vmatpush1.msra.mxu0 %v2439
    %3274 = vmatprep.subr.mxu0 %v2444
    %3275 = vmatpush1.msra.mxu0 %v2443
    %3276 = vmatprep.subr.mxu0 %v2448
    %3277 = vmatpush1.msra.mxu0 %v2447
    %3278 = vmatprep.subr.mxu0 %v2452
    %3279 = vmatpush1.msra.mxu0 %v2451
    %3280 = vmatprep.subr.mxu0 %v2456
    %3281 = vmatpush1.msra.mxu0 %v2455
    %3282 = vmatprep.subr.mxu0 %v2460
    %3283 = vmatpush1.msra.mxu0 %v2459
    %3284 = vmatprep.subr.mxu0 %v2464
    %3285 = vmatpush1.msra.mxu0 %v2463
    %3286 = vmatprep.subr.mxu0 %v2468
    %3287 = vmatpush1.msra.mxu0 %v2467
    %3288 = vmatprep.subr.mxu0 %v2472
    %3289 = vmatpush1.msra.mxu0 %v2471
    %3290 = vmatprep.subr.mxu0 %v2476
    %3291 = vmatpush1.msra.mxu0 %v2475
    %3292 = vmatprep.subr.mxu0 %v2480
    %3293 = vmatpush1.msra.mxu0 %v2479
    %3294 = vmatprep.subr.mxu0 %v2484
    %3295 = vmatpush1.msra.mxu0 %v2483
    %3296 = vmatprep.subr.mxu0 %v2488
    %3297 = vmatpush1.msra.mxu0 %v2487
    %3298 = vmatprep.subr.mxu0 %v2492
    %3299 = vmatpush1.msra.mxu0 %v2491
    %3300 = vmatprep.subr.mxu0 0.0
    %3301 = vmatpush1.msra.mxu0 0.0
    %3302 = vmatprep.subr.mxu0 0.0
    %3303 = vmatpush1.msra.mxu0 0.0
    %3304 = vmatprep.subr.mxu0 0.0
    %3305 = vmatpush1.msra.mxu0 0.0
    %3306 = vmatprep.subr.mxu0 0.0
    %3307 = vmatpush1.msra.mxu0 0.0
    %3308 = vmatprep.subr.mxu0 0.0
    %3309 = vmatpush1.msra.mxu0 0.0
    %3310 = vmatprep.subr.mxu0 0.0
    %3311 = vmatpush1.msra.mxu0 0.0
    %3312 = vmatprep.subr.mxu0 0.0
    %3313 = vmatpush1.msra.mxu0 0.0
    %3314 = vmatprep.subr.mxu0 0.0
    %3315 = vmatpush1.msra.mxu0 0.0
    %3316 = vmatprep.subr.mxu0 0.0
    %3317 = vmatpush1.msra.mxu0 0.0
    %3318 = vmatprep.subr.mxu0 0.0
    %3319 = vmatpush1.msra.mxu0 0.0
    %3320 = vmatprep.subr.mxu0 0.0
    %3321 = vmatpush1.msra.mxu0 0.0
    %3322 = vmatprep.subr.mxu0 0.0
    %3323 = vmatpush1.msra.mxu0 0.0
    %3324 = vmatprep.subr.mxu0 0.0
    %3325 = vmatpush1.msra.mxu0 0.0
    %3326 = vmatprep.subr.mxu0 0.0
    %3327 = vmatpush1.msra.mxu0 0.0
    %3328 = vmatprep.subr.mxu0 0.0
    %3329 = vmatpush1.msra.mxu0 0.0
    %3330 = vmatprep.subr.mxu0 0.0
    %3331 = vmatpush1.msra.mxu0 0.0
    %3332 = vmatprep.mubr.f32.mxu0 0.0
    %3333 = vmatmul.mubr.f32.gmra.mrb[0].mxu0 %v3191
    %v3334 = vpop.f32.mrb[0].mxu0
    %v3335 = vadd.f32 0.0, %v3334
    %v3336 = vpop.f32.mrb[0].mxu0
    %v3337 = vadd.f32 0.0, %v3336
    %3338 = vdwg.mxu0
    %v3339 = vadd.f32 %v3193, %v3264
    %v3340 = vadd.f32 %v3194, %v3266
    %v3341 = vadd.f32 %v3195, %v3335
    %v3342 = vadd.f32 %v3196, %v3337
    %v3343 = vxor.u32 %v3339, 2147483648
    %v3344 = vmul.f32 %v3343, 1.442695
    %v3345 = vpow.pop %v3344
    %v3346 = vadd.f32 %v3345, 1.0
    %v3347 = vrcp.pop %v3346
    %v3348 = vmul.f32 1.0, %v3347
    %v3349 = vxor.u32 %v3340, 2147483648
    %v3350 = vmul.f32 %v3349, 1.442695
    %v3351 = vpow.pop %v3350
    %v3352 = vadd.f32 %v3351, 1.0
    %v3353 = vrcp.pop %v3352
    %v3354 = vmul.f32 1.0, %v3353
    %v3355 = vtanh.pop %v3341
    %v3356 = vxor.u32 %v3342, 2147483648
    %v3357 = vmul.f32 %v3356, 1.442695
    %v3358 = vpow.pop %v3357
    %v3359 = vadd.f32 %v3358, 1.0
    %v3360 = vrcp.pop %v3359
    %v3361 = vmul.f32 1.0, %v3360
    %v3362 = vmul.f32 %v3354, %v3189
    %v3363 = vmul.f32 %v3348, %v3355
    %v3364 = vadd.f32 %v3362, %v3363
    %v3365 = vtanh.pop %v3364
    %v3366 = vmul.f32 %v3361, %v3365
    %3367 = vst [vmem:[#allocation3 + $0x20] sm:$0xff] %v3366
    %v3368 = vld [vmem:[#allocation2 + $0xa0] sm:$0xff]
    %v3369 = vld [vmem:[#allocation2 + $0xa8] sm:$0xff]
    %v3370 = vld [vmem:[#allocation2 + $0xb0] sm:$0xff]
    %v3371 = vld [vmem:[#allocation2 + $0xb8] sm:$0xff]
    %3372 = vmatprep.subr.mxu0 %v2430
    %3373 = vmatpush1.msra.mxu0 %v2429
    %3374 = vmatprep.subr.mxu0 %v2434
    %3375 = vmatpush1.msra.mxu0 %v2433
    %3376 = vmatprep.subr.mxu0 %v2438
    %3377 = vmatpush1.msra.mxu0 %v2437
    %3378 = vmatprep.subr.mxu0 %v2442
    %3379 = vmatpush1.msra.mxu0 %v2441
    %3380 = vmatprep.subr.mxu0 %v2446
    %3381 = vmatpush1.msra.mxu0 %v2445
    %3382 = vmatprep.subr.mxu0 %v2450
    %3383 = vmatpush1.msra.mxu0 %v2449
    %3384 = vmatprep.subr.mxu0 %v2454
    %3385 = vmatpush1.msra.mxu0 %v2453
    %3386 = vmatprep.subr.mxu0 %v2458
    %3387 = vmatpush1.msra.mxu0 %v2457
    %3388 = vmatprep.subr.mxu0 %v2462
    %3389 = vmatpush1.msra.mxu0 %v2461
    %3390 = vmatprep.subr.mxu0 %v2466
    %3391 = vmatpush1.msra.mxu0 %v2465
    %3392 = vmatprep.subr.mxu0 %v2470
    %3393 = vmatpush1.msra.mxu0 %v2469
    %3394 = vmatprep.subr.mxu0 %v2474
    %3395 = vmatpush1.msra.mxu0 %v2473
    %3396 = vmatprep.subr.mxu0 %v2478
    %3397 = vmatpush1.msra.mxu0 %v2477
    %3398 = vmatprep.subr.mxu0 %v2482
    %3399 = vmatpush1.msra.mxu0 %v2481
    %3400 = vmatprep.subr.mxu0 %v2486
    %3401 = vmatpush1.msra.mxu0 %v2485
    %3402 = vmatprep.subr.mxu0 %v2490
    %3403 = vmatpush1.msra.mxu0 %v2489
    %3404 = vmatprep.subr.mxu0 0.0
    %3405 = vmatpush1.msra.mxu0 0.0
    %3406 = vmatprep.subr.mxu0 0.0
    %3407 = vmatpush1.msra.mxu0 0.0
    %3408 = vmatprep.subr.mxu0 0.0
    %3409 = vmatpush1.msra.mxu0 0.0
    %3410 = vmatprep.subr.mxu0 0.0
    %3411 = vmatpush1.msra.mxu0 0.0
    %3412 = vmatprep.subr.mxu0 0.0
    %3413 = vmatpush1.msra.mxu0 0.0
    %3414 = vmatprep.subr.mxu0 0.0
    %3415 = vmatpush1.msra.mxu0 0.0
    %3416 = vmatprep.subr.mxu0 0.0
    %3417 = vmatpush1.msra.mxu0 0.0
    %3418 = vmatprep.subr.mxu0 0.0
    %3419 = vmatpush1.msra.mxu0 0.0
    %3420 = vmatprep.subr.mxu0 0.0
    %3421 = vmatpush1.msra.mxu0 0.0
    %3422 = vmatprep.subr.mxu0 0.0
    %3423 = vmatpush1.msra.mxu0 0.0
    %3424 = vmatprep.subr.mxu0 0.0
    %3425 = vmatpush1.msra.mxu0 0.0
    %3426 = vmatprep.subr.mxu0 0.0
    %3427 = vmatpush1.msra.mxu0 0.0
    %3428 = vmatprep.subr.mxu0 0.0
    %3429 = vmatpush1.msra.mxu0 0.0
    %3430 = vmatprep.subr.mxu0 0.0
    %3431 = vmatpush1.msra.mxu0 0.0
    %3432 = vmatprep.subr.mxu0 0.0
    %3433 = vmatpush1.msra.mxu0 0.0
    %3434 = vmatprep.subr.mxu0 0.0
    %3435 = vmatpush1.msra.mxu0 0.0
    %3436 = vmatprep.mubr.f32.mxu0 0.0
    %3437 = vmatmul.mubr.f32.gmra.mrb[0].mxu0 %v3366
    %v3438 = vpop.f32.mrb[0].mxu0
    %v3439 = vadd.f32 0.0, %v3438
    %v3440 = vpop.f32.mrb[0].mxu0
    %v3441 = vadd.f32 0.0, %v3440
    %3442 = vdwg.mxu0
    %3443 = vmatprep.subr.mxu0 %v2432
    %3444 = vmatpush1.msra.mxu0 %v2431
    %3445 = vmatprep.subr.mxu0 %v2436
    %3446 = vmatpush1.msra.mxu0 %v2435
    %3447 = vmatprep.subr.mxu0 %v2440
    %3448 = vmatpush1.msra.mxu0 %v2439
    %3449 = vmatprep.subr.mxu0 %v2444
    %3450 = vmatpush1.msra.mxu0 %v2443
    %3451 = vmatprep.subr.mxu0 %v2448
    %3452 = vmatpush1.msra.mxu0 %v2447
    %3453 = vmatprep.subr.mxu0 %v2452
    %3454 = vmatpush1.msra.mxu0 %v2451
    %3455 = vmatprep.subr.mxu0 %v2456
    %3456 = vmatpush1.msra.mxu0 %v2455
    %3457 = vmatprep.subr.mxu0 %v2460
    %3458 = vmatpush1.msra.mxu0 %v2459
    %3459 = vmatprep.subr.mxu0 %v2464
    %3460 = vmatpush1.msra.mxu0 %v2463
    %3461 = vmatprep.subr.mxu0 %v2468
    %3462 = vmatpush1.msra.mxu0 %v2467
    %3463 = vmatprep.subr.mxu0 %v2472
    %3464 = vmatpush1.msra.mxu0 %v2471
    %3465 = vmatprep.subr.mxu0 %v2476
    %3466 = vmatpush1.msra.mxu0 %v2475
    %3467 = vmatprep.subr.mxu0 %v2480
    %3468 = vmatpush1.msra.mxu0 %v2479
    %3469 = vmatprep.subr.mxu0 %v2484
    %3470 = vmatpush1.msra.mxu0 %v2483
    %3471 = vmatprep.subr.mxu0 %v2488
    %3472 = vmatpush1.msra.mxu0 %v2487
    %3473 = vmatprep.subr.mxu0 %v2492
    %3474 = vmatpush1.msra.mxu0 %v2491
    %3475 = vmatprep.subr.mxu0 0.0
    %3476 = vmatpush1.msra.mxu0 0.0
    %3477 = vmatprep.subr.mxu0 0.0
    %3478 = vmatpush1.msra.mxu0 0.0
    %3479 = vmatprep.subr.mxu0 0.0
    %3480 = vmatpush1.msra.mxu0 0.0
    %3481 = vmatprep.subr.mxu0 0.0
    %3482 = vmatpush1.msra.mxu0 0.0
    %3483 = vmatprep.subr.mxu0 0.0
    %3484 = vmatpush1.msra.mxu0 0.0
    %3485 = vmatprep.subr.mxu0 0.0
    %3486 = vmatpush1.msra.mxu0 0.0
    %3487 = vmatprep.subr.mxu0 0.0
    %3488 = vmatpush1.msra.mxu0 0.0
    %3489 = vmatprep.subr.mxu0 0.0
    %3490 = vmatpush1.msra.mxu0 0.0
    %3491 = vmatprep.subr.mxu0 0.0
    %3492 = vmatpush1.msra.mxu0 0.0
    %3493 = vmatprep.subr.mxu0 0.0
    %3494 = vmatpush1.msra.mxu0 0.0
    %3495 = vmatprep.subr.mxu0 0.0
    %3496 = vmatpush1.msra.mxu0 0.0
    %3497 = vmatprep.subr.mxu0 0.0
    %3498 = vmatpush1.msra.mxu0 0.0
    %3499 = vmatprep.subr.mxu0 0.0
    %3500 = vmatpush1.msra.mxu0 0.0
    %3501 = vmatprep.subr.mxu0 0.0
    %3502 = vmatpush1.msra.mxu0 0.0
    %3503 = vmatprep.subr.mxu0 0.0
    %3504 = vmatpush1.msra.mxu0 0.0
    %3505 = vmatprep.subr.mxu0 0.0
    %3506 = vmatpush1.msra.mxu0 0.0
    %3507 = vmatprep.mubr.f32.mxu0 0.0
    %3508 = vmatmul.mubr.f32.gmra.mrb[0].mxu0 %v3366
    %v3509 = vpop.f32.mrb[0].mxu0
    %v3510 = vadd.f32 0.0, %v3509
    %v3511 = vpop.f32.mrb[0].mxu0
    %v3512 = vadd.f32 0.0, %v3511
    %3513 = vdwg.mxu0
    %v3514 = vadd.f32 %v3368, %v3439
    %v3515 = vadd.f32 %v3369, %v3441
    %v3516 = vadd.f32 %v3370, %v3510
    %v3517 = vadd.f32 %v3371, %v3512
    %v3518 = vxor.u32 %v3514, 2147483648
    %v3519 = vmul.f32 %v3518, 1.442695
    %v3520 = vpow.pop %v3519
    %v3521 = vadd.f32 %v3520, 1.0
    %v3522 = vrcp.pop %v3521
    %v3523 = vmul.f32 1.0, %v3522
    %v3524 = vxor.u32 %v3515, 2147483648
    %v3525 = vmul.f32 %v3524, 1.442695
    %v3526 = vpow.pop %v3525
    %v3527 = vadd.f32 %v3526, 1.0
    %v3528 = vrcp.pop %v3527
    %v3529 = vmul.f32 1.0, %v3528
    %v3530 = vtanh.pop %v3516
    %v3531 = vxor.u32 %v3517, 2147483648
    %v3532 = vmul.f32 %v3531, 1.442695
    %v3533 = vpow.pop %v3532
    %v3534 = vadd.f32 %v3533, 1.0
    %v3535 = vrcp.pop %v3534
    %v3536 = vmul.f32 1.0, %v3535
    %v3537 = vmul.f32 %v3529, %v3364
    %v3538 = vmul.f32 %v3523, %v3530
    %v3539 = vadd.f32 %v3537, %v3538
    %v3540 = vtanh.pop %v3539
    %v3541 = vmul.f32 %v3536, %v3540
    %3542 = vst [vmem:[#allocation3 + $0x28] sm:$0xff] %v3541
    %v3543 = vld [vmem:[#allocation2 + $0xc0] sm:$0xff]
    %v3544 = vld [vmem:[#allocation2 + $0xc8] sm:$0xff]
    %v3545 = vld [vmem:[#allocation2 + $0xd0] sm:$0xff]
    %v3546 = vld [vmem:[#allocation2 + $0xd8] sm:$0xff]
    %3547 = vmatprep.subr.mxu0 %v2430
    %3548 = vmatpush1.msra.mxu0 %v2429
    %3549 = vmatprep.subr.mxu0 %v2434
    %3550 = vmatpush1.msra.mxu0 %v2433
    %3551 = vmatprep.subr.mxu0 %v2438
    %3552 = vmatpush1.msra.mxu0 %v2437
    %3553 = vmatprep.subr.mxu0 %v2442
    %3554 = vmatpush1.msra.mxu0 %v2441
    %3555 = vmatprep.subr.mxu0 %v2446
    %3556 = vmatpush1.msra.mxu0 %v2445
    %3557 = vmatprep.subr.mxu0 %v2450
    %3558 = vmatpush1.msra.mxu0 %v2449
    %3559 = vmatprep.subr.mxu0 %v2454
    %3560 = vmatpush1.msra.mxu0 %v2453
    %3561 = vmatprep.subr.mxu0 %v2458
    %3562 = vmatpush1.msra.mxu0 %v2457
    %3563 = vmatprep.subr.mxu0 %v2462
    %3564 = vmatpush1.msra.mxu0 %v2461
    %3565 = vmatprep.subr.mxu0 %v2466
    %3566 = vmatpush1.msra.mxu0 %v2465
    %3567 = vmatprep.subr.mxu0 %v2470
    %3568 = vmatpush1.msra.mxu0 %v2469
    %3569 = vmatprep.subr.mxu0 %v2474
    %3570 = vmatpush1.msra.mxu0 %v2473
    %3571 = vmatprep.subr.mxu0 %v2478
    %3572 = vmatpush1.msra.mxu0 %v2477
    %3573 = vmatprep.subr.mxu0 %v2482
    %3574 = vmatpush1.msra.mxu0 %v2481
    %3575 = vmatprep.subr.mxu0 %v2486
    %3576 = vmatpush1.msra.mxu0 %v2485
    %3577 = vmatprep.subr.mxu0 %v2490
    %3578 = vmatpush1.msra.mxu0 %v2489
    %3579 = vmatprep.subr.mxu0 0.0
    %3580 = vmatpush1.msra.mxu0 0.0
    %3581 = vmatprep.subr.mxu0 0.0
    %3582 = vmatpush1.msra.mxu0 0.0
    %3583 = vmatprep.subr.mxu0 0.0
    %3584 = vmatpush1.msra.mxu0 0.0
    %3585 = vmatprep.subr.mxu0 0.0
    %3586 = vmatpush1.msra.mxu0 0.0
    %3587 = vmatprep.subr.mxu0 0.0
    %3588 = vmatpush1.msra.mxu0 0.0
    %3589 = vmatprep.subr.mxu0 0.0
    %3590 = vmatpush1.msra.mxu0 0.0
    %3591 = vmatprep.subr.mxu0 0.0
    %3592 = vmatpush1.msra.mxu0 0.0
    %3593 = vmatprep.subr.mxu0 0.0
    %3594 = vmatpush1.msra.mxu0 0.0
    %3595 = vmatprep.subr.mxu0 0.0
    %3596 = vmatpush1.msra.mxu0 0.0
    %3597 = vmatprep.subr.mxu0 0.0
    %3598 = vmatpush1.msra.mxu0 0.0
    %3599 = vmatprep.subr.mxu0 0.0
    %3600 = vmatpush1.msra.mxu0 0.0
    %3601 = vmatprep.subr.mxu0 0.0
    %3602 = vmatpush1.msra.mxu0 0.0
    %3603 = vmatprep.subr.mxu0 0.0
    %3604 = vmatpush1.msra.mxu0 0.0
    %3605 = vmatprep.subr.mxu0 0.0
    %3606 = vmatpush1.msra.mxu0 0.0
    %3607 = vmatprep.subr.mxu0 0.0
    %3608 = vmatpush1.msra.mxu0 0.0
    %3609 = vmatprep.subr.mxu0 0.0
    %3610 = vmatpush1.msra.mxu0 0.0
    %3611 = vmatprep.mubr.f32.mxu0 0.0
    %3612 = vmatmul.mubr.f32.gmra.mrb[0].mxu0 %v3541
    %v3613 = vpop.f32.mrb[0].mxu0
    %v3614 = vadd.f32 0.0, %v3613
    %v3615 = vpop.f32.mrb[0].mxu0
    %v3616 = vadd.f32 0.0, %v3615
    %3617 = vdwg.mxu0
    %3618 = vmatprep.subr.mxu0 %v2432
    %3619 = vmatpush1.msra.mxu0 %v2431
    %3620 = vmatprep.subr.mxu0 %v2436
    %3621 = vmatpush1.msra.mxu0 %v2435
    %3622 = vmatprep.subr.mxu0 %v2440
    %3623 = vmatpush1.msra.mxu0 %v2439
    %3624 = vmatprep.subr.mxu0 %v2444
    %3625 = vmatpush1.msra.mxu0 %v2443
    %3626 = vmatprep.subr.mxu0 %v2448
    %3627 = vmatpush1.msra.mxu0 %v2447
    %3628 = vmatprep.subr.mxu0 %v2452
    %3629 = vmatpush1.msra.mxu0 %v2451
    %3630 = vmatprep.subr.mxu0 %v2456
    %3631 = vmatpush1.msra.mxu0 %v2455
    %3632 = vmatprep.subr.mxu0 %v2460
    %3633 = vmatpush1.msra.mxu0 %v2459
    %3634 = vmatprep.subr.mxu0 %v2464
    %3635 = vmatpush1.msra.mxu0 %v2463
    %3636 = vmatprep.subr.mxu0 %v2468
    %3637 = vmatpush1.msra.mxu0 %v2467
    %3638 = vmatprep.subr.mxu0 %v2472
    %3639 = vmatpush1.msra.mxu0 %v2471
    %3640 = vmatprep.subr.mxu0 %v2476
    %3641 = vmatpush1.msra.mxu0 %v2475
    %3642 = vmatprep.subr.mxu0 %v2480
    %3643 = vmatpush1.msra.mxu0 %v2479
    %3644 = vmatprep.subr.mxu0 %v2484
    %3645 = vmatpush1.msra.mxu0 %v2483
    %3646 = vmatprep.subr.mxu0 %v2488
    %3647 = vmatpush1.msra.mxu0 %v2487
    %3648 = vmatprep.subr.mxu0 %v2492
    %3649 = vmatpush1.msra.mxu0 %v2491
    %3650 = vmatprep.subr.mxu0 0.0
    %3651 = vmatpush1.msra.mxu0 0.0
    %3652 = vmatprep.subr.mxu0 0.0
    %3653 = vmatpush1.msra.mxu0 0.0
    %3654 = vmatprep.subr.mxu0 0.0
    %3655 = vmatpush1.msra.mxu0 0.0
    %3656 = vmatprep.subr.mxu0 0.0
    %3657 = vmatpush1.msra.mxu0 0.0
    %3658 = vmatprep.subr.mxu0 0.0
    %3659 = vmatpush1.msra.mxu0 0.0
    %3660 = vmatprep.subr.mxu0 0.0
    %3661 = vmatpush1.msra.mxu0 0.0
    %3662 = vmatprep.subr.mxu0 0.0
    %3663 = vmatpush1.msra.mxu0 0.0
    %3664 = vmatprep.subr.mxu0 0.0
    %3665 = vmatpush1.msra.mxu0 0.0
    %3666 = vmatprep.subr.mxu0 0.0
    %3667 = vmatpush1.msra.mxu0 0.0
    %3668 = vmatprep.subr.mxu0 0.0
    %3669 = vmatpush1.msra.mxu0 0.0
    %3670 = vmatprep.subr.mxu0 0.0
    %3671 = vmatpush1.msra.mxu0 0.0
    %3672 = vmatprep.subr.mxu0 0.0
    %3673 = vmatpush1.msra.mxu0 0.0
    %3674 = vmatprep.subr.mxu0 0.0
    %3675 = vmatpush1.msra.mxu0 0.0
    %3676 = vmatprep.subr.mxu0 0.0
    %3677 = vmatpush1.msra.mxu0 0.0
    %3678 = vmatprep.subr.mxu0 0.0
    %3679 = vmatpush1.msra.mxu0 0.0
    %3680 = vmatprep.subr.mxu0 0.0
    %3681 = vmatpush1.msra.mxu0 0.0
    %3682 = vmatprep.mubr.f32.mxu0 0.0
    %3683 = vmatmul.mubr.f32.gmra.mrb[0].mxu0 %v3541
    %v3684 = vpop.f32.mrb[0].mxu0
    %v3685 = vadd.f32 0.0, %v3684
    %v3686 = vpop.f32.mrb[0].mxu0
    %v3687 = vadd.f32 0.0, %v3686
    %3688 = vdwg.mxu0
    %v3689 = vadd.f32 %v3543, %v3614
    %v3690 = vadd.f32 %v3544, %v3616
    %v3691 = vadd.f32 %v3545, %v3685
    %v3692 = vadd.f32 %v3546, %v3687
    %v3693 = vxor.u32 %v3689, 2147483648
    %v3694 = vmul.f32 %v3693, 1.442695
    %v3695 = vpow.pop %v3694
    %v3696 = vadd.f32 %v3695, 1.0
    %v3697 = vrcp.pop %v3696
    %v3698 = vmul.f32 1.0, %v3697
    %v3699 = vxor.u32 %v3690, 2147483648
    %v3700 = vmul.f32 %v3699, 1.442695
    %v3701 = vpow.pop %v3700
    %v3702 = vadd.f32 %v3701, 1.0
    %v3703 = vrcp.pop %v3702
    %v3704 = vmul.f32 1.0, %v3703
    %v3705 = vtanh.pop %v3691
    %v3706 = vxor.u32 %v3692, 2147483648
    %v3707 = vmul.f32 %v3706, 1.442695
    %v3708 = vpow.pop %v3707
    %v3709 = vadd.f32 %v3708, 1.0
    %v3710 = vrcp.pop %v3709
    %v3711 = vmul.f32 1.0, %v3710
    %v3712 = vmul.f32 %v3704, %v3539
    %v3713 = vmul.f32 %v3698, %v3705
    %v3714 = vadd.f32 %v3712, %v3713
    %v3715 = vtanh.pop %v3714
    %v3716 = vmul.f32 %v3711, %v3715
    %3717 = vst [vmem:[#allocation3 + $0x30] sm:$0xff] %v3716
    %v3718 = vld [vmem:[#allocation2 + $0xe0] sm:$0xff]
    %v3719 = vld [vmem:[#allocation2 + $0xe8] sm:$0xff]
    %v3720 = vld [vmem:[#allocation2 + $0xf0] sm:$0xff]
    %v3721 = vld [vmem:[#allocation2 + $0xf8] sm:$0xff]
    %3722 = vmatprep.subr.mxu0 %v2430
    %3723 = vmatpush1.msra.mxu0 %v2429
    %3724 = vmatprep.subr.mxu0 %v2434
    %3725 = vmatpush1.msra.mxu0 %v2433
    %3726 = vmatprep.subr.mxu0 %v2438
    %3727 = vmatpush1.msra.mxu0 %v2437
    %3728 = vmatprep.subr.mxu0 %v2442
    %3729 = vmatpush1.msra.mxu0 %v2441
    %3730 = vmatprep.subr.mxu0 %v2446
    %3731 = vmatpush1.msra.mxu0 %v2445
    %3732 = vmatprep.subr.mxu0 %v2450
    %3733 = vmatpush1.msra.mxu0 %v2449
    %3734 = vmatprep.subr.mxu0 %v2454
    %3735 = vmatpush1.msra.mxu0 %v2453
    %3736 = vmatprep.subr.mxu0 %v2458
    %3737 = vmatpush1.msra.mxu0 %v2457
    %3738 = vmatprep.subr.mxu0 %v2462
    %3739 = vmatpush1.msra.mxu0 %v2461
    %3740 = vmatprep.subr.mxu0 %v2466
    %3741 = vmatpush1.msra.mxu0 %v2465
    %3742 = vmatprep.subr.mxu0 %v2470
    %3743 = vmatpush1.msra.mxu0 %v2469
    %3744 = vmatprep.subr.mxu0 %v2474
    %3745 = vmatpush1.msra.mxu0 %v2473
    %3746 = vmatprep.subr.mxu0 %v2478
    %3747 = vmatpush1.msra.mxu0 %v2477
    %3748 = vmatprep.subr.mxu0 %v2482
    %3749 = vmatpush1.msra.mxu0 %v2481
    %3750 = vmatprep.subr.mxu0 %v2486
    %3751 = vmatpush1.msra.mxu0 %v2485
    %3752 = vmatprep.subr.mxu0 %v2490
    %3753 = vmatpush1.msra.mxu0 %v2489
    %3754 = vmatprep.subr.mxu0 0.0
    %3755 = vmatpush1.msra.mxu0 0.0
    %3756 = vmatprep.subr.mxu0 0.0
    %3757 = vmatpush1.msra.mxu0 0.0
    %3758 = vmatprep.subr.mxu0 0.0
    %3759 = vmatpush1.msra.mxu0 0.0
    %3760 = vmatprep.subr.mxu0 0.0
    %3761 = vmatpush1.msra.mxu0 0.0
    %3762 = vmatprep.subr.mxu0 0.0
    %3763 = vmatpush1.msra.mxu0 0.0
    %3764 = vmatprep.subr.mxu0 0.0
    %3765 = vmatpush1.msra.mxu0 0.0
    %3766 = vmatprep.subr.mxu0 0.0
    %3767 = vmatpush1.msra.mxu0 0.0
    %3768 = vmatprep.subr.mxu0 0.0
    %3769 = vmatpush1.msra.mxu0 0.0
    %3770 = vmatprep.subr.mxu0 0.0
    %3771 = vmatpush1.msra.mxu0 0.0
    %3772 = vmatprep.subr.mxu0 0.0
    %3773 = vmatpush1.msra.mxu0 0.0
    %3774 = vmatprep.subr.mxu0 0.0
    %3775 = vmatpush1.msra.mxu0 0.0
    %3776 = vmatprep.subr.mxu0 0.0
    %3777 = vmatpush1.msra.mxu0 0.0
    %3778 = vmatprep.subr.mxu0 0.0
    %3779 = vmatpush1.msra.mxu0 0.0
    %3780 = vmatprep.subr.mxu0 0.0
    %3781 = vmatpush1.msra.mxu0 0.0
    %3782 = vmatprep.subr.mxu0 0.0
    %3783 = vmatpush1.msra.mxu0 0.0
    %3784 = vmatprep.subr.mxu0 0.0
    %3785 = vmatpush1.msra.mxu0 0.0
    %3786 = vmatprep.mubr.f32.mxu0 0.0
    %3787 = vmatmul.mubr.f32.gmra.mrb[0].mxu0 %v3716
    %v3788 = vpop.f32.mrb[0].mxu0
    %v3789 = vadd.f32 0.0, %v3788
    %v3790 = vpop.f32.mrb[0].mxu0
    %v3791 = vadd.f32 0.0, %v3790
    %3792 = vdwg.mxu0
    %3793 = vmatprep.subr.mxu0 %v2432
    %3794 = vmatpush1.msra.mxu0 %v2431
    %3795 = vmatprep.subr.mxu0 %v2436
    %3796 = vmatpush1.msra.mxu0 %v2435
    %3797 = vmatprep.subr.mxu0 %v2440
    %3798 = vmatpush1.msra.mxu0 %v2439
    %3799 = vmatprep.subr.mxu0 %v2444
    %3800 = vmatpush1.msra.mxu0 %v2443
    %3801 = vmatprep.subr.mxu0 %v2448
    %3802 = vmatpush1.msra.mxu0 %v2447
    %3803 = vmatprep.subr.mxu0 %v2452
    %3804 = vmatpush1.msra.mxu0 %v2451
    %3805 = vmatprep.subr.mxu0 %v2456
    %3806 = vmatpush1.msra.mxu0 %v2455
    %3807 = vmatprep.subr.mxu0 %v2460
    %3808 = vmatpush1.msra.mxu0 %v2459
    %3809 = vmatprep.subr.mxu0 %v2464
    %3810 = vmatpush1.msra.mxu0 %v2463
    %3811 = vmatprep.subr.mxu0 %v2468
    %3812 = vmatpush1.msra.mxu0 %v2467
    %3813 = vmatprep.subr.mxu0 %v2472
    %3814 = vmatpush1.msra.mxu0 %v2471
    %3815 = vmatprep.subr.mxu0 %v2476
    %3816 = vmatpush1.msra.mxu0 %v2475
    %3817 = vmatprep.subr.mxu0 %v2480
    %3818 = vmatpush1.msra.mxu0 %v2479
    %3819 = vmatprep.subr.mxu0 %v2484
    %3820 = vmatpush1.msra.mxu0 %v2483
    %3821 = vmatprep.subr.mxu0 %v2488
    %3822 = vmatpush1.msra.mxu0 %v2487
    %3823 = vmatprep.subr.mxu0 %v2492
    %3824 = vmatpush1.msra.mxu0 %v2491
    %3825 = vmatprep.subr.mxu0 0.0
    %3826 = vmatpush1.msra.mxu0 0.0
    %3827 = vmatprep.subr.mxu0 0.0
    %3828 = vmatpush1.msra.mxu0 0.0
    %3829 = vmatprep.subr.mxu0 0.0
    %3830 = vmatpush1.msra.mxu0 0.0
    %3831 = vmatprep.subr.mxu0 0.0
    %3832 = vmatpush1.msra.mxu0 0.0
    %3833 = vmatprep.subr.mxu0 0.0
    %3834 = vmatpush1.msra.mxu0 0.0
    %3835 = vmatprep.subr.mxu0 0.0
    %3836 = vmatpush1.msra.mxu0 0.0
    %3837 = vmatprep.subr.mxu0 0.0
    %3838 = vmatpush1.msra.mxu0 0.0
    %3839 = vmatprep.subr.mxu0 0.0
    %3840 = vmatpush1.msra.mxu0 0.0
    %3841 = vmatprep.subr.mxu0 0.0
    %3842 = vmatpush1.msra.mxu0 0.0
    %3843 = vmatprep.subr.mxu0 0.0
    %3844 = vmatpush1.msra.mxu0 0.0
    %3845 = vmatprep.subr.mxu0 0.0
    %3846 = vmatpush1.msra.mxu0 0.0
    %3847 = vmatprep.subr.mxu0 0.0
    %3848 = vmatpush1.msra.mxu0 0.0
    %3849 = vmatprep.subr.mxu0 0.0
    %3850 = vmatpush1.msra.mxu0 0.0
    %3851 = vmatprep.subr.mxu0 0.0
    %3852 = vmatpush1.msra.mxu0 0.0
    %3853 = vmatprep.subr.mxu0 0.0
    %3854 = vmatpush1.msra.mxu0 0.0
    %3855 = vmatprep.subr.mxu0 0.0
    %3856 = vmatpush1.msra.mxu0 0.0
    %3857 = vmatprep.mubr.f32.mxu0 0.0
    %3858 = vmatmul.mubr.f32.gmra.mrb[0].mxu0 %v3716
    %v3859 = vpop.f32.mrb[0].mxu0
    %v3860 = vadd.f32 0.0, %v3859
    %v3861 = vpop.f32.mrb[0].mxu0
    %v3862 = vadd.f32 0.0, %v3861
    %3863 = vdwg.mxu0
    %v3864 = vadd.f32 %v3718, %v3789
    %v3865 = vadd.f32 %v3719, %v3791
    %v3866 = vadd.f32 %v3720, %v3860
    %v3867 = vadd.f32 %v3721, %v3862
    %v3868 = vxor.u32 %v3864, 2147483648
    %v3869 = vmul.f32 %v3868, 1.442695
    %v3870 = vpow.pop %v3869
    %v3871 = vadd.f32 %v3870, 1.0
    %v3872 = vrcp.pop %v3871
    %v3873 = vmul.f32 1.0, %v3872
    %v3874 = vxor.u32 %v3865, 2147483648
    %v3875 = vmul.f32 %v3874, 1.442695
    %v3876 = vpow.pop %v3875
    %v3877 = vadd.f32 %v3876, 1.0
    %v3878 = vrcp.pop %v3877
    %v3879 = vmul.f32 1.0, %v3878
    %v3880 = vtanh.pop %v3866
    %v3881 = vxor.u32 %v3867, 2147483648
    %v3882 = vmul.f32 %v3881, 1.442695
    %v3883 = vpow.pop %v3882
    %v3884 = vadd.f32 %v3883, 1.0
    %v3885 = vrcp.pop %v3884
    %v3886 = vmul.f32 1.0, %v3885
    %v3887 = vmul.f32 %v3879, %v3714
    %v3888 = vmul.f32 %v3873, %v3880
    %v3889 = vadd.f32 %v3887, %v3888
    %v3890 = vtanh.pop %v3889
    %v3891 = vmul.f32 %v3886, %v3890
    %3892 = vst [vmem:[#allocation3 + $0x38] sm:$0xff] %v3891
    %v3893 = vld [vmem:[%s4] sm:$0xff]
    %v3894 = vld [vmem:[%s4 + $0x8] sm:$0xff]
    %v3895 = vld [vmem:[%s4 + $0x10] sm:$0xff]
    %v3896 = vld [vmem:[%s4 + $0x18] sm:$0xff]
    %v3897 = vld [vmem:[%s4 + $0x20] sm:$0xff]
    %v3898 = vld [vmem:[%s4 + $0x28] sm:$0xff]
    %v3899 = vld [vmem:[%s4 + $0x30] sm:$0xff]
    %v3900 = vld [vmem:[%s4 + $0x38] sm:$0xff]
    %v3901 = vld [vmem:[#allocation3] sm:$0xff]
    %v3902 = vld [vmem:[#allocation3 + $0x8] sm:$0xff]
    %v3903 = vld [vmem:[#allocation3 + $0x10] sm:$0xff]
    %v3904 = vld [vmem:[#allocation3 + $0x18] sm:$0xff]
    %v3905 = vld [vmem:[#allocation3 + $0x20] sm:$0xff]
    %v3906 = vld [vmem:[#allocation3 + $0x28] sm:$0xff]
    %v3907 = vld [vmem:[#allocation3 + $0x30] sm:$0xff]
    %v3908 = vld [vmem:[#allocation3 + $0x38] sm:$0xff]
    %v3910 = vsel %vm133, %v3893, 0
    %v3913 = vsel %vm133, %v3894, 0
    %v3916 = vsel %vm133, %v3895, 0
    %v3919 = vsel %vm133, %v3896, 0
    %v3922 = vsel %vm133, %v3897, 0
    %v3925 = vsel %vm133, %v3898, 0
    %v3928 = vsel %vm133, %v3899, 0
    %v3931 = vsel %vm133, %v3900, 0
    %3933 = vmatprep.subr.mxu0 0.0
    %3934 = vmatpush1.msra.mxu0 %v3901
    %3935 = vmatprep.subr.mxu0 0.0
    %3936 = vmatpush1.msra.mxu0 %v3902
    %3937 = vmatprep.subr.mxu0 0.0
    %3938 = vmatpush1.msra.mxu0 %v3903
    %3939 = vmatprep.subr.mxu0 0.0
    %3940 = vmatpush1.msra.mxu0 %v3904
    %3941 = vmatprep.subr.mxu0 0.0
    %3942 = vmatpush1.msra.mxu0 %v3905
    %3943 = vmatprep.subr.mxu0 0.0
    %3944 = vmatpush1.msra.mxu0 %v3906
    %3945 = vmatprep.subr.mxu0 0.0
    %3946 = vmatpush1.msra.mxu0 %v3907
    %3947 = vmatprep.subr.mxu0 0.0
    %3948 = vmatpush1.msra.mxu0 %v3908
    %3949 = vmatprep.subr.mxu0 0.0
    %3950 = vmatpush1.msra.mxu0 0.0
    %3951 = vmatprep.subr.mxu0 0.0
    %3952 = vmatpush1.msra.mxu0 0.0
    %3953 = vmatprep.subr.mxu0 0.0
    %3954 = vmatpush1.msra.mxu0 0.0
    %3955 = vmatprep.subr.mxu0 0.0
    %3956 = vmatpush1.msra.mxu0 0.0
    %3957 = vmatprep.subr.mxu0 0.0
    %3958 = vmatpush1.msra.mxu0 0.0
    %3959 = vmatprep.subr.mxu0 0.0
    %3960 = vmatpush1.msra.mxu0 0.0
    %3961 = vmatprep.subr.mxu0 0.0
    %3962 = vmatpush1.msra.mxu0 0.0
    %3963 = vmatprep.subr.mxu0 0.0
    %3964 = vmatpush1.msra.mxu0 0.0
    %3965 = vmatprep.subr.mxu0 0.0
    %3966 = vmatpush1.msra.mxu0 0.0
    %3967 = vmatprep.subr.mxu0 0.0
    %3968 = vmatpush1.msra.mxu0 0.0
    %3969 = vmatprep.subr.mxu0 0.0
    %3970 = vmatpush1.msra.mxu0 0.0
    %3971 = vmatprep.subr.mxu0 0.0
    %3972 = vmatpush1.msra.mxu0 0.0
    %3973 = vmatprep.subr.mxu0 0.0
    %3974 = vmatpush1.msra.mxu0 0.0
    %3975 = vmatprep.subr.mxu0 0.0
    %3976 = vmatpush1.msra.mxu0 0.0
    %3977 = vmatprep.subr.mxu0 0.0
    %3978 = vmatpush1.msra.mxu0 0.0
    %3979 = vmatprep.subr.mxu0 0.0
    %3980 = vmatpush1.msra.mxu0 0.0
    %3981 = vmatprep.subr.mxu0 0.0
    %3982 = vmatpush1.msra.mxu0 0.0
    %3983 = vmatprep.subr.mxu0 0.0
    %3984 = vmatpush1.msra.mxu0 0.0
    %3985 = vmatprep.subr.mxu0 0.0
    %3986 = vmatpush1.msra.mxu0 0.0
    %3987 = vmatprep.subr.mxu0 0.0
    %3988 = vmatpush1.msra.mxu0 0.0
    %3989 = vmatprep.subr.mxu0 0.0
    %3990 = vmatpush1.msra.mxu0 0.0
    %3991 = vmatprep.subr.mxu0 0.0
    %3992 = vmatpush1.msra.mxu0 0.0
    %3993 = vmatprep.subr.mxu0 0.0
    %3994 = vmatpush1.msra.mxu0 0.0
    %3995 = vmatprep.subr.mxu0 0.0
    %3996 = vmatpush1.msra.mxu0 0.0
    %3997 = vmatprep.mubr.f32.mxu0 0.0
    %3998 = vmatmul.mubr.f32.gmra.mrb[0].mxu0 %v3910
    %v3999 = vpop.f32.mrb[0].mxu0
    %v4000 = vadd.f32 0.0, %v3999
    %v4001 = vpop.f32.mrb[0].mxu0
    %4002 = vmatprep.mubr.f32.mxu0 0.0
    %4003 = vmatmul.mubr.f32.gmra.mrb[0].mxu0 %v3913
    %v4004 = vpop.f32.mrb[0].mxu0
    %v4005 = vadd.f32 0.0, %v4004
    %v4006 = vpop.f32.mrb[0].mxu0
    %4007 = vmatprep.mubr.f32.mxu0 0.0
    %4008 = vmatmul.mubr.f32.gmra.mrb[0].mxu0 %v3916
    %v4009 = vpop.f32.mrb[0].mxu0
    %v4010 = vadd.f32 0.0, %v4009
    %v4011 = vpop.f32.mrb[0].mxu0
    %4012 = vmatprep.mubr.f32.mxu0 0.0
    %4013 = vmatmul.mubr.f32.gmra.mrb[0].mxu0 %v3919
    %v4014 = vpop.f32.mrb[0].mxu0
    %v4015 = vadd.f32 0.0, %v4014
    %v4016 = vpop.f32.mrb[0].mxu0
    %4017 = vmatprep.mubr.f32.mxu0 0.0
    %4018 = vmatmul.mubr.f32.gmra.mrb[0].mxu0 %v3922
    %v4019 = vpop.f32.mrb[0].mxu0
    %v4020 = vadd.f32 0.0, %v4019
    %v4021 = vpop.f32.mrb[0].mxu0
    %4022 = vmatprep.mubr.f32.mxu0 0.0
    %4023 = vmatmul.mubr.f32.gmra.mrb[0].mxu0 %v3925
    %v4024 = vpop.f32.mrb[0].mxu0
    %v4025 = vadd.f32 0.0, %v4024
    %v4026 = vpop.f32.mrb[0].mxu0
    %4027 = vmatprep.mubr.f32.mxu0 0.0
    %4028 = vmatmul.mubr.f32.gmra.mrb[0].mxu0 %v3928
    %v4029 = vpop.f32.mrb[0].mxu0
    %v4030 = vadd.f32 0.0, %v4029
    %v4031 = vpop.f32.mrb[0].mxu0
    %4032 = vmatprep.mubr.f32.mxu0 0.0
    %4033 = vmatmul.mubr.f32.gmra.mrb[0].mxu0 %v3931
    %v4034 = vpop.f32.mrb[0].mxu0
    %v4035 = vadd.f32 0.0, %v4034
    %v4036 = vpop.f32.mrb[0].mxu0
    %4037 = vdwg.mxu0
    %v4038 = vld [vmem:[#allocation12] sm:$0xff]
    %v4039 = vld [vmem:[#allocation12 + $0x8] sm:$0xff]
    %v4040 = vld [vmem:[#allocation12 + $0x10] sm:$0xff]
    %v4041 = vld [vmem:[#allocation12 + $0x18] sm:$0xff]
    %v4042 = vld [vmem:[#allocation12 + $0x20] sm:$0xff]
    %v4043 = vld [vmem:[#allocation12 + $0x28] sm:$0xff]
    %v4044 = vld [vmem:[#allocation12 + $0x30] sm:$0xff]
    %v4045 = vld [vmem:[#allocation12 + $0x38] sm:$0xff]
    %v4046 = vld [vmem:[#allocation12 + $0x40] sm:$0xff]
    %v4047 = vld [vmem:[#allocation12 + $0x48] sm:$0xff]
    %v4048 = vld [vmem:[#allocation12 + $0x50] sm:$0xff]
    %v4049 = vld [vmem:[#allocation12 + $0x58] sm:$0xff]
    %v4050 = vld [vmem:[#allocation12 + $0x60] sm:$0xff]
    %v4051 = vld [vmem:[#allocation12 + $0x68] sm:$0xff]
    %v4052 = vld [vmem:[#allocation12 + $0x70] sm:$0xff]
    %v4053 = vld [vmem:[#allocation12 + $0x78] sm:$0xff]
    %v4054 = vld [vmem:[%s12] sm:$0x1]
    %v4056 = vlaneseq
    %v4057 = vshrl.u32 %v4056, 7
    %v4058 = vsub.s32 0, %v4057
    %v4059 = vrot.slane %v4054, %v4058
    %4061 = vmatprep.subr.mxu0 0.0
    %4062 = vmatpush1.msra.mxu0 %v4038
    %4063 = vmatprep.subr.mxu0 0.0
    %4064 = vmatpush1.msra.mxu0 %v4039
    %4065 = vmatprep.subr.mxu0 0.0
    %4066 = vmatpush1.msra.mxu0 %v4040
    %4067 = vmatprep.subr.mxu0 0.0
    %4068 = vmatpush1.msra.mxu0 %v4041
    %4069 = vmatprep.subr.mxu0 0.0
    %4070 = vmatpush1.msra.mxu0 %v4042
    %4071 = vmatprep.subr.mxu0 0.0
    %4072 = vmatpush1.msra.mxu0 %v4043
    %4073 = vmatprep.subr.mxu0 0.0
    %4074 = vmatpush1.msra.mxu0 %v4044
    %4075 = vmatprep.subr.mxu0 0.0
    %4076 = vmatpush1.msra.mxu0 %v4045
    %4077 = vmatprep.subr.mxu0 0.0
    %4078 = vmatpush1.msra.mxu0 %v4046
    %4079 = vmatprep.subr.mxu0 0.0
    %4080 = vmatpush1.msra.mxu0 %v4047
    %4081 = vmatprep.subr.mxu0 0.0
    %4082 = vmatpush1.msra.mxu0 %v4048
    %4083 = vmatprep.subr.mxu0 0.0
    %4084 = vmatpush1.msra.mxu0 %v4049
    %4085 = vmatprep.subr.mxu0 0.0
    %4086 = vmatpush1.msra.mxu0 %v4050
    %4087 = vmatprep.subr.mxu0 0.0
    %4088 = vmatpush1.msra.mxu0 %v4051
    %4089 = vmatprep.subr.mxu0 0.0
    %4090 = vmatpush1.msra.mxu0 %v4052
    %4091 = vmatprep.subr.mxu0 0.0
    %4092 = vmatpush1.msra.mxu0 %v4053
    %4093 = vmatprep.subr.mxu0 0.0
    %4094 = vmatpush1.msra.mxu0 0.0
    %4095 = vmatprep.subr.mxu0 0.0
    %4096 = vmatpush1.msra.mxu0 0.0
    %4097 = vmatprep.subr.mxu0 0.0
    %4098 = vmatpush1.msra.mxu0 0.0
    %4099 = vmatprep.subr.mxu0 0.0
    %4100 = vmatpush1.msra.mxu0 0.0
    %4101 = vmatprep.subr.mxu0 0.0
    %4102 = vmatpush1.msra.mxu0 0.0
    %4103 = vmatprep.subr.mxu0 0.0
    %4104 = vmatpush1.msra.mxu0 0.0
    %4105 = vmatprep.subr.mxu0 0.0
    %4106 = vmatpush1.msra.mxu0 0.0
    %4107 = vmatprep.subr.mxu0 0.0
    %4108 = vmatpush1.msra.mxu0 0.0
    %4109 = vmatprep.subr.mxu0 0.0
    %4110 = vmatpush1.msra.mxu0 0.0
    %4111 = vmatprep.subr.mxu0 0.0
    %4112 = vmatpush1.msra.mxu0 0.0
    %4113 = vmatprep.subr.mxu0 0.0
    %4114 = vmatpush1.msra.mxu0 0.0
    %4115 = vmatprep.subr.mxu0 0.0
    %4116 = vmatpush1.msra.mxu0 0.0
    %4117 = vmatprep.subr.mxu0 0.0
    %4118 = vmatpush1.msra.mxu0 0.0
    %4119 = vmatprep.subr.mxu0 0.0
    %4120 = vmatpush1.msra.mxu0 0.0
    %4121 = vmatprep.subr.mxu0 0.0
    %4122 = vmatpush1.msra.mxu0 0.0
    %4123 = vmatprep.subr.mxu0 0.0
    %4124 = vmatpush1.msra.mxu0 0.0
    %4125 = vmatprep.mubr.f32.mxu0 0.0
    %4126 = vmatmul.mubr.f32.gmra.mrb[0].mxu0 %v4000
    %v4127 = vpop.f32.mrb[0].mxu0
    %v4128 = vadd.f32 %v4059, %v4127
    %v4129 = vpop.f32.mrb[0].mxu0
    %4130 = vmatprep.mubr.f32.mxu0 0.0
    %4131 = vmatmul.mubr.f32.gmra.mrb[0].mxu0 %v4005
    %v4132 = vpop.f32.mrb[0].mxu0
    %v4133 = vadd.f32 %v4059, %v4132
    %v4134 = vpop.f32.mrb[0].mxu0
    %4135 = vmatprep.mubr.f32.mxu0 0.0
    %4136 = vmatmul.mubr.f32.gmra.mrb[0].mxu0 %v4010
    %v4137 = vpop.f32.mrb[0].mxu0
    %v4138 = vadd.f32 %v4059, %v4137
    %v4139 = vpop.f32.mrb[0].mxu0
    %4140 = vmatprep.mubr.f32.mxu0 0.0
    %4141 = vmatmul.mubr.f32.gmra.mrb[0].mxu0 %v4015
    %v4142 = vpop.f32.mrb[0].mxu0
    %v4143 = vadd.f32 %v4059, %v4142
    %v4144 = vpop.f32.mrb[0].mxu0
    %4145 = vmatprep.mubr.f32.mxu0 0.0
    %4146 = vmatmul.mubr.f32.gmra.mrb[0].mxu0 %v4020
    %v4147 = vpop.f32.mrb[0].mxu0
    %v4148 = vadd.f32 %v4059, %v4147
    %v4149 = vpop.f32.mrb[0].mxu0
    %4150 = vmatprep.mubr.f32.mxu0 0.0
    %4151 = vmatmul.mubr.f32.gmra.mrb[0].mxu0 %v4025
    %v4152 = vpop.f32.mrb[0].mxu0
    %v4153 = vadd.f32 %v4059, %v4152
    %v4154 = vpop.f32.mrb[0].mxu0
    %4155 = vmatprep.mubr.f32.mxu0 0.0
    %4156 = vmatmul.mubr.f32.gmra.mrb[0].mxu0 %v4030
    %v4157 = vpop.f32.mrb[0].mxu0
    %v4158 = vadd.f32 %v4059, %v4157
    %v4159 = vpop.f32.mrb[0].mxu0
    %4160 = vmatprep.mubr.f32.mxu0 0.0
    %4161 = vmatmul.mubr.f32.gmra.mrb[0].mxu0 %v4035
    %v4162 = vpop.f32.mrb[0].mxu0
    %v4163 = vadd.f32 %v4059, %v4162
    %v4164 = vpop.f32.mrb[0].mxu0
    %4165 = vdwg.mxu0
    %4166 = vst [vmem:[#allocation13] sm:$0xff] %v4128
    %4167 = vst [vmem:[#allocation13 + $0x8] sm:$0xff] %v4133
    %4168 = vst [vmem:[#allocation13 + $0x10] sm:$0xff] %v4138
    %4169 = vst [vmem:[#allocation13 + $0x18] sm:$0xff] %v4143
    %4170 = vst [vmem:[#allocation13 + $0x20] sm:$0xff] %v4148
    %4171 = vst [vmem:[#allocation13 + $0x28] sm:$0xff] %v4153
    %4172 = vst [vmem:[#allocation13 + $0x30] sm:$0xff] %v4158
    %4173 = vst [vmem:[#allocation13 + $0x38] sm:$0xff] %v4163
    %4174 = vst [vmem:[#allocation14] sm:$0xff] %v2071
    %s4175 = scalar_lea.vmem [#allocation14], 8
    %4176 = vst [vmem:[%s4175] sm:$0xff] %v3891
    %4177 = vst [vmem:[#allocation16] sm:$0xff] %v2069
    %s4178 = scalar_lea.vmem [#allocation16], 8
    %4179 = vst [vmem:[%s4178] sm:$0xff] %v3889
    // Predicated region
    $region74: #{text_generation_forward.1} parent=1 // pred_check
      _
    $region75: #{text_generation_forward.1} parent=1 // pred_check_branch
      %4181 = sbr.rel (0) target = $region77
    $region76: #{text_generation_forward.1} parent=1 // pred_region
      %s4183 = ssub.s32 1024, 1024
      %4184 = vsyncadd [#allocation6], %s4183
      %s4185 = sshll.u32 [#allocation13], 4
      %s4186 = int_to_ptr.vmem [resolvable:$true] %s4185
      %4191 = dma.vmem_to_hbm [thread:$0]  %s4186, 1024, %s13, [#allocation6], 128, 128, 8
    $region77: #{text_generation_forward.1} parent=1 // pred_fallthru
      _
    // Predicated region
    $region78: #{text_generation_forward.1} parent=1 // pred_check
      _
    $region79: #{text_generation_forward.1} parent=1 // pred_check_branch
      %4193 = sbr.rel (0) target = $region81
    $region80: #{text_generation_forward.1} parent=1 // pred_region
      %s4195 = ssub.s32 256, 256
      %4196 = vsyncadd [#allocation15], %s4195
      %s4197 = sshll.u32 [#allocation14], 4
      %s4198 = int_to_ptr.vmem [resolvable:$true] %s4197
      %4203 = dma.vmem_to_hbm [thread:$0]  %s4198, 256, %s14, [#allocation15], 128, 128, 8
    $region81: #{text_generation_forward.1} parent=1 // pred_fallthru
      _
    // Predicated region
    $region82: #{text_generation_forward.1} parent=1 // pred_check
      _
    $region83: #{text_generation_forward.1} parent=1 // pred_check_branch
      %4205 = sbr.rel (0) target = $region85
    $region84: #{text_generation_forward.1} parent=1 // pred_region
      %s4207 = ssub.s32 256, 256
      %4208 = vsyncadd [#allocation15], %s4207
      %s4209 = sshll.u32 [#allocation16], 4
      %s4210 = int_to_ptr.vmem [resolvable:$true] %s4209
      %4215 = dma.vmem_to_hbm [thread:$0]  %s4210, 256, %s15, [#allocation15], 128, 128, 8
    $region85: #{text_generation_forward.1} parent=1 // pred_fallthru
      _
    // Predicated region
    $region86: #{text_generation_forward.1} parent=1 // pred_check
      _
    $region87: #{text_generation_forward.1} parent=1 // pred_check_branch
      %4217 = sbr.rel (0) target = $region89
    $region88: #{text_generation_forward.1} parent=1 // pred_region
      %4218 = dma.done [#allocation6], 1024
    $region89: #{text_generation_forward.1} parent=1 // pred_fallthru
      _
    // Predicated region
    $region90: #{text_generation_forward.1} parent=1 // pred_check
      _
    $region91: #{text_generation_forward.1} parent=1 // pred_check_branch
      %4220 = sbr.rel (0) target = $region93
    $region92: #{text_generation_forward.1} parent=1 // pred_region
      %4221 = dma.done [#allocation15], 256
    $region93: #{text_generation_forward.1} parent=1 // pred_fallthru
      _
    // Predicated region
    $region94: #{text_generation_forward.1} parent=1 // pred_check
      _
    $region95: #{text_generation_forward.1} parent=1 // pred_check_branch
      %4223 = sbr.rel (0) target = $region97
    $region96: #{text_generation_forward.1} parent=1 // pred_region
      %4224 = dma.done [#allocation15], 256
    $region97: #{text_generation_forward.1} parent=1 // pred_fallthru
      _
    %4225 = vsyncpa [#allocation5], 1
    %4226 = vsyncpa [#allocation8], 1
    %4227 = vsyncpa [#allocation11], 1
    %4228 = vsyncpa [#allocation6], 1
    %4229 = vsyncpa [#allocation15], 1

</llo_original>
